<compile_context>
chip_gen: v7x
topology: tpu7x:2x2x1
jax: 0.10.0
libtpu: 0.0.40
codegen_flags: <defaults>
</compile_context>

<pallas_src>
import functools
import math

import jax
import jax.numpy as jnp
from jax import lax
from jax.experimental import pallas as pl
from jax.experimental.pallas import tpu as pltpu

HIDDEN_SIZE = 48
INPUT_SIZE = 28
HIDDEN_PAD = 128      # hidden/feature axis zero-padded to a full 128-lane width
SEQ_LEN = 28          # e.g. the 28 rows of an MNIST image fed as a sequence
BATCH = 16            # independent sequences per call (multiple of 8 sublanes)
BATCH_BLOCK = 8       # sequences per grid step (grid axis is "parallel" -> v7x 2-TC split)


def gru_seq_kernel(x_ref, h0_ref, wT_ref, pT_ref, b_ref, g_ref, dt_ref,
                   o_ref, xproj_scr, *, seq_len, batch_block):
    """One batch block: the full T-step recurrence inside a single grid step.

    x_ref     : (T, bb, I)   inputs for this batch block
    h0_ref    : (bb, Hp)     initial state (zero-padded lanes beyond H)
    wT_ref    : (Hp, Hp)     w_r^T, zero-padded
    pT_ref    : (I, Hp)      p_r^T, zero-padded
    b_ref     : (1, Hp)      b_r^T, zero-padded
    g_ref     : (1, Hp)      g_z^T, zero-padded
    dt_ref    : (1,)         dt scalar (SMEM)
    o_ref     : (T, bb, Hp)  state after every timestep
    xproj_scr : (T, bb, Hp)  VMEM scratch: hoisted input projection (+ bias)
    """
    hp = wT_ref.shape[-1]

    # ---- once per batch block (there is no time grid axis any more) ----
    dt = jnp.clip(dt_ref[0], 0.0, 1.0)
    z = jnp.broadcast_to(dt * jax.nn.sigmoid(g_ref[...]), (batch_block, hp))

    # Hoisted input projection for ALL timesteps in one MXU pass:
    #   (T*bb, I) @ (I, Hp) + b_r^T.   (T,bb,I)->(T*bb,I) is a layout no-op (bb % 8 == 0).
    x2d = x_ref[...].reshape(seq_len * batch_block, x_ref.shape[-1])
    xproj = jnp.dot(x2d, pT_ref[...], preferred_element_type=jnp.float32) + b_ref[...]
    # NOTE: xproj_scr grows as T*bb*Hp; for long sequences / large batch blocks compute
    # it in time chunks (or stream x with pl.Buffered) — v7x has only 64 MiB VMEM.
    xproj_scr[...] = xproj.reshape(seq_len, batch_block, hp)

    wT = wT_ref[...]

    # ---- serial recurrence, fully unrolled for LLO scheduling visibility ----
    # NOTE: jnp.dot re-stages wT into the MXU each step; driving the MXU explicitly
    # (pltpu.matmul_push_rhs once, matmul_acc_lhs/pop per step) would latch the RHS
    # across all T steps.  Kept on the robust jnp.dot path: the recurrence is
    # latency-bound at this size, not MXU-throughput-bound.
    def step(t, h):
        pre = jnp.dot(h, wT, preferred_element_type=jnp.float32) + xproj_scr[t]
        h_new = h + z * (jnp.tanh(pre) - h)          # == (1-z)*h + z*tanh(pre)
        o_ref[t] = h_new
        return h_new

    lax.fori_loop(0, seq_len, step, h0_ref[...], unroll=True)


@functools.partial(jax.jit, static_argnames=("hidden_pad", "batch_block"))
def custom_gru_forward_seq(x_seq, h0, params, *, hidden_pad=HIDDEN_PAD,
                           batch_block=BATCH_BLOCK):
    """Runs the customGRUCell recurrence over a whole sequence in one kernel launch.

    x_seq : (T, B, I) float32 -- x_seq[t, b] is the column vector x of one forward() call
    h0    : (B, H)    float32 -- initial r_t for each batch element
    returns h_seq : (T, B, H) -- r_t after each timestep (h_seq[-1] is the final state)
    """
    w_r, p_r, b_r, g_z, dt = params
    T, B, I = x_seq.shape
    H = w_r.shape[0]
    Hp = hidden_pad
    assert B % batch_block == 0, "batch must be a multiple of batch_block"
    assert batch_block % 8 == 0, "batch_block must be a multiple of 8 sublanes"
    assert H <= Hp and I <= Hp

    # One-time weight prep: row-vector layout, zero-padded to 128 lanes.
    # Padded-lane invariant: lanes [H, Hp) of the state stay exactly zero because h0,
    # b_r^T and the w_r^T / p_r^T columns are zero-padded (z is nonzero there but only
    # ever multiplies tanh(0) - 0 = 0).  Keep the padding zero-filled.
    wT = jnp.pad(jnp.transpose(w_r).astype(jnp.float32),
                 ((0, Hp - H), (0, Hp - H)))                       # (Hp, Hp)
    pT = jnp.pad(jnp.transpose(p_r).astype(jnp.float32),
                 ((0, 0), (0, Hp - H)))                            # (I, Hp)
    b_row = jnp.pad(jnp.transpose(b_r).astype(jnp.float32),
                    ((0, 0), (0, Hp - H)))                         # (1, Hp)
    g_row = jnp.pad(jnp.transpose(g_z).astype(jnp.float32),
                    ((0, 0), (0, Hp - H)))                         # (1, Hp)
    dt1 = jnp.reshape(dt, (1,)).astype(jnp.float32)                # scalar -> SMEM
    h0_p = jnp.pad(h0.astype(jnp.float32), ((0, 0), (0, Hp - H)))  # (B, Hp)
    x32 = x_seq.astype(jnp.float32)                                # (T, B, I)

    kernel = functools.partial(gru_seq_kernel, seq_len=T, batch_block=batch_block)
    num_blocks = B // batch_block

    h_seq_p = pl.pallas_call(
        kernel,
        out_shape=jax.ShapeDtypeStruct((T, B, Hp), jnp.float32),
        grid=(num_blocks,),
        in_specs=[
            pl.BlockSpec((T, batch_block, I), lambda b: (0, b, 0)),   # x  (batch block)
            pl.BlockSpec((batch_block, Hp), lambda b: (b, 0)),        # h0 (batch block)
            pl.BlockSpec((Hp, Hp), lambda b: (0, 0)),                 # w_r^T (padded)
            pl.BlockSpec((I, Hp), lambda b: (0, 0)),                  # p_r^T (padded)
            pl.BlockSpec((1, Hp), lambda b: (0, 0)),                  # b_r^T (padded)
            pl.BlockSpec((1, Hp), lambda b: (0, 0)),                  # g_z^T (padded)
            pl.BlockSpec(memory_space=pltpu.MemorySpace.SMEM),        # dt scalar
        ],
        out_specs=pl.BlockSpec((T, batch_block, Hp), lambda b: (0, b, 0)),
        scratch_shapes=[
            pltpu.VMEM((T, batch_block, Hp), jnp.float32),   # hoisted input projection
        ],
        compiler_params=pltpu.CompilerParams(
            # Batch blocks are independent -> shard across TensorCores on v7x;
            # the time recurrence itself is fully inside the kernel body.
            dimension_semantics=("parallel",),
        ),
    )(x32, h0_p, wT, pT, b_row, g_row, dt1)

    # Drop the zero-padded lanes.
    return h_seq_p[:, :, :H]


def _reference_forward_seq(x_seq, h0, params):
    """Pure-JAX reference: the original PyTorch column-vector math, step by step."""
    w_r, p_r, b_r, g_z, dt = params
    z = (jnp.clip(dt, 0.0, 1.0) * jax.nn.sigmoid(g_z)).T      # (1, H)

    def step(h, x_t):                                          # h: (B,H), x_t: (B,I)
        pre = h @ w_r.T + x_t @ p_r.T + b_r.T
        h_new = (1.0 - z) * h + z * jnp.tanh(pre)
        return h_new, h_new

    _, hs = lax.scan(step, h0, x_seq)
    return hs                                                  # (T, B, H)


def init_params(key, input_size, hidden_size):
    # nn.init.uniform_(param, -1/sqrt(hidden_size), 1/sqrt(hidden_size)) is applied to
    # every named parameter (including dt) in __init__.
    k = 1.0 / math.sqrt(hidden_size)
    k_wr, k_pr, k_br, k_gz, k_dt = jax.random.split(key, 5)
    w_r = jax.random.uniform(k_wr, (hidden_size, hidden_size), jnp.float32, -k, k)
    p_r = jax.random.uniform(k_pr, (hidden_size, input_size), jnp.float32, -k, k)
    b_r = jax.random.uniform(k_br, (hidden_size, 1), jnp.float32, -k, k)
    g_z = jax.random.uniform(k_gz, (hidden_size, 1), jnp.float32, -k, k)
    # Keep dt positive for the demo so the clamp does not zero the gate and freeze the
    # state (a negative draw would make the correctness check trivially pass).
    dt = jax.random.uniform(k_dt, (), jnp.float32, 0.0, k)
    return (w_r, p_r, b_r, g_z, dt)


if __name__ == "__main__":
    key = jax.random.PRNGKey(0)
    k_params, k_x = jax.random.split(key)

    params = init_params(k_params, INPUT_SIZE, HIDDEN_SIZE)

    # A batch of BATCH sequences, SEQ_LEN timesteps, INPUT_SIZE features per step
    # (e.g. the 28 rows of an MNIST image fed one row at a time).
    x_seq = jax.random.normal(k_x, (SEQ_LEN, BATCH, INPUT_SIZE), dtype=jnp.float32)
    # Initial recurrent state, as in __init__: zeros.
    h0 = jnp.zeros((BATCH, HIDDEN_SIZE), dtype=jnp.float32)

    # Single fused kernel launch over the whole sequence (grid = batch blocks only).
    h_seq = custom_gru_forward_seq(x_seq, h0, params)
    jax.block_until_ready(h_seq)

    # Correctness check against the pure-JAX reference of the PyTorch math.
    ref = _reference_forward_seq(x_seq, h0, params)
    assert h_seq.shape == (SEQ_LEN, BATCH, HIDDEN_SIZE) and h_seq.dtype == jnp.float32
    assert jnp.allclose(h_seq, ref, rtol=1e-5, atol=1e-5)

    print("KERNEL_OK")
</pallas_src>

<mosaic_0001>
module attributes {stable_mosaic.version = 11 : i64} {
  func.func @gru_seq_kernel(%arg0: i32, %arg1: memref<28x8x28xf32, #tpu.memory_space<vmem>>, %arg2: memref<8x128xf32, #tpu.memory_space<vmem>>, %arg3: memref<128x128xf32, #tpu.memory_space<vmem>>, %arg4: memref<28x128xf32, #tpu.memory_space<vmem>>, %arg5: memref<1x128xf32, #tpu.memory_space<vmem>>, %arg6: memref<1x128xf32, #tpu.memory_space<vmem>>, %arg7: memref<1xf32, #tpu.memory_space<smem>>, %arg8: memref<28x8x128xf32, #tpu.memory_space<vmem>>, %arg9: memref<28x8x128xf32, #tpu.memory_space<vmem>>) attributes {dimension_semantics = [#tpu.dimension_semantics<parallel>], iteration_bounds = array<i64: 2>, scalar_prefetch = 0 : i64, scratch_operands = 1 : i64, tpu.core_type = #tpu.core_type<tc>, window_params = [{transform_indices = @transform_0, window_bounds = array<i64: 28, 8, 28>}, {transform_indices = @transform_1, window_bounds = array<i64: 8, 128>}, {pipeline_mode = #tpu.pipeline_mode<synchronous>, transform_indices = @transform_2, window_bounds = array<i64: 128, 128>}, {pipeline_mode = #tpu.pipeline_mode<synchronous>, transform_indices = @transform_3, window_bounds = array<i64: 28, 128>}, {pipeline_mode = #tpu.pipeline_mode<synchronous>, transform_indices = @transform_4, window_bounds = array<i64: 1, 128>}, {pipeline_mode = #tpu.pipeline_mode<synchronous>, transform_indices = @transform_5, window_bounds = array<i64: 1, 128>}, {transform_indices = @transform_6, window_bounds = array<i64: 1>}, {transform_indices = @transform_7, window_bounds = array<i64: 28, 8, 128>}]} {
    %c0 = arith.constant 0 : index
    %0 = memref.load %arg7[%c0] : memref<1xf32, #tpu.memory_space<smem>>
    %cst = arith.constant 0.000000e+00 : f32
    %cst_0 = arith.constant 1.000000e+00 : f32
    %1 = arith.maximumf %cst, %0 : f32
    %2 = arith.minimumf %cst_0, %1 : f32
    %c0_1 = arith.constant 0 : index
    %c0_2 = arith.constant 0 : index
    %3 = vector.load %arg6[%c0_1, %c0_2] : memref<1x128xf32, #tpu.memory_space<vmem>>, vector<1x128xf32>
    %4 = arith.negf %3 : vector<1x128xf32>
    %5 = math.exp %4 : vector<1x128xf32>
    %cst_3 = arith.constant 1.000000e+00 : f32
    %6 = vector.broadcast %cst_3 : f32 to vector<1x128xf32>
    %7 = arith.addf %6, %5 : vector<1x128xf32>
    %8 = arith.divf %6, %7 : vector<1x128xf32>
    %9 = vector.broadcast %2 : f32 to vector<1x128xf32>
    %10 = arith.mulf %9, %8 : vector<1x128xf32>
    %11 = vector.shape_cast %10 : vector<1x128xf32> to vector<1x128xf32>
    %12 = vector.broadcast %11 : vector<1x128xf32> to vector<8x128xf32>
    %c0_4 = arith.constant 0 : index
    %c0_5 = arith.constant 0 : index
    %c0_6 = arith.constant 0 : index
    %13 = vector.load %arg1[%c0_4, %c0_5, %c0_6] : memref<28x8x28xf32, #tpu.memory_space<vmem>>, vector<28x8x28xf32>
    %14 = vector.shape_cast %13 : vector<28x8x28xf32> to vector<224x28xf32>
    %c0_7 = arith.constant 0 : index
    %c0_8 = arith.constant 0 : index
    %15 = vector.load %arg4[%c0_7, %c0_8] : memref<28x128xf32, #tpu.memory_space<vmem>>, vector<28x128xf32>
    %cst_9 = arith.constant dense<0.000000e+00> : vector<224x128xf32>
    %16 = tpu.matmul %14, %15, %cst_9 {dimension_numbers = #tpu.dot_dimension_numbers<[1], [0], [0], [1], [0, 0, 1, 1], [], []>} : vector<224x28xf32>, vector<28x128xf32>, vector<224x128xf32> -> vector<224x128xf32>
    %c0_10 = arith.constant 0 : index
    %c0_11 = arith.constant 0 : index
    %17 = vector.load %arg5[%c0_10, %c0_11] : memref<1x128xf32, #tpu.memory_space<vmem>>, vector<1x128xf32>
    %18 = vector.broadcast %17 : vector<1x128xf32> to vector<224x128xf32>
    %19 = arith.addf %16, %18 : vector<224x128xf32>
    %20 = vector.shape_cast %19 : vector<224x128xf32> to vector<28x8x128xf32>
    %c0_12 = arith.constant 0 : index
    %c0_13 = arith.constant 0 : index
    %c0_14 = arith.constant 0 : index
    %21 = vector.load %arg9[%c0_12, %c0_13, %c0_14] : memref<28x8x128xf32, #tpu.memory_space<vmem>>, vector<28x8x128xf32>
    tpu.vector_store %arg9[%c0_12, %c0_13, %c0_14], %20 {strides = array<i32>} : memref<28x8x128xf32, #tpu.memory_space<vmem>>, vector<28x8x128xf32>,
    %c0_15 = arith.constant 0 : index
    %c0_16 = arith.constant 0 : index
    %22 = vector.load %arg3[%c0_15, %c0_16] : memref<128x128xf32, #tpu.memory_space<vmem>>, vector<128x128xf32>
    %c0_17 = arith.constant 0 : index
    %c0_18 = arith.constant 0 : index
    %23 = vector.load %arg2[%c0_17, %c0_18] : memref<8x128xf32, #tpu.memory_space<vmem>>, vector<8x128xf32>
    %c0_i32 = arith.constant 0 : i32
    %cst_19 = arith.constant dense<0.000000e+00> : vector<8x128xf32>
    %24 = tpu.matmul %23, %22, %cst_19 {dimension_numbers = #tpu.dot_dimension_numbers<[1], [0], [0], [1], [0, 0, 1, 1], [], []>} : vector<8x128xf32>, vector<128x128xf32>, vector<8x128xf32> -> vector<8x128xf32>
    %25 = arith.index_cast %c0_i32 : i32 to index
    %c0_20 = arith.constant 0 : index
    %c0_21 = arith.constant 0 : index
    %26 = vector.load %arg9[%25, %c0_20, %c0_21] : memref<28x8x128xf32, #tpu.memory_space<vmem>>, vector<1x8x128xf32>
    %27 = vector.shape_cast %26 : vector<1x8x128xf32> to vector<8x128xf32>
    %28 = arith.addf %24, %27 : vector<8x128xf32>
    %29 = math.tanh %28 : vector<8x128xf32>
    %30 = arith.subf %29, %23 : vector<8x128xf32>
    %31 = arith.mulf %12, %30 : vector<8x128xf32>
    %32 = arith.addf %23, %31 : vector<8x128xf32>
    %33 = arith.index_cast %c0_i32 : i32 to index
    %c0_22 = arith.constant 0 : index
    %c0_23 = arith.constant 0 : index
    %34 = vector.load %arg8[%33, %c0_22, %c0_23] : memref<28x8x128xf32, #tpu.memory_space<vmem>>, vector<1x8x128xf32>
    %35 = vector.shape_cast %34 : vector<1x8x128xf32> to vector<8x128xf32>
    %36 = vector.shape_cast %32 : vector<8x128xf32> to vector<1x8x128xf32>
    tpu.vector_store %arg8[%33, %c0_22, %c0_23], %36 {strides = array<i32>} : memref<28x8x128xf32, #tpu.memory_space<vmem>>, vector<1x8x128xf32>,
    %c1_i32 = arith.constant 1 : i32
    %cst_24 = arith.constant dense<0.000000e+00> : vector<8x128xf32>
    %37 = tpu.matmul %32, %22, %cst_24 {dimension_numbers = #tpu.dot_dimension_numbers<[1], [0], [0], [1], [0, 0, 1, 1], [], []>} : vector<8x128xf32>, vector<128x128xf32>, vector<8x128xf32> -> vector<8x128xf32>
    %38 = arith.index_cast %c1_i32 : i32 to index
    %c0_25 = arith.constant 0 : index
    %c0_26 = arith.constant 0 : index
    %39 = vector.load %arg9[%38, %c0_25, %c0_26] : memref<28x8x128xf32, #tpu.memory_space<vmem>>, vector<1x8x128xf32>
    %40 = vector.shape_cast %39 : vector<1x8x128xf32> to vector<8x128xf32>
    %41 = arith.addf %37, %40 : vector<8x128xf32>
    %42 = math.tanh %41 : vector<8x128xf32>
    %43 = arith.subf %42, %32 : vector<8x128xf32>
    %44 = arith.mulf %12, %43 : vector<8x128xf32>
    %45 = arith.addf %32, %44 : vector<8x128xf32>
    %46 = arith.index_cast %c1_i32 : i32 to index
    %c0_27 = arith.constant 0 : index
    %c0_28 = arith.constant 0 : index
    %47 = vector.load %arg8[%46, %c0_27, %c0_28] : memref<28x8x128xf32, #tpu.memory_space<vmem>>, vector<1x8x128xf32>
    %48 = vector.shape_cast %47 : vector<1x8x128xf32> to vector<8x128xf32>
    %49 = vector.shape_cast %45 : vector<8x128xf32> to vector<1x8x128xf32>
    tpu.vector_store %arg8[%46, %c0_27, %c0_28], %49 {strides = array<i32>} : memref<28x8x128xf32, #tpu.memory_space<vmem>>, vector<1x8x128xf32>,
    %c2_i32 = arith.constant 2 : i32
    %cst_29 = arith.constant dense<0.000000e+00> : vector<8x128xf32>
    %50 = tpu.matmul %45, %22, %cst_29 {dimension_numbers = #tpu.dot_dimension_numbers<[1], [0], [0], [1], [0, 0, 1, 1], [], []>} : vector<8x128xf32>, vector<128x128xf32>, vector<8x128xf32> -> vector<8x128xf32>
    %51 = arith.index_cast %c2_i32 : i32 to index
    %c0_30 = arith.constant 0 : index
    %c0_31 = arith.constant 0 : index
    %52 = vector.load %arg9[%51, %c0_30, %c0_31] : memref<28x8x128xf32, #tpu.memory_space<vmem>>, vector<1x8x128xf32>
    %53 = vector.shape_cast %52 : vector<1x8x128xf32> to vector<8x128xf32>
    %54 = arith.addf %50, %53 : vector<8x128xf32>
    %55 = math.tanh %54 : vector<8x128xf32>
    %56 = arith.subf %55, %45 : vector<8x128xf32>
    %57 = arith.mulf %12, %56 : vector<8x128xf32>
    %58 = arith.addf %45, %57 : vector<8x128xf32>
    %59 = arith.index_cast %c2_i32 : i32 to index
    %c0_32 = arith.constant 0 : index
    %c0_33 = arith.constant 0 : index
    %60 = vector.load %arg8[%59, %c0_32, %c0_33] : memref<28x8x128xf32, #tpu.memory_space<vmem>>, vector<1x8x128xf32>
    %61 = vector.shape_cast %60 : vector<1x8x128xf32> to vector<8x128xf32>
    %62 = vector.shape_cast %58 : vector<8x128xf32> to vector<1x8x128xf32>
    tpu.vector_store %arg8[%59, %c0_32, %c0_33], %62 {strides = array<i32>} : memref<28x8x128xf32, #tpu.memory_space<vmem>>, vector<1x8x128xf32>,
    %c3_i32 = arith.constant 3 : i32
    %cst_34 = arith.constant dense<0.000000e+00> : vector<8x128xf32>
    %63 = tpu.matmul %58, %22, %cst_34 {dimension_numbers = #tpu.dot_dimension_numbers<[1], [0], [0], [1], [0, 0, 1, 1], [], []>} : vector<8x128xf32>, vector<128x128xf32>, vector<8x128xf32> -> vector<8x128xf32>
    %64 = arith.index_cast %c3_i32 : i32 to index
    %c0_35 = arith.constant 0 : index
    %c0_36 = arith.constant 0 : index
    %65 = vector.load %arg9[%64, %c0_35, %c0_36] : memref<28x8x128xf32, #tpu.memory_space<vmem>>, vector<1x8x128xf32>
    %66 = vector.shape_cast %65 : vector<1x8x128xf32> to vector<8x128xf32>
    %67 = arith.addf %63, %66 : vector<8x128xf32>
    %68 = math.tanh %67 : vector<8x128xf32>
    %69 = arith.subf %68, %58 : vector<8x128xf32>
    %70 = arith.mulf %12, %69 : vector<8x128xf32>
    %71 = arith.addf %58, %70 : vector<8x128xf32>
    %72 = arith.index_cast %c3_i32 : i32 to index
    %c0_37 = arith.constant 0 : index
    %c0_38 = arith.constant 0 : index
    %73 = vector.load %arg8[%72, %c0_37, %c0_38] : memref<28x8x128xf32, #tpu.memory_space<vmem>>, vector<1x8x128xf32>
    %74 = vector.shape_cast %73 : vector<1x8x128xf32> to vector<8x128xf32>
    %75 = vector.shape_cast %71 : vector<8x128xf32> to vector<1x8x128xf32>
    tpu.vector_store %arg8[%72, %c0_37, %c0_38], %75 {strides = array<i32>} : memref<28x8x128xf32, #tpu.memory_space<vmem>>, vector<1x8x128xf32>,
    %c4_i32 = arith.constant 4 : i32
    %cst_39 = arith.constant dense<0.000000e+00> : vector<8x128xf32>
    %76 = tpu.matmul %71, %22, %cst_39 {dimension_numbers = #tpu.dot_dimension_numbers<[1], [0], [0], [1], [0, 0, 1, 1], [], []>} : vector<8x128xf32>, vector<128x128xf32>, vector<8x128xf32> -> vector<8x128xf32>
    %77 = arith.index_cast %c4_i32 : i32 to index
    %c0_40 = arith.constant 0 : index
    %c0_41 = arith.constant 0 : index
    %78 = vector.load %arg9[%77, %c0_40, %c0_41] : memref<28x8x128xf32, #tpu.memory_space<vmem>>, vector<1x8x128xf32>
    %79 = vector.shape_cast %78 : vector<1x8x128xf32> to vector<8x128xf32>
    %80 = arith.addf %76, %79 : vector<8x128xf32>
    %81 = math.tanh %80 : vector<8x128xf32>
    %82 = arith.subf %81, %71 : vector<8x128xf32>
    %83 = arith.mulf %12, %82 : vector<8x128xf32>
    %84 = arith.addf %71, %83 : vector<8x128xf32>
    %85 = arith.index_cast %c4_i32 : i32 to index
    %c0_42 = arith.constant 0 : index
    %c0_43 = arith.constant 0 : index
    %86 = vector.load %arg8[%85, %c0_42, %c0_43] : memref<28x8x128xf32, #tpu.memory_space<vmem>>, vector<1x8x128xf32>
    %87 = vector.shape_cast %86 : vector<1x8x128xf32> to vector<8x128xf32>
    %88 = vector.shape_cast %84 : vector<8x128xf32> to vector<1x8x128xf32>
    tpu.vector_store %arg8[%85, %c0_42, %c0_43], %88 {strides = array<i32>} : memref<28x8x128xf32, #tpu.memory_space<vmem>>, vector<1x8x128xf32>,
    %c5_i32 = arith.constant 5 : i32
    %cst_44 = arith.constant dense<0.000000e+00> : vector<8x128xf32>
    %89 = tpu.matmul %84, %22, %cst_44 {dimension_numbers = #tpu.dot_dimension_numbers<[1], [0], [0], [1], [0, 0, 1, 1], [], []>} : vector<8x128xf32>, vector<128x128xf32>, vector<8x128xf32> -> vector<8x128xf32>
    %90 = arith.index_cast %c5_i32 : i32 to index
    %c0_45 = arith.constant 0 : index
    %c0_46 = arith.constant 0 : index
    %91 = vector.load %arg9[%90, %c0_45, %c0_46] : memref<28x8x128xf32, #tpu.memory_space<vmem>>, vector<1x8x128xf32>
    %92 = vector.shape_cast %91 : vector<1x8x128xf32> to vector<8x128xf32>
    %93 = arith.addf %89, %92 : vector<8x128xf32>
    %94 = math.tanh %93 : vector<8x128xf32>
    %95 = arith.subf %94, %84 : vector<8x128xf32>
    %96 = arith.mulf %12, %95 : vector<8x128xf32>
    %97 = arith.addf %84, %96 : vector<8x128xf32>
    %98 = arith.index_cast %c5_i32 : i32 to index
    %c0_47 = arith.constant 0 : index
    %c0_48 = arith.constant 0 : index
    %99 = vector.load %arg8[%98, %c0_47, %c0_48] : memref<28x8x128xf32, #tpu.memory_space<vmem>>, vector<1x8x128xf32>
    %100 = vector.shape_cast %99 : vector<1x8x128xf32> to vector<8x128xf32>
    %101 = vector.shape_cast %97 : vector<8x128xf32> to vector<1x8x128xf32>
    tpu.vector_store %arg8[%98, %c0_47, %c0_48], %101 {strides = array<i32>} : memref<28x8x128xf32, #tpu.memory_space<vmem>>, vector<1x8x128xf32>,
    %c6_i32 = arith.constant 6 : i32
    %cst_49 = arith.constant dense<0.000000e+00> : vector<8x128xf32>
    %102 = tpu.matmul %97, %22, %cst_49 {dimension_numbers = #tpu.dot_dimension_numbers<[1], [0], [0], [1], [0, 0, 1, 1], [], []>} : vector<8x128xf32>, vector<128x128xf32>, vector<8x128xf32> -> vector<8x128xf32>
    %103 = arith.index_cast %c6_i32 : i32 to index
    %c0_50 = arith.constant 0 : index
    %c0_51 = arith.constant 0 : index
    %104 = vector.load %arg9[%103, %c0_50, %c0_51] : memref<28x8x128xf32, #tpu.memory_space<vmem>>, vector<1x8x128xf32>
    %105 = vector.shape_cast %104 : vector<1x8x128xf32> to vector<8x128xf32>
    %106 = arith.addf %102, %105 : vector<8x128xf32>
    %107 = math.tanh %106 : vector<8x128xf32>
    %108 = arith.subf %107, %97 : vector<8x128xf32>
    %109 = arith.mulf %12, %108 : vector<8x128xf32>
    %110 = arith.addf %97, %109 : vector<8x128xf32>
    %111 = arith.index_cast %c6_i32 : i32 to index
    %c0_52 = arith.constant 0 : index
    %c0_53 = arith.constant 0 : index
    %112 = vector.load %arg8[%111, %c0_52, %c0_53] : memref<28x8x128xf32, #tpu.memory_space<vmem>>, vector<1x8x128xf32>
    %113 = vector.shape_cast %112 : vector<1x8x128xf32> to vector<8x128xf32>
    %114 = vector.shape_cast %110 : vector<8x128xf32> to vector<1x8x128xf32>
    tpu.vector_store %arg8[%111, %c0_52, %c0_53], %114 {strides = array<i32>} : memref<28x8x128xf32, #tpu.memory_space<vmem>>, vector<1x8x128xf32>,
    %c7_i32 = arith.constant 7 : i32
    %cst_54 = arith.constant dense<0.000000e+00> : vector<8x128xf32>
    %115 = tpu.matmul %110, %22, %cst_54 {dimension_numbers = #tpu.dot_dimension_numbers<[1], [0], [0], [1], [0, 0, 1, 1], [], []>} : vector<8x128xf32>, vector<128x128xf32>, vector<8x128xf32> -> vector<8x128xf32>
    %116 = arith.index_cast %c7_i32 : i32 to index
    %c0_55 = arith.constant 0 : index
    %c0_56 = arith.constant 0 : index
    %117 = vector.load %arg9[%116, %c0_55, %c0_56] : memref<28x8x128xf32, #tpu.memory_space<vmem>>, vector<1x8x128xf32>
    %118 = vector.shape_cast %117 : vector<1x8x128xf32> to vector<8x128xf32>
    %119 = arith.addf %115, %118 : vector<8x128xf32>
    %120 = math.tanh %119 : vector<8x128xf32>
    %121 = arith.subf %120, %110 : vector<8x128xf32>
    %122 = arith.mulf %12, %121 : vector<8x128xf32>
    %123 = arith.addf %110, %122 : vector<8x128xf32>
    %124 = arith.index_cast %c7_i32 : i32 to index
    %c0_57 = arith.constant 0 : index
    %c0_58 = arith.constant 0 : index
    %125 = vector.load %arg8[%124, %c0_57, %c0_58] : memref<28x8x128xf32, #tpu.memory_space<vmem>>, vector<1x8x128xf32>
    %126 = vector.shape_cast %125 : vector<1x8x128xf32> to vector<8x128xf32>
    %127 = vector.shape_cast %123 : vector<8x128xf32> to vector<1x8x128xf32>
    tpu.vector_store %arg8[%124, %c0_57, %c0_58], %127 {strides = array<i32>} : memref<28x8x128xf32, #tpu.memory_space<vmem>>, vector<1x8x128xf32>,
    %c8_i32 = arith.constant 8 : i32
    %cst_59 = arith.constant dense<0.000000e+00> : vector<8x128xf32>
    %128 = tpu.matmul %123, %22, %cst_59 {dimension_numbers = #tpu.dot_dimension_numbers<[1], [0], [0], [1], [0, 0, 1, 1], [], []>} : vector<8x128xf32>, vector<128x128xf32>, vector<8x128xf32> -> vector<8x128xf32>
    %129 = arith.index_cast %c8_i32 : i32 to index
    %c0_60 = arith.constant 0 : index
    %c0_61 = arith.constant 0 : index
    %130 = vector.load %arg9[%129, %c0_60, %c0_61] : memref<28x8x128xf32, #tpu.memory_space<vmem>>, vector<1x8x128xf32>
    %131 = vector.shape_cast %130 : vector<1x8x128xf32> to vector<8x128xf32>
    %132 = arith.addf %128, %131 : vector<8x128xf32>
    %133 = math.tanh %132 : vector<8x128xf32>
    %134 = arith.subf %133, %123 : vector<8x128xf32>
    %135 = arith.mulf %12, %134 : vector<8x128xf32>
    %136 = arith.addf %123, %135 : vector<8x128xf32>
    %137 = arith.index_cast %c8_i32 : i32 to index
    %c0_62 = arith.constant 0 : index
    %c0_63 = arith.constant 0 : index
    %138 = vector.load %arg8[%137, %c0_62, %c0_63] : memref<28x8x128xf32, #tpu.memory_space<vmem>>, vector<1x8x128xf32>
    %139 = vector.shape_cast %138 : vector<1x8x128xf32> to vector<8x128xf32>
    %140 = vector.shape_cast %136 : vector<8x128xf32> to vector<1x8x128xf32>
    tpu.vector_store %arg8[%137, %c0_62, %c0_63], %140 {strides = array<i32>} : memref<28x8x128xf32, #tpu.memory_space<vmem>>, vector<1x8x128xf32>,
    %c9_i32 = arith.constant 9 : i32
    %cst_64 = arith.constant dense<0.000000e+00> : vector<8x128xf32>
    %141 = tpu.matmul %136, %22, %cst_64 {dimension_numbers = #tpu.dot_dimension_numbers<[1], [0], [0], [1], [0, 0, 1, 1], [], []>} : vector<8x128xf32>, vector<128x128xf32>, vector<8x128xf32> -> vector<8x128xf32>
    %142 = arith.index_cast %c9_i32 : i32 to index
    %c0_65 = arith.constant 0 : index
    %c0_66 = arith.constant 0 : index
    %143 = vector.load %arg9[%142, %c0_65, %c0_66] : memref<28x8x128xf32, #tpu.memory_space<vmem>>, vector<1x8x128xf32>
    %144 = vector.shape_cast %143 : vector<1x8x128xf32> to vector<8x128xf32>
    %145 = arith.addf %141, %144 : vector<8x128xf32>
    %146 = math.tanh %145 : vector<8x128xf32>
    %147 = arith.subf %146, %136 : vector<8x128xf32>
    %148 = arith.mulf %12, %147 : vector<8x128xf32>
    %149 = arith.addf %136, %148 : vector<8x128xf32>
    %150 = arith.index_cast %c9_i32 : i32 to index
    %c0_67 = arith.constant 0 : index
    %c0_68 = arith.constant 0 : index
    %151 = vector.load %arg8[%150, %c0_67, %c0_68] : memref<28x8x128xf32, #tpu.memory_space<vmem>>, vector<1x8x128xf32>
    %152 = vector.shape_cast %151 : vector<1x8x128xf32> to vector<8x128xf32>
    %153 = vector.shape_cast %149 : vector<8x128xf32> to vector<1x8x128xf32>
    tpu.vector_store %arg8[%150, %c0_67, %c0_68], %153 {strides = array<i32>} : memref<28x8x128xf32, #tpu.memory_space<vmem>>, vector<1x8x128xf32>,
    %c10_i32 = arith.constant 10 : i32
    %cst_69 = arith.constant dense<0.000000e+00> : vector<8x128xf32>
    %154 = tpu.matmul %149, %22, %cst_69 {dimension_numbers = #tpu.dot_dimension_numbers<[1], [0], [0], [1], [0, 0, 1, 1], [], []>} : vector<8x128xf32>, vector<128x128xf32>, vector<8x128xf32> -> vector<8x128xf32>
    %155 = arith.index_cast %c10_i32 : i32 to index
    %c0_70 = arith.constant 0 : index
    %c0_71 = arith.constant 0 : index
    %156 = vector.load %arg9[%155, %c0_70, %c0_71] : memref<28x8x128xf32, #tpu.memory_space<vmem>>, vector<1x8x128xf32>
    %157 = vector.shape_cast %156 : vector<1x8x128xf32> to vector<8x128xf32>
    %158 = arith.addf %154, %157 : vector<8x128xf32>
    %159 = math.tanh %158 : vector<8x128xf32>
    %160 = arith.subf %159, %149 : vector<8x128xf32>
    %161 = arith.mulf %12, %160 : vector<8x128xf32>
    %162 = arith.addf %149, %161 : vector<8x128xf32>
    %163 = arith.index_cast %c10_i32 : i32 to index
    %c0_72 = arith.constant 0 : index
    %c0_73 = arith.constant 0 : index
    %164 = vector.load %arg8[%163, %c0_72, %c0_73] : memref<28x8x128xf32, #tpu.memory_space<vmem>>, vector<1x8x128xf32>
    %165 = vector.shape_cast %164 : vector<1x8x128xf32> to vector<8x128xf32>
    %166 = vector.shape_cast %162 : vector<8x128xf32> to vector<1x8x128xf32>
    tpu.vector_store %arg8[%163, %c0_72, %c0_73], %166 {strides = array<i32>} : memref<28x8x128xf32, #tpu.memory_space<vmem>>, vector<1x8x128xf32>,
    %c11_i32 = arith.constant 11 : i32
    %cst_74 = arith.constant dense<0.000000e+00> : vector<8x128xf32>
    %167 = tpu.matmul %162, %22, %cst_74 {dimension_numbers = #tpu.dot_dimension_numbers<[1], [0], [0], [1], [0, 0, 1, 1], [], []>} : vector<8x128xf32>, vector<128x128xf32>, vector<8x128xf32> -> vector<8x128xf32>
    %168 = arith.index_cast %c11_i32 : i32 to index
    %c0_75 = arith.constant 0 : index
    %c0_76 = arith.constant 0 : index
    %169 = vector.load %arg9[%168, %c0_75, %c0_76] : memref<28x8x128xf32, #tpu.memory_space<vmem>>, vector<1x8x128xf32>
    %170 = vector.shape_cast %169 : vector<1x8x128xf32> to vector<8x128xf32>
    %171 = arith.addf %167, %170 : vector<8x128xf32>
    %172 = math.tanh %171 : vector<8x128xf32>
    %173 = arith.subf %172, %162 : vector<8x128xf32>
    %174 = arith.mulf %12, %173 : vector<8x128xf32>
    %175 = arith.addf %162, %174 : vector<8x128xf32>
    %176 = arith.index_cast %c11_i32 : i32 to index
    %c0_77 = arith.constant 0 : index
    %c0_78 = arith.constant 0 : index
    %177 = vector.load %arg8[%176, %c0_77, %c0_78] : memref<28x8x128xf32, #tpu.memory_space<vmem>>, vector<1x8x128xf32>
    %178 = vector.shape_cast %177 : vector<1x8x128xf32> to vector<8x128xf32>
    %179 = vector.shape_cast %175 : vector<8x128xf32> to vector<1x8x128xf32>
    tpu.vector_store %arg8[%176, %c0_77, %c0_78], %179 {strides = array<i32>} : memref<28x8x128xf32, #tpu.memory_space<vmem>>, vector<1x8x128xf32>,
    %c12_i32 = arith.constant 12 : i32
    %cst_79 = arith.constant dense<0.000000e+00> : vector<8x128xf32>
    %180 = tpu.matmul %175, %22, %cst_79 {dimension_numbers = #tpu.dot_dimension_numbers<[1], [0], [0], [1], [0, 0, 1, 1], [], []>} : vector<8x128xf32>, vector<128x128xf32>, vector<8x128xf32> -> vector<8x128xf32>
    %181 = arith.index_cast %c12_i32 : i32 to index
    %c0_80 = arith.constant 0 : index
    %c0_81 = arith.constant 0 : index
    %182 = vector.load %arg9[%181, %c0_80, %c0_81] : memref<28x8x128xf32, #tpu.memory_space<vmem>>, vector<1x8x128xf32>
    %183 = vector.shape_cast %182 : vector<1x8x128xf32> to vector<8x128xf32>
    %184 = arith.addf %180, %183 : vector<8x128xf32>
    %185 = math.tanh %184 : vector<8x128xf32>
    %186 = arith.subf %185, %175 : vector<8x128xf32>
    %187 = arith.mulf %12, %186 : vector<8x128xf32>
    %188 = arith.addf %175, %187 : vector<8x128xf32>
    %189 = arith.index_cast %c12_i32 : i32 to index
    %c0_82 = arith.constant 0 : index
    %c0_83 = arith.constant 0 : index
    %190 = vector.load %arg8[%189, %c0_82, %c0_83] : memref<28x8x128xf32, #tpu.memory_space<vmem>>, vector<1x8x128xf32>
    %191 = vector.shape_cast %190 : vector<1x8x128xf32> to vector<8x128xf32>
    %192 = vector.shape_cast %188 : vector<8x128xf32> to vector<1x8x128xf32>
    tpu.vector_store %arg8[%189, %c0_82, %c0_83], %192 {strides = array<i32>} : memref<28x8x128xf32, #tpu.memory_space<vmem>>, vector<1x8x128xf32>,
    %c13_i32 = arith.constant 13 : i32
    %cst_84 = arith.constant dense<0.000000e+00> : vector<8x128xf32>
    %193 = tpu.matmul %188, %22, %cst_84 {dimension_numbers = #tpu.dot_dimension_numbers<[1], [0], [0], [1], [0, 0, 1, 1], [], []>} : vector<8x128xf32>, vector<128x128xf32>, vector<8x128xf32> -> vector<8x128xf32>
    %194 = arith.index_cast %c13_i32 : i32 to index
    %c0_85 = arith.constant 0 : index
    %c0_86 = arith.constant 0 : index
    %195 = vector.load %arg9[%194, %c0_85, %c0_86] : memref<28x8x128xf32, #tpu.memory_space<vmem>>, vector<1x8x128xf32>
    %196 = vector.shape_cast %195 : vector<1x8x128xf32> to vector<8x128xf32>
    %197 = arith.addf %193, %196 : vector<8x128xf32>
    %198 = math.tanh %197 : vector<8x128xf32>
    %199 = arith.subf %198, %188 : vector<8x128xf32>
    %200 = arith.mulf %12, %199 : vector<8x128xf32>
    %201 = arith.addf %188, %200 : vector<8x128xf32>
    %202 = arith.index_cast %c13_i32 : i32 to index
    %c0_87 = arith.constant 0 : index
    %c0_88 = arith.constant 0 : index
    %203 = vector.load %arg8[%202, %c0_87, %c0_88] : memref<28x8x128xf32, #tpu.memory_space<vmem>>, vector<1x8x128xf32>
    %204 = vector.shape_cast %203 : vector<1x8x128xf32> to vector<8x128xf32>
    %205 = vector.shape_cast %201 : vector<8x128xf32> to vector<1x8x128xf32>
    tpu.vector_store %arg8[%202, %c0_87, %c0_88], %205 {strides = array<i32>} : memref<28x8x128xf32, #tpu.memory_space<vmem>>, vector<1x8x128xf32>,
    %c14_i32 = arith.constant 14 : i32
    %cst_89 = arith.constant dense<0.000000e+00> : vector<8x128xf32>
    %206 = tpu.matmul %201, %22, %cst_89 {dimension_numbers = #tpu.dot_dimension_numbers<[1], [0], [0], [1], [0, 0, 1, 1], [], []>} : vector<8x128xf32>, vector<128x128xf32>, vector<8x128xf32> -> vector<8x128xf32>
    %207 = arith.index_cast %c14_i32 : i32 to index
    %c0_90 = arith.constant 0 : index
    %c0_91 = arith.constant 0 : index
    %208 = vector.load %arg9[%207, %c0_90, %c0_91] : memref<28x8x128xf32, #tpu.memory_space<vmem>>, vector<1x8x128xf32>
    %209 = vector.shape_cast %208 : vector<1x8x128xf32> to vector<8x128xf32>
    %210 = arith.addf %206, %209 : vector<8x128xf32>
    %211 = math.tanh %210 : vector<8x128xf32>
    %212 = arith.subf %211, %201 : vector<8x128xf32>
    %213 = arith.mulf %12, %212 : vector<8x128xf32>
    %214 = arith.addf %201, %213 : vector<8x128xf32>
    %215 = arith.index_cast %c14_i32 : i32 to index
    %c0_92 = arith.constant 0 : index
    %c0_93 = arith.constant 0 : index
    %216 = vector.load %arg8[%215, %c0_92, %c0_93] : memref<28x8x128xf32, #tpu.memory_space<vmem>>, vector<1x8x128xf32>
    %217 = vector.shape_cast %216 : vector<1x8x128xf32> to vector<8x128xf32>
    %218 = vector.shape_cast %214 : vector<8x128xf32> to vector<1x8x128xf32>
    tpu.vector_store %arg8[%215, %c0_92, %c0_93], %218 {strides = array<i32>} : memref<28x8x128xf32, #tpu.memory_space<vmem>>, vector<1x8x128xf32>,
    %c15_i32 = arith.constant 15 : i32
    %cst_94 = arith.constant dense<0.000000e+00> : vector<8x128xf32>
    %219 = tpu.matmul %214, %22, %cst_94 {dimension_numbers = #tpu.dot_dimension_numbers<[1], [0], [0], [1], [0, 0, 1, 1], [], []>} : vector<8x128xf32>, vector<128x128xf32>, vector<8x128xf32> -> vector<8x128xf32>
    %220 = arith.index_cast %c15_i32 : i32 to index
    %c0_95 = arith.constant 0 : index
    %c0_96 = arith.constant 0 : index
    %221 = vector.load %arg9[%220, %c0_95, %c0_96] : memref<28x8x128xf32, #tpu.memory_space<vmem>>, vector<1x8x128xf32>
    %222 = vector.shape_cast %221 : vector<1x8x128xf32> to vector<8x128xf32>
    %223 = arith.addf %219, %222 : vector<8x128xf32>
    %224 = math.tanh %223 : vector<8x128xf32>
    %225 = arith.subf %224, %214 : vector<8x128xf32>
    %226 = arith.mulf %12, %225 : vector<8x128xf32>
    %227 = arith.addf %214, %226 : vector<8x128xf32>
    %228 = arith.index_cast %c15_i32 : i32 to index
    %c0_97 = arith.constant 0 : index
    %c0_98 = arith.constant 0 : index
    %229 = vector.load %arg8[%228, %c0_97, %c0_98] : memref<28x8x128xf32, #tpu.memory_space<vmem>>, vector<1x8x128xf32>
    %230 = vector.shape_cast %229 : vector<1x8x128xf32> to vector<8x128xf32>
    %231 = vector.shape_cast %227 : vector<8x128xf32> to vector<1x8x128xf32>
    tpu.vector_store %arg8[%228, %c0_97, %c0_98], %231 {strides = array<i32>} : memref<28x8x128xf32, #tpu.memory_space<vmem>>, vector<1x8x128xf32>,
    %c16_i32 = arith.constant 16 : i32
    %cst_99 = arith.constant dense<0.000000e+00> : vector<8x128xf32>
    %232 = tpu.matmul %227, %22, %cst_99 {dimension_numbers = #tpu.dot_dimension_numbers<[1], [0], [0], [1], [0, 0, 1, 1], [], []>} : vector<8x128xf32>, vector<128x128xf32>, vector<8x128xf32> -> vector<8x128xf32>
    %233 = arith.index_cast %c16_i32 : i32 to index
    %c0_100 = arith.constant 0 : index
    %c0_101 = arith.constant 0 : index
    %234 = vector.load %arg9[%233, %c0_100, %c0_101] : memref<28x8x128xf32, #tpu.memory_space<vmem>>, vector<1x8x128xf32>
    %235 = vector.shape_cast %234 : vector<1x8x128xf32> to vector<8x128xf32>
    %236 = arith.addf %232, %235 : vector<8x128xf32>
    %237 = math.tanh %236 : vector<8x128xf32>
    %238 = arith.subf %237, %227 : vector<8x128xf32>
    %239 = arith.mulf %12, %238 : vector<8x128xf32>
    %240 = arith.addf %227, %239 : vector<8x128xf32>
    %241 = arith.index_cast %c16_i32 : i32 to index
    %c0_102 = arith.constant 0 : index
    %c0_103 = arith.constant 0 : index
    %242 = vector.load %arg8[%241, %c0_102, %c0_103] : memref<28x8x128xf32, #tpu.memory_space<vmem>>, vector<1x8x128xf32>
    %243 = vector.shape_cast %242 : vector<1x8x128xf32> to vector<8x128xf32>
    %244 = vector.shape_cast %240 : vector<8x128xf32> to vector<1x8x128xf32>
    tpu.vector_store %arg8[%241, %c0_102, %c0_103], %244 {strides = array<i32>} : memref<28x8x128xf32, #tpu.memory_space<vmem>>, vector<1x8x128xf32>,
    %c17_i32 = arith.constant 17 : i32
    %cst_104 = arith.constant dense<0.000000e+00> : vector<8x128xf32>
    %245 = tpu.matmul %240, %22, %cst_104 {dimension_numbers = #tpu.dot_dimension_numbers<[1], [0], [0], [1], [0, 0, 1, 1], [], []>} : vector<8x128xf32>, vector<128x128xf32>, vector<8x128xf32> -> vector<8x128xf32>
    %246 = arith.index_cast %c17_i32 : i32 to index
    %c0_105 = arith.constant 0 : index
    %c0_106 = arith.constant 0 : index
    %247 = vector.load %arg9[%246, %c0_105, %c0_106] : memref<28x8x128xf32, #tpu.memory_space<vmem>>, vector<1x8x128xf32>
    %248 = vector.shape_cast %247 : vector<1x8x128xf32> to vector<8x128xf32>
    %249 = arith.addf %245, %248 : vector<8x128xf32>
    %250 = math.tanh %249 : vector<8x128xf32>
    %251 = arith.subf %250, %240 : vector<8x128xf32>
    %252 = arith.mulf %12, %251 : vector<8x128xf32>
    %253 = arith.addf %240, %252 : vector<8x128xf32>
    %254 = arith.index_cast %c17_i32 : i32 to index
    %c0_107 = arith.constant 0 : index
    %c0_108 = arith.constant 0 : index
    %255 = vector.load %arg8[%254, %c0_107, %c0_108] : memref<28x8x128xf32, #tpu.memory_space<vmem>>, vector<1x8x128xf32>
    %256 = vector.shape_cast %255 : vector<1x8x128xf32> to vector<8x128xf32>
    %257 = vector.shape_cast %253 : vector<8x128xf32> to vector<1x8x128xf32>
    tpu.vector_store %arg8[%254, %c0_107, %c0_108], %257 {strides = array<i32>} : memref<28x8x128xf32, #tpu.memory_space<vmem>>, vector<1x8x128xf32>,
    %c18_i32 = arith.constant 18 : i32
    %cst_109 = arith.constant dense<0.000000e+00> : vector<8x128xf32>
    %258 = tpu.matmul %253, %22, %cst_109 {dimension_numbers = #tpu.dot_dimension_numbers<[1], [0], [0], [1], [0, 0, 1, 1], [], []>} : vector<8x128xf32>, vector<128x128xf32>, vector<8x128xf32> -> vector<8x128xf32>
    %259 = arith.index_cast %c18_i32 : i32 to index
    %c0_110 = arith.constant 0 : index
    %c0_111 = arith.constant 0 : index
    %260 = vector.load %arg9[%259, %c0_110, %c0_111] : memref<28x8x128xf32, #tpu.memory_space<vmem>>, vector<1x8x128xf32>
    %261 = vector.shape_cast %260 : vector<1x8x128xf32> to vector<8x128xf32>
    %262 = arith.addf %258, %261 : vector<8x128xf32>
    %263 = math.tanh %262 : vector<8x128xf32>
    %264 = arith.subf %263, %253 : vector<8x128xf32>
    %265 = arith.mulf %12, %264 : vector<8x128xf32>
    %266 = arith.addf %253, %265 : vector<8x128xf32>
    %267 = arith.index_cast %c18_i32 : i32 to index
    %c0_112 = arith.constant 0 : index
    %c0_113 = arith.constant 0 : index
    %268 = vector.load %arg8[%267, %c0_112, %c0_113] : memref<28x8x128xf32, #tpu.memory_space<vmem>>, vector<1x8x128xf32>
    %269 = vector.shape_cast %268 : vector<1x8x128xf32> to vector<8x128xf32>
    %270 = vector.shape_cast %266 : vector<8x128xf32> to vector<1x8x128xf32>
    tpu.vector_store %arg8[%267, %c0_112, %c0_113], %270 {strides = array<i32>} : memref<28x8x128xf32, #tpu.memory_space<vmem>>, vector<1x8x128xf32>,
    %c19_i32 = arith.constant 19 : i32
    %cst_114 = arith.constant dense<0.000000e+00> : vector<8x128xf32>
    %271 = tpu.matmul %266, %22, %cst_114 {dimension_numbers = #tpu.dot_dimension_numbers<[1], [0], [0], [1], [0, 0, 1, 1], [], []>} : vector<8x128xf32>, vector<128x128xf32>, vector<8x128xf32> -> vector<8x128xf32>
    %272 = arith.index_cast %c19_i32 : i32 to index
    %c0_115 = arith.constant 0 : index
    %c0_116 = arith.constant 0 : index
    %273 = vector.load %arg9[%272, %c0_115, %c0_116] : memref<28x8x128xf32, #tpu.memory_space<vmem>>, vector<1x8x128xf32>
    %274 = vector.shape_cast %273 : vector<1x8x128xf32> to vector<8x128xf32>
    %275 = arith.addf %271, %274 : vector<8x128xf32>
    %276 = math.tanh %275 : vector<8x128xf32>
    %277 = arith.subf %276, %266 : vector<8x128xf32>
    %278 = arith.mulf %12, %277 : vector<8x128xf32>
    %279 = arith.addf %266, %278 : vector<8x128xf32>
    %280 = arith.index_cast %c19_i32 : i32 to index
    %c0_117 = arith.constant 0 : index
    %c0_118 = arith.constant 0 : index
    %281 = vector.load %arg8[%280, %c0_117, %c0_118] : memref<28x8x128xf32, #tpu.memory_space<vmem>>, vector<1x8x128xf32>
    %282 = vector.shape_cast %281 : vector<1x8x128xf32> to vector<8x128xf32>
    %283 = vector.shape_cast %279 : vector<8x128xf32> to vector<1x8x128xf32>
    tpu.vector_store %arg8[%280, %c0_117, %c0_118], %283 {strides = array<i32>} : memref<28x8x128xf32, #tpu.memory_space<vmem>>, vector<1x8x128xf32>,
    %c20_i32 = arith.constant 20 : i32
    %cst_119 = arith.constant dense<0.000000e+00> : vector<8x128xf32>
    %284 = tpu.matmul %279, %22, %cst_119 {dimension_numbers = #tpu.dot_dimension_numbers<[1], [0], [0], [1], [0, 0, 1, 1], [], []>} : vector<8x128xf32>, vector<128x128xf32>, vector<8x128xf32> -> vector<8x128xf32>
    %285 = arith.index_cast %c20_i32 : i32 to index
    %c0_120 = arith.constant 0 : index
    %c0_121 = arith.constant 0 : index
    %286 = vector.load %arg9[%285, %c0_120, %c0_121] : memref<28x8x128xf32, #tpu.memory_space<vmem>>, vector<1x8x128xf32>
    %287 = vector.shape_cast %286 : vector<1x8x128xf32> to vector<8x128xf32>
    %288 = arith.addf %284, %287 : vector<8x128xf32>
    %289 = math.tanh %288 : vector<8x128xf32>
    %290 = arith.subf %289, %279 : vector<8x128xf32>
    %291 = arith.mulf %12, %290 : vector<8x128xf32>
    %292 = arith.addf %279, %291 : vector<8x128xf32>
    %293 = arith.index_cast %c20_i32 : i32 to index
    %c0_122 = arith.constant 0 : index
    %c0_123 = arith.constant 0 : index
    %294 = vector.load %arg8[%293, %c0_122, %c0_123] : memref<28x8x128xf32, #tpu.memory_space<vmem>>, vector<1x8x128xf32>
    %295 = vector.shape_cast %294 : vector<1x8x128xf32> to vector<8x128xf32>
    %296 = vector.shape_cast %292 : vector<8x128xf32> to vector<1x8x128xf32>
    tpu.vector_store %arg8[%293, %c0_122, %c0_123], %296 {strides = array<i32>} : memref<28x8x128xf32, #tpu.memory_space<vmem>>, vector<1x8x128xf32>,
    %c21_i32 = arith.constant 21 : i32
    %cst_124 = arith.constant dense<0.000000e+00> : vector<8x128xf32>
    %297 = tpu.matmul %292, %22, %cst_124 {dimension_numbers = #tpu.dot_dimension_numbers<[1], [0], [0], [1], [0, 0, 1, 1], [], []>} : vector<8x128xf32>, vector<128x128xf32>, vector<8x128xf32> -> vector<8x128xf32>
    %298 = arith.index_cast %c21_i32 : i32 to index
    %c0_125 = arith.constant 0 : index
    %c0_126 = arith.constant 0 : index
    %299 = vector.load %arg9[%298, %c0_125, %c0_126] : memref<28x8x128xf32, #tpu.memory_space<vmem>>, vector<1x8x128xf32>
    %300 = vector.shape_cast %299 : vector<1x8x128xf32> to vector<8x128xf32>
    %301 = arith.addf %297, %300 : vector<8x128xf32>
    %302 = math.tanh %301 : vector<8x128xf32>
    %303 = arith.subf %302, %292 : vector<8x128xf32>
    %304 = arith.mulf %12, %303 : vector<8x128xf32>
    %305 = arith.addf %292, %304 : vector<8x128xf32>
    %306 = arith.index_cast %c21_i32 : i32 to index
    %c0_127 = arith.constant 0 : index
    %c0_128 = arith.constant 0 : index
    %307 = vector.load %arg8[%306, %c0_127, %c0_128] : memref<28x8x128xf32, #tpu.memory_space<vmem>>, vector<1x8x128xf32>
    %308 = vector.shape_cast %307 : vector<1x8x128xf32> to vector<8x128xf32>
    %309 = vector.shape_cast %305 : vector<8x128xf32> to vector<1x8x128xf32>
    tpu.vector_store %arg8[%306, %c0_127, %c0_128], %309 {strides = array<i32>} : memref<28x8x128xf32, #tpu.memory_space<vmem>>, vector<1x8x128xf32>,
    %c22_i32 = arith.constant 22 : i32
    %cst_129 = arith.constant dense<0.000000e+00> : vector<8x128xf32>
    %310 = tpu.matmul %305, %22, %cst_129 {dimension_numbers = #tpu.dot_dimension_numbers<[1], [0], [0], [1], [0, 0, 1, 1], [], []>} : vector<8x128xf32>, vector<128x128xf32>, vector<8x128xf32> -> vector<8x128xf32>
    %311 = arith.index_cast %c22_i32 : i32 to index
    %c0_130 = arith.constant 0 : index
    %c0_131 = arith.constant 0 : index
    %312 = vector.load %arg9[%311, %c0_130, %c0_131] : memref<28x8x128xf32, #tpu.memory_space<vmem>>, vector<1x8x128xf32>
    %313 = vector.shape_cast %312 : vector<1x8x128xf32> to vector<8x128xf32>
    %314 = arith.addf %310, %313 : vector<8x128xf32>
    %315 = math.tanh %314 : vector<8x128xf32>
    %316 = arith.subf %315, %305 : vector<8x128xf32>
    %317 = arith.mulf %12, %316 : vector<8x128xf32>
    %318 = arith.addf %305, %317 : vector<8x128xf32>
    %319 = arith.index_cast %c22_i32 : i32 to index
    %c0_132 = arith.constant 0 : index
    %c0_133 = arith.constant 0 : index
    %320 = vector.load %arg8[%319, %c0_132, %c0_133] : memref<28x8x128xf32, #tpu.memory_space<vmem>>, vector<1x8x128xf32>
    %321 = vector.shape_cast %320 : vector<1x8x128xf32> to vector<8x128xf32>
    %322 = vector.shape_cast %318 : vector<8x128xf32> to vector<1x8x128xf32>
    tpu.vector_store %arg8[%319, %c0_132, %c0_133], %322 {strides = array<i32>} : memref<28x8x128xf32, #tpu.memory_space<vmem>>, vector<1x8x128xf32>,
    %c23_i32 = arith.constant 23 : i32
    %cst_134 = arith.constant dense<0.000000e+00> : vector<8x128xf32>
    %323 = tpu.matmul %318, %22, %cst_134 {dimension_numbers = #tpu.dot_dimension_numbers<[1], [0], [0], [1], [0, 0, 1, 1], [], []>} : vector<8x128xf32>, vector<128x128xf32>, vector<8x128xf32> -> vector<8x128xf32>
    %324 = arith.index_cast %c23_i32 : i32 to index
    %c0_135 = arith.constant 0 : index
    %c0_136 = arith.constant 0 : index
    %325 = vector.load %arg9[%324, %c0_135, %c0_136] : memref<28x8x128xf32, #tpu.memory_space<vmem>>, vector<1x8x128xf32>
    %326 = vector.shape_cast %325 : vector<1x8x128xf32> to vector<8x128xf32>
    %327 = arith.addf %323, %326 : vector<8x128xf32>
    %328 = math.tanh %327 : vector<8x128xf32>
    %329 = arith.subf %328, %318 : vector<8x128xf32>
    %330 = arith.mulf %12, %329 : vector<8x128xf32>
    %331 = arith.addf %318, %330 : vector<8x128xf32>
    %332 = arith.index_cast %c23_i32 : i32 to index
    %c0_137 = arith.constant 0 : index
    %c0_138 = arith.constant 0 : index
    %333 = vector.load %arg8[%332, %c0_137, %c0_138] : memref<28x8x128xf32, #tpu.memory_space<vmem>>, vector<1x8x128xf32>
    %334 = vector.shape_cast %333 : vector<1x8x128xf32> to vector<8x128xf32>
    %335 = vector.shape_cast %331 : vector<8x128xf32> to vector<1x8x128xf32>
    tpu.vector_store %arg8[%332, %c0_137, %c0_138], %335 {strides = array<i32>} : memref<28x8x128xf32, #tpu.memory_space<vmem>>, vector<1x8x128xf32>,
    %c24_i32 = arith.constant 24 : i32
    %cst_139 = arith.constant dense<0.000000e+00> : vector<8x128xf32>
    %336 = tpu.matmul %331, %22, %cst_139 {dimension_numbers = #tpu.dot_dimension_numbers<[1], [0], [0], [1], [0, 0, 1, 1], [], []>} : vector<8x128xf32>, vector<128x128xf32>, vector<8x128xf32> -> vector<8x128xf32>
    %337 = arith.index_cast %c24_i32 : i32 to index
    %c0_140 = arith.constant 0 : index
    %c0_141 = arith.constant 0 : index
    %338 = vector.load %arg9[%337, %c0_140, %c0_141] : memref<28x8x128xf32, #tpu.memory_space<vmem>>, vector<1x8x128xf32>
    %339 = vector.shape_cast %338 : vector<1x8x128xf32> to vector<8x128xf32>
    %340 = arith.addf %336, %339 : vector<8x128xf32>
    %341 = math.tanh %340 : vector<8x128xf32>
    %342 = arith.subf %341, %331 : vector<8x128xf32>
    %343 = arith.mulf %12, %342 : vector<8x128xf32>
    %344 = arith.addf %331, %343 : vector<8x128xf32>
    %345 = arith.index_cast %c24_i32 : i32 to index
    %c0_142 = arith.constant 0 : index
    %c0_143 = arith.constant 0 : index
    %346 = vector.load %arg8[%345, %c0_142, %c0_143] : memref<28x8x128xf32, #tpu.memory_space<vmem>>, vector<1x8x128xf32>
    %347 = vector.shape_cast %346 : vector<1x8x128xf32> to vector<8x128xf32>
    %348 = vector.shape_cast %344 : vector<8x128xf32> to vector<1x8x128xf32>
    tpu.vector_store %arg8[%345, %c0_142, %c0_143], %348 {strides = array<i32>} : memref<28x8x128xf32, #tpu.memory_space<vmem>>, vector<1x8x128xf32>,
    %c25_i32 = arith.constant 25 : i32
    %cst_144 = arith.constant dense<0.000000e+00> : vector<8x128xf32>
    %349 = tpu.matmul %344, %22, %cst_144 {dimension_numbers = #tpu.dot_dimension_numbers<[1], [0], [0], [1], [0, 0, 1, 1], [], []>} : vector<8x128xf32>, vector<128x128xf32>, vector<8x128xf32> -> vector<8x128xf32>
    %350 = arith.index_cast %c25_i32 : i32 to index
    %c0_145 = arith.constant 0 : index
    %c0_146 = arith.constant 0 : index
    %351 = vector.load %arg9[%350, %c0_145, %c0_146] : memref<28x8x128xf32, #tpu.memory_space<vmem>>, vector<1x8x128xf32>
    %352 = vector.shape_cast %351 : vector<1x8x128xf32> to vector<8x128xf32>
    %353 = arith.addf %349, %352 : vector<8x128xf32>
    %354 = math.tanh %353 : vector<8x128xf32>
    %355 = arith.subf %354, %344 : vector<8x128xf32>
    %356 = arith.mulf %12, %355 : vector<8x128xf32>
    %357 = arith.addf %344, %356 : vector<8x128xf32>
    %358 = arith.index_cast %c25_i32 : i32 to index
    %c0_147 = arith.constant 0 : index
    %c0_148 = arith.constant 0 : index
    %359 = vector.load %arg8[%358, %c0_147, %c0_148] : memref<28x8x128xf32, #tpu.memory_space<vmem>>, vector<1x8x128xf32>
    %360 = vector.shape_cast %359 : vector<1x8x128xf32> to vector<8x128xf32>
    %361 = vector.shape_cast %357 : vector<8x128xf32> to vector<1x8x128xf32>
    tpu.vector_store %arg8[%358, %c0_147, %c0_148], %361 {strides = array<i32>} : memref<28x8x128xf32, #tpu.memory_space<vmem>>, vector<1x8x128xf32>,
    %c26_i32 = arith.constant 26 : i32
    %cst_149 = arith.constant dense<0.000000e+00> : vector<8x128xf32>
    %362 = tpu.matmul %357, %22, %cst_149 {dimension_numbers = #tpu.dot_dimension_numbers<[1], [0], [0], [1], [0, 0, 1, 1], [], []>} : vector<8x128xf32>, vector<128x128xf32>, vector<8x128xf32> -> vector<8x128xf32>
    %363 = arith.index_cast %c26_i32 : i32 to index
    %c0_150 = arith.constant 0 : index
    %c0_151 = arith.constant 0 : index
    %364 = vector.load %arg9[%363, %c0_150, %c0_151] : memref<28x8x128xf32, #tpu.memory_space<vmem>>, vector<1x8x128xf32>
    %365 = vector.shape_cast %364 : vector<1x8x128xf32> to vector<8x128xf32>
    %366 = arith.addf %362, %365 : vector<8x128xf32>
    %367 = math.tanh %366 : vector<8x128xf32>
    %368 = arith.subf %367, %357 : vector<8x128xf32>
    %369 = arith.mulf %12, %368 : vector<8x128xf32>
    %370 = arith.addf %357, %369 : vector<8x128xf32>
    %371 = arith.index_cast %c26_i32 : i32 to index
    %c0_152 = arith.constant 0 : index
    %c0_153 = arith.constant 0 : index
    %372 = vector.load %arg8[%371, %c0_152, %c0_153] : memref<28x8x128xf32, #tpu.memory_space<vmem>>, vector<1x8x128xf32>
    %373 = vector.shape_cast %372 : vector<1x8x128xf32> to vector<8x128xf32>
    %374 = vector.shape_cast %370 : vector<8x128xf32> to vector<1x8x128xf32>
    tpu.vector_store %arg8[%371, %c0_152, %c0_153], %374 {strides = array<i32>} : memref<28x8x128xf32, #tpu.memory_space<vmem>>, vector<1x8x128xf32>,
    %c27_i32 = arith.constant 27 : i32
    %cst_154 = arith.constant dense<0.000000e+00> : vector<8x128xf32>
    %375 = tpu.matmul %370, %22, %cst_154 {dimension_numbers = #tpu.dot_dimension_numbers<[1], [0], [0], [1], [0, 0, 1, 1], [], []>} : vector<8x128xf32>, vector<128x128xf32>, vector<8x128xf32> -> vector<8x128xf32>
    %376 = arith.index_cast %c27_i32 : i32 to index
    %c0_155 = arith.constant 0 : index
    %c0_156 = arith.constant 0 : index
    %377 = vector.load %arg9[%376, %c0_155, %c0_156] : memref<28x8x128xf32, #tpu.memory_space<vmem>>, vector<1x8x128xf32>
    %378 = vector.shape_cast %377 : vector<1x8x128xf32> to vector<8x128xf32>
    %379 = arith.addf %375, %378 : vector<8x128xf32>
    %380 = math.tanh %379 : vector<8x128xf32>
    %381 = arith.subf %380, %370 : vector<8x128xf32>
    %382 = arith.mulf %12, %381 : vector<8x128xf32>
    %383 = arith.addf %370, %382 : vector<8x128xf32>
    %384 = arith.index_cast %c27_i32 : i32 to index
    %c0_157 = arith.constant 0 : index
    %c0_158 = arith.constant 0 : index
    %385 = vector.load %arg8[%384, %c0_157, %c0_158] : memref<28x8x128xf32, #tpu.memory_space<vmem>>, vector<1x8x128xf32>
    %386 = vector.shape_cast %385 : vector<1x8x128xf32> to vector<8x128xf32>
    %387 = vector.shape_cast %383 : vector<8x128xf32> to vector<1x8x128xf32>
    tpu.vector_store %arg8[%384, %c0_157, %c0_158], %387 {strides = array<i32>} : memref<28x8x128xf32, #tpu.memory_space<vmem>>, vector<1x8x128xf32>,
    %c28_i32 = arith.constant 28 : i32
    return
  }
  func.func @transform_0(%arg0: i32) -> (i32, i32, i32) {
    %c0_i32 = arith.constant 0 : i32
    %c0_i32_0 = arith.constant 0 : i32
    %c0_i32_1 = arith.constant 0 : i32
    return %c0_i32, %arg0, %c0_i32_0 : i32, i32, i32
  }
  func.func @transform_1(%arg0: i32) -> (i32, i32) {
    %c0_i32 = arith.constant 0 : i32
    %c0_i32_0 = arith.constant 0 : i32
    return %arg0, %c0_i32 : i32, i32
  }
  func.func @transform_2(%arg0: i32) -> (i32, i32) {
    %c0_i32 = arith.constant 0 : i32
    %c0_i32_0 = arith.constant 0 : i32
    %c0_i32_1 = arith.constant 0 : i32
    return %c0_i32, %c0_i32_0 : i32, i32
  }
  func.func @transform_3(%arg0: i32) -> (i32, i32) {
    %c0_i32 = arith.constant 0 : i32
    %c0_i32_0 = arith.constant 0 : i32
    %c0_i32_1 = arith.constant 0 : i32
    return %c0_i32, %c0_i32_0 : i32, i32
  }
  func.func @transform_4(%arg0: i32) -> (i32, i32) {
    %c0_i32 = arith.constant 0 : i32
    %c0_i32_0 = arith.constant 0 : i32
    %c0_i32_1 = arith.constant 0 : i32
    return %c0_i32, %c0_i32_0 : i32, i32
  }
  func.func @transform_5(%arg0: i32) -> (i32, i32) {
    %c0_i32 = arith.constant 0 : i32
    %c0_i32_0 = arith.constant 0 : i32
    %c0_i32_1 = arith.constant 0 : i32
    return %c0_i32, %c0_i32_0 : i32, i32
  }
  func.func @transform_6(%arg0: i32) -> i32 {
    %c0_i32 = arith.constant 0 : i32
    %c0_i32_0 = arith.constant 0 : i32
    return %c0_i32 : i32
  }
  func.func @transform_7(%arg0: i32) -> (i32, i32, i32) {
    %c0_i32 = arith.constant 0 : i32
    %c0_i32_0 = arith.constant 0 : i32
    %c0_i32_1 = arith.constant 0 : i32
    return %c0_i32, %arg0, %c0_i32_0 : i32, i32, i32
  }
}

</mosaic_0001>

<llo_original>
// kernel: custom_gru_forward_seq.1
$region0: #{custom_gru_forward_seq.1}
  #allocation0 [shape = 'u32[]', space=smem, size = 0x4, offset = 0x4, fixed_abs, tag = 'smem constant byte address 0x4 - core index']
  #allocation1 [shape = 'u32[144,128]{1,0:T(1,128)}', space=vmem, size = 0x12000, scoped, tag = 'internal scratch']
  #allocation2 [shape = 'f32[28,8,128]{2,1,0:T(8,128)}', space=vmem, size = 0x1c000, scoped, tag = 'scratch operand']
  #allocation3 [shape = 'f32[1]{0:T(128)S(6)}', space=smem, size = 0x200, scoped, tag = 'scoped memory for custom_gru_forward_seq.1']
  %s0 = inlined_call_operand.hbm [shape: f32[28,16,28], index: 0, kind: input, shape index: {}]
  %s1 = inlined_call_operand.vmem [shape: f32[16,128], index: 1, kind: input, shape index: {}]
  %s2 = inlined_call_operand.vmem [shape: f32[128,128], index: 2, kind: input, shape index: {}]
  %s3 = inlined_call_operand.vmem [shape: f32[28,128], index: 3, kind: input, shape index: {}]
  %s4 = inlined_call_operand.vmem [shape: f32[1,128], index: 4, kind: input, shape index: {}]
  %s5 = inlined_call_operand.vmem [shape: f32[1,128], index: 5, kind: input, shape index: {}]
  %s6 = inlined_call_operand.<no memory space> [shape: f32[1], index: 6, kind: input, shape index: {}]
  %s7 = inlined_call_operand.hbm [shape: f32[28,16,128], index: 7, kind: output, shape index: {}]
  %s8 = sld [smem:[#allocation0]]
  $region65: #{custom_gru_forward_seq.1} parent=0
    _
  %s10 = ssub.s32 1, %s8
  %s11 = scalar_select 0, %s10, %s8
  %12 = sst [smem:[#allocation3]] %s6
  $region1: #{custom_gru_forward_seq.1} parent=0
    #allocation4 [shape = 'u8[229376]{0}', space=vmem, size = 0x38000, scoped, tag = 'input window, operand 0']
    #allocation5 [shape = 's32[2]{0}', space=sflag, size = 0x8, scoped, tag = 'scoped memory for custom_gru_forward_seq.1']
    #allocation6 [shape = 's32[2]{0}', space=sflag, size = 0x8, scoped, tag = 'scoped memory for custom_gru_forward_seq.1']
    #allocation7 [shape = 'u8[229376]{0}', space=vmem, size = 0x38000, scoped, tag = 'output window, operand 0']
    %13 = vsyncpa [#allocation5], 0
    %s14 = scalar_lea.sflag [#allocation5], 1
    %15 = vsyncpa %s14, 0
    %16 = vsyncpa [#allocation6], 0
    %s17 = scalar_lea.sflag [#allocation6], 1
    %18 = vsyncpa %s17, 0
    loop: start=0, step=1, limit=4
    $region2: #{custom_gru_forward_seq.1} parent=1 // loop_pre_header
      _
    $region3: #{custom_gru_forward_seq.1} parent=1 // loop_header
      %s20 = sphi 0, %s24
      %p21 = scmp.ge.s32.totalorder %s20, 4
      %s30 = sphi 0, %s32
      %s33 = sphi 0, %s30
      %s34 = sphi 0, %s33
      %s50 = sphi 0, %s34
      %s56 = sphi 0, %s58
      %s59 = sphi 0, %s56
      %s60 = sphi 0, %s59
      %s76 = sphi 0, %s60
      %s80 = sphi 0, %s80
      %s82 = sphi 0, %s80
      %s83 = sphi 0, %s82
      %s97 = sphi 0, %s83
      %s101 = sphi 0, %s101
      %s103 = sphi 0, %s101
      %s104 = sphi 0, %s103
      %s118 = sphi 0, %s104
      %s122 = sphi 0, %s122
      %s124 = sphi 0, %s122
      %s125 = sphi 0, %s124
      %s139 = sphi 0, %s125
      %s143 = sphi 0, %s143
      %s145 = sphi 0, %s143
      %s146 = sphi 0, %s145
      %s160 = sphi 0, %s146
      %s164 = sphi 0, %s164
      %s166 = sphi 0, %s164
      %s167 = sphi 0, %s166
      %s181 = sphi 0, %s167
      %s187 = sphi 0, %s189
      %s190 = sphi 0, %s187
      %s191 = sphi 0, %s190
      %s207 = sphi 0, %s191
    $region4: #{custom_gru_forward_seq.1} parent=1 // loop_header_branch
      %23 = sbr.rel (%p21) target = $region8
    $region5: #{custom_gru_forward_seq.1} parent=1 // loop_body
      %s25 = ssub.s32 %s20, 1
      %s26 = ssub.s32 %s20, 2
      %s27 = sadd.s32 %s20, 1
      %s28 = ssub.s32 %s20, %s27
      %p29 = scmp.eq.s32.totalorder %s28, 0
      %s31 = sadd.s32 %s30, 1
      %s32 = scalar_select %p29, %s30, %s31
      %p35 = pneg %p29
      %p36 = scmp.eq.s32.totalorder %s20, 1
      %p37 = por %p35, %p36
      %p38 = scmp.ne.s32.totalorder %s30, %s33
      %p39 = scmp.eq.s32.totalorder %s20, 0
      %p40 = por %p38, %p39
      %p41 = scmp.ne.s32.totalorder %s30, %s33
      %p42 = scmp.eq.s32.totalorder %s25, 1
      %p43 = por %p41, %p42
      %p44 = scmp.ne.s32.totalorder %s33, %s34
      %p45 = scmp.eq.s32.totalorder %s25, 0
      %p46 = por %p44, %p45
      %p47 = scmp.ne.s32.totalorder %s33, %s34
      %p48 = scmp.eq.s32.totalorder %s26, 1
      %p49 = por %p47, %p48
      %p51 = scmp.ne.s32.totalorder %s34, %s50
      %p52 = scmp.eq.s32.totalorder %s26, 0
      %p53 = por %p51, %p52
      %s54 = ssub.s32 %s20, %s27
      %p55 = scmp.eq.s32.totalorder %s54, 0
      %s57 = sadd.s32 %s56, 1
      %s58 = scalar_select %p55, %s56, %s57
      %p61 = pneg %p55
      %p62 = scmp.eq.s32.totalorder %s20, 1
      %p63 = por %p61, %p62
      %p64 = scmp.ne.s32.totalorder %s56, %s59
      %p65 = scmp.eq.s32.totalorder %s20, 0
      %p66 = por %p64, %p65
      %p67 = scmp.ne.s32.totalorder %s56, %s59
      %p68 = scmp.eq.s32.totalorder %s25, 1
      %p69 = por %p67, %p68
      %p70 = scmp.ne.s32.totalorder %s59, %s60
      %p71 = scmp.eq.s32.totalorder %s25, 0
      %p72 = por %p70, %p71
      %p73 = scmp.ne.s32.totalorder %s59, %s60
      %p74 = scmp.eq.s32.totalorder %s26, 1
      %p75 = por %p73, %p74
      %p77 = scmp.ne.s32.totalorder %s60, %s76
      %p78 = scmp.eq.s32.totalorder %s26, 0
      %p79 = por %p77, %p78
      %s81 = sadd.s32 %s80, 1
      %p84 = scmp.eq.s32.totalorder %s20, 1
      %p85 = scmp.ne.s32.totalorder %s80, %s82
      %p86 = scmp.eq.s32.totalorder %s20, 0
      %p87 = por %p85, %p86
      %p88 = scmp.ne.s32.totalorder %s80, %s82
      %p89 = scmp.eq.s32.totalorder %s25, 1
      %p90 = por %p88, %p89
      %p91 = scmp.ne.s32.totalorder %s82, %s83
      %p92 = scmp.eq.s32.totalorder %s25, 0
      %p93 = por %p91, %p92
      %p94 = scmp.ne.s32.totalorder %s82, %s83
      %p95 = scmp.eq.s32.totalorder %s26, 1
      %p96 = por %p94, %p95
      %p98 = scmp.ne.s32.totalorder %s83, %s97
      %p99 = scmp.eq.s32.totalorder %s26, 0
      %p100 = por %p98, %p99
      %s102 = sadd.s32 %s101, 1
      %p105 = scmp.eq.s32.totalorder %s20, 1
      %p106 = scmp.ne.s32.totalorder %s101, %s103
      %p107 = scmp.eq.s32.totalorder %s20, 0
      %p108 = por %p106, %p107
      %p109 = scmp.ne.s32.totalorder %s101, %s103
      %p110 = scmp.eq.s32.totalorder %s25, 1
      %p111 = por %p109, %p110
      %p112 = scmp.ne.s32.totalorder %s103, %s104
      %p113 = scmp.eq.s32.totalorder %s25, 0
      %p114 = por %p112, %p113
      %p115 = scmp.ne.s32.totalorder %s103, %s104
      %p116 = scmp.eq.s32.totalorder %s26, 1
      %p117 = por %p115, %p116
      %p119 = scmp.ne.s32.totalorder %s104, %s118
      %p120 = scmp.eq.s32.totalorder %s26, 0
      %p121 = por %p119, %p120
      %s123 = sadd.s32 %s122, 1
      %p126 = scmp.eq.s32.totalorder %s20, 1
      %p127 = scmp.ne.s32.totalorder %s122, %s124
      %p128 = scmp.eq.s32.totalorder %s20, 0
      %p129 = por %p127, %p128
      %p130 = scmp.ne.s32.totalorder %s122, %s124
      %p131 = scmp.eq.s32.totalorder %s25, 1
      %p132 = por %p130, %p131
      %p133 = scmp.ne.s32.totalorder %s124, %s125
      %p134 = scmp.eq.s32.totalorder %s25, 0
      %p135 = por %p133, %p134
      %p136 = scmp.ne.s32.totalorder %s124, %s125
      %p137 = scmp.eq.s32.totalorder %s26, 1
      %p138 = por %p136, %p137
      %p140 = scmp.ne.s32.totalorder %s125, %s139
      %p141 = scmp.eq.s32.totalorder %s26, 0
      %p142 = por %p140, %p141
      %s144 = sadd.s32 %s143, 1
      %p147 = scmp.eq.s32.totalorder %s20, 1
      %p148 = scmp.ne.s32.totalorder %s143, %s145
      %p149 = scmp.eq.s32.totalorder %s20, 0
      %p150 = por %p148, %p149
      %p151 = scmp.ne.s32.totalorder %s143, %s145
      %p152 = scmp.eq.s32.totalorder %s25, 1
      %p153 = por %p151, %p152
      %p154 = scmp.ne.s32.totalorder %s145, %s146
      %p155 = scmp.eq.s32.totalorder %s25, 0
      %p156 = por %p154, %p155
      %p157 = scmp.ne.s32.totalorder %s145, %s146
      %p158 = scmp.eq.s32.totalorder %s26, 1
      %p159 = por %p157, %p158
      %p161 = scmp.ne.s32.totalorder %s146, %s160
      %p162 = scmp.eq.s32.totalorder %s26, 0
      %p163 = por %p161, %p162
      %s165 = sadd.s32 %s164, 1
      %p168 = scmp.eq.s32.totalorder %s20, 1
      %p169 = scmp.ne.s32.totalorder %s164, %s166
      %p170 = scmp.eq.s32.totalorder %s20, 0
      %p171 = por %p169, %p170
      %p172 = scmp.ne.s32.totalorder %s164, %s166
      %p173 = scmp.eq.s32.totalorder %s25, 1
      %p174 = por %p172, %p173
      %p175 = scmp.ne.s32.totalorder %s166, %s167
      %p176 = scmp.eq.s32.totalorder %s25, 0
      %p177 = por %p175, %p176
      %p178 = scmp.ne.s32.totalorder %s166, %s167
      %p179 = scmp.eq.s32.totalorder %s26, 1
      %p180 = por %p178, %p179
      %p182 = scmp.ne.s32.totalorder %s167, %s181
      %p183 = scmp.eq.s32.totalorder %s26, 0
      %p184 = por %p182, %p183
      %s185 = ssub.s32 %s20, %s27
      %p186 = scmp.eq.s32.totalorder %s185, 0
      %s188 = sadd.s32 %s187, 1
      %s189 = scalar_select %p186, %s187, %s188
      %p192 = pneg %p186
      %p193 = scmp.eq.s32.totalorder %s20, 1
      %p194 = por %p192, %p193
      %p195 = scmp.ne.s32.totalorder %s187, %s190
      %p196 = scmp.eq.s32.totalorder %s20, 0
      %p197 = por %p195, %p196
      %p198 = scmp.ne.s32.totalorder %s187, %s190
      %p199 = scmp.eq.s32.totalorder %s25, 1
      %p200 = por %p198, %p199
      %p201 = scmp.ne.s32.totalorder %s190, %s191
      %p202 = scmp.eq.s32.totalorder %s25, 0
      %p203 = por %p201, %p202
      %p204 = scmp.ne.s32.totalorder %s190, %s191
      %p205 = scmp.eq.s32.totalorder %s26, 1
      %p206 = por %p204, %p205
      %p208 = scmp.ne.s32.totalorder %s191, %s207
      %p209 = scmp.eq.s32.totalorder %s26, 0
      %p210 = por %p208, %p209
      %p211 = scmp.le.s32.totalorder 1, %s20
      %p212 = scmp.lt.s32.totalorder %s20, 3
      %p213 = pnand %p211, %p212
      %p214 = pneg %p213
      // Predicated region
      $region9: #{custom_gru_forward_seq.1} parent=5 // pred_check
        _
      $region10: #{custom_gru_forward_seq.1} parent=5 // pred_check_branch
        %216 = sbr.rel (%p213) target = $region12
      $region11: #{custom_gru_forward_seq.1} parent=5 // pred_region
        %s217 = ssub.s32 %s20, 1
        // Predicated region
        $region13: #{custom_gru_forward_seq.1} parent=11 // pred_check
          %p218 = pneg %p93
        $region14: #{custom_gru_forward_seq.1} parent=11 // pred_check_branch
          %220 = sbr.rel (%p218) target = $region16
        $region15: #{custom_gru_forward_seq.1} parent=11 // pred_region
          _
        $region16: #{custom_gru_forward_seq.1} parent=11 // pred_fallthru
          _
        // Predicated region
        $region17: #{custom_gru_forward_seq.1} parent=11 // pred_check
          %p221 = pneg %p114
        $region18: #{custom_gru_forward_seq.1} parent=11 // pred_check_branch
          %223 = sbr.rel (%p221) target = $region20
        $region19: #{custom_gru_forward_seq.1} parent=11 // pred_region
          _
        $region20: #{custom_gru_forward_seq.1} parent=11 // pred_fallthru
          _
        // Predicated region
        $region21: #{custom_gru_forward_seq.1} parent=11 // pred_check
          %p224 = pneg %p135
        $region22: #{custom_gru_forward_seq.1} parent=11 // pred_check_branch
          %226 = sbr.rel (%p224) target = $region24
        $region23: #{custom_gru_forward_seq.1} parent=11 // pred_region
          _
        $region24: #{custom_gru_forward_seq.1} parent=11 // pred_fallthru
          _
        // Predicated region
        $region25: #{custom_gru_forward_seq.1} parent=11 // pred_check
          %p227 = pneg %p156
        $region26: #{custom_gru_forward_seq.1} parent=11 // pred_check_branch
          %229 = sbr.rel (%p227) target = $region28
        $region27: #{custom_gru_forward_seq.1} parent=11 // pred_region
          _
        $region28: #{custom_gru_forward_seq.1} parent=11 // pred_fallthru
          _
        // Predicated region
        $region29: #{custom_gru_forward_seq.1} parent=11 // pred_check
          %p230 = pneg %p177
        $region30: #{custom_gru_forward_seq.1} parent=11 // pred_check_branch
          %232 = sbr.rel (%p230) target = $region32
        $region31: #{custom_gru_forward_seq.1} parent=11 // pred_region
          _
        $region32: #{custom_gru_forward_seq.1} parent=11 // pred_fallthru
          _
      $region12: #{custom_gru_forward_seq.1} parent=5 // pred_fallthru
        _
      %p233 = scmp.lt.s32.totalorder %s20, 2
      // Predicated region
      $region33: #{custom_gru_forward_seq.1} parent=5 // pred_check
        %p234 = pneg %p233
      $region34: #{custom_gru_forward_seq.1} parent=5 // pred_check_branch
        %236 = sbr.rel (%p234) target = $region36
      $region35: #{custom_gru_forward_seq.1} parent=5 // pred_region
        // Predicated region
        $region37: #{custom_gru_forward_seq.1} parent=35 // pred_check
          %p237 = pneg %p40
        $region38: #{custom_gru_forward_seq.1} parent=35 // pred_check_branch
          %239 = sbr.rel (%p237) target = $region40
        $region39: #{custom_gru_forward_seq.1} parent=35 // pred_region
          %s240 = sand.u32 %s30, 1
          %s241 = scalar_lea.sflag [#allocation5], %s240
          %s242 = sand.u32 %s30, 1
          %s243 = smul.addr %s242, 224
          %s244 = scalar_lea.vmem [#allocation4], %s243
          %s246 = ssub.s32 3584, 3584
          %247 = vsyncadd %s241, %s246
          %s248 = smul.addr %s20, 128
          %s249 = scalar_lea.hbm %s0, %s248
          %s250 = sshll.u32 %s244, 4
          %s251 = int_to_ptr.vmem [resolvable:$true] %s250
          %256 = dma.hbm_to_vmem [thread:$0]  %s249, 3584, %s251, %s241, 256, 128, 8
        $region40: #{custom_gru_forward_seq.1} parent=35 // pred_fallthru
          _
        // Predicated region
        $region41: #{custom_gru_forward_seq.1} parent=35 // pred_check
          %p257 = pneg %p66
        $region42: #{custom_gru_forward_seq.1} parent=35 // pred_check_branch
          %259 = sbr.rel (%p257) target = $region44
        $region43: #{custom_gru_forward_seq.1} parent=35 // pred_region
          %p260 = scmp.lt.s32.totalorder %s20, 1
          %s261 = scalar_select %p260, %s20, 1
          %s262 = smul.addr %s261, 8
          %s263 = scalar_lea.vmem %s1, %s262
        $region44: #{custom_gru_forward_seq.1} parent=35 // pred_fallthru
          _
      $region36: #{custom_gru_forward_seq.1} parent=5 // pred_fallthru
        _
      %p264 = scmp.le.s32.totalorder 1, %s20
      %p265 = scmp.lt.s32.totalorder %s20, 3
      %p266 = pnand %p264, %p265
      %p267 = pneg %p266
      // Predicated region
      $region45: #{custom_gru_forward_seq.1} parent=5 // pred_check
        _
      $region46: #{custom_gru_forward_seq.1} parent=5 // pred_check_branch
        %269 = sbr.rel (%p266) target = $region48
      $region47: #{custom_gru_forward_seq.1} parent=5 // pred_region
        %s270 = ssub.s32 %s20, 1
        %s271 = sand.u32 %s33, 1
        %s272 = scalar_lea.sflag [#allocation5], %s271
        %s273 = sand.u32 %s33, 1
        %s274 = smul.addr %s273, 224
        %s275 = scalar_lea.vmem [#allocation4], %s274
        // Predicated region
        $region49: #{custom_gru_forward_seq.1} parent=47 // pred_check
          %p276 = pneg %p46
        $region50: #{custom_gru_forward_seq.1} parent=47 // pred_check_branch
          %278 = sbr.rel (%p276) target = $region52
        $region51: #{custom_gru_forward_seq.1} parent=47 // pred_region
          %279 = dma.done %s272, 3584
        $region52: #{custom_gru_forward_seq.1} parent=47 // pred_fallthru
          _
        %s280 = sand.u32 %s33, 1
        %s281 = scalar_lea.sflag [#allocation5], %s280
        %s282 = sand.u32 %s33, 1
        %s283 = smul.addr %s282, 224
        %s284 = scalar_lea.vmem [#allocation4], %s283
        %p285 = pneg %p46
        %p286 = pneg %p43
        %p287 = scmp.lt.s32.totalorder %s25, 1
        %s288 = scalar_select %p287, %s25, 1
        %s289 = smul.addr %s288, 8
        %s290 = scalar_lea.vmem %s1, %s289
        %p291 = pneg %p72
        %p292 = pneg %p69
        %p293 = pneg %p93
        %p294 = pneg %p90
        %p295 = pneg %p114
        %p296 = pneg %p111
        %p297 = pneg %p135
        %p298 = pneg %p132
        %p299 = pneg %p156
        %p300 = pneg %p153
        %p301 = pneg %p177
        %p302 = pneg %p174
        %p303 = pneg %p203
        %p304 = pneg %p200
        %s305 = sand.u32 %s190, 1
        %s306 = scalar_lea.sflag [#allocation6], %s305
        %s307 = sand.u32 %s190, 1
        %s308 = smul.addr %s307, 224
        %s309 = scalar_lea.vmem [#allocation7], %s308
        %p310 = scmp.lt.s32.totalorder %s25, 1
        %s311 = scalar_select %p310, %s25, 1
        %s312 = smul.addr %s311, 8
        %s313 = scalar_lea.vmem %s1, %s312
        %s314 = sld [smem:[#allocation3]]
        %s315 = smax.f32 %s314, 0.0
        %s316 = smin.f32 %s315, 1.0
        %v317 = vld [vmem:[%s5] sm:$0x1]
        %v318 = vxor.u32 %v317, 2147483648
        %v319 = vmul.f32 %v318, 1.442695
        %v320 = vpow.pop %v319
        %v321 = vadd.f32 %v320, 1.0
        %v322 = vrcp.pop %v321
        %v323 = vmul.f32 1.0, %v322
        %v324 = vstv %s316
        %v325 = vmul.f32 %v324, %v323
        %v327 = vlaneseq
        %v328 = vshrl.u32 %v327, 7
        %v329 = vsub.s32 0, %v328
        %v330 = vrot.slane %v325, %v329
        %v332 = vld [vmem:[%s275] sm:$0xff]
        %v333 = vld [vmem:[%s275 + $0x8] sm:$0xff]
        %v334 = vld [vmem:[%s275 + $0x10] sm:$0xff]
        %v335 = vld [vmem:[%s275 + $0x18] sm:$0xff]
        %v336 = vld [vmem:[%s275 + $0x20] sm:$0xff]
        %v337 = vld [vmem:[%s275 + $0x28] sm:$0xff]
        %v338 = vld [vmem:[%s275 + $0x30] sm:$0xff]
        %v339 = vld [vmem:[%s275 + $0x38] sm:$0xff]
        %v340 = vld [vmem:[%s275 + $0x40] sm:$0xff]
        %v341 = vld [vmem:[%s275 + $0x48] sm:$0xff]
        %v342 = vld [vmem:[%s275 + $0x50] sm:$0xff]
        %v343 = vld [vmem:[%s275 + $0x58] sm:$0xff]
        %v344 = vld [vmem:[%s275 + $0x60] sm:$0xff]
        %v345 = vld [vmem:[%s275 + $0x68] sm:$0xff]
        %v346 = vld [vmem:[%s275 + $0x70] sm:$0xff]
        %v347 = vld [vmem:[%s275 + $0x78] sm:$0xff]
        %v348 = vld [vmem:[%s275 + $0x80] sm:$0xff]
        %v349 = vld [vmem:[%s275 + $0x88] sm:$0xff]
        %v350 = vld [vmem:[%s275 + $0x90] sm:$0xff]
        %v351 = vld [vmem:[%s275 + $0x98] sm:$0xff]
        %v352 = vld [vmem:[%s275 + $0xa0] sm:$0xff]
        %v353 = vld [vmem:[%s275 + $0xa8] sm:$0xff]
        %v354 = vld [vmem:[%s275 + $0xb0] sm:$0xff]
        %v355 = vld [vmem:[%s275 + $0xb8] sm:$0xff]
        %v356 = vld [vmem:[%s275 + $0xc0] sm:$0xff]
        %v357 = vld [vmem:[%s275 + $0xc8] sm:$0xff]
        %v358 = vld [vmem:[%s275 + $0xd0] sm:$0xff]
        %v359 = vld [vmem:[%s275 + $0xd8] sm:$0xff]
        %v360 = vld [vmem:[%s3] sm:$0xff]
        %v361 = vld [vmem:[%s3 + $0x8] sm:$0xff]
        %v362 = vld [vmem:[%s3 + $0x10] sm:$0xff]
        %v363 = vld [vmem:[%s3 + $0x18] sm:$0xf]
        %v364 = vld [vmem:[%s4] sm:$0x1]
        %v366 = vlaneseq
        %v367 = vshrl.u32 %v366, 7
        %v368 = vsub.s32 0, %v367
        %v369 = vrot.slane %v364, %v368
        %vm371 = vcmask 228352
        %v373 = vsel %vm371, %v332, 0
        %v376 = vsel %vm371, %v333, 0
        %v379 = vsel %vm371, %v334, 0
        %v382 = vsel %vm371, %v335, 0
        %v385 = vsel %vm371, %v336, 0
        %v388 = vsel %vm371, %v337, 0
        %v391 = vsel %vm371, %v338, 0
        %v394 = vsel %vm371, %v339, 0
        %v397 = vsel %vm371, %v340, 0
        %v400 = vsel %vm371, %v341, 0
        %v403 = vsel %vm371, %v342, 0
        %v406 = vsel %vm371, %v343, 0
        %v409 = vsel %vm371, %v344, 0
        %v412 = vsel %vm371, %v345, 0
        %v415 = vsel %vm371, %v346, 0
        %v418 = vsel %vm371, %v347, 0
        %v421 = vsel %vm371, %v348, 0
        %v424 = vsel %vm371, %v349, 0
        %v427 = vsel %vm371, %v350, 0
        %v430 = vsel %vm371, %v351, 0
        %v433 = vsel %vm371, %v352, 0
        %v436 = vsel %vm371, %v353, 0
        %v439 = vsel %vm371, %v354, 0
        %v442 = vsel %vm371, %v355, 0
        %v445 = vsel %vm371, %v356, 0
        %v448 = vsel %vm371, %v357, 0
        %v451 = vsel %vm371, %v358, 0
        %v454 = vsel %vm371, %v359, 0
        %vm456 = vcmask 1043456
        %v458 = vsel %vm456, %v363, 0
        %460 = vmatprep.subr.mxu0 0.0
        %461 = vmatpush1.msra.mxu0 %v360
        %462 = vmatprep.subr.mxu0 0.0
        %463 = vmatpush1.msra.mxu0 %v361
        %464 = vmatprep.subr.mxu0 0.0
        %465 = vmatpush1.msra.mxu0 %v362
        %466 = vmatprep.subr.mxu0 0.0
        %467 = vmatpush1.msra.mxu0 %v458
        %468 = vmatprep.subr.mxu0 0.0
        %469 = vmatpush1.msra.mxu0 0.0
        %470 = vmatprep.subr.mxu0 0.0
        %471 = vmatpush1.msra.mxu0 0.0
        %472 = vmatprep.subr.mxu0 0.0
        %473 = vmatpush1.msra.mxu0 0.0
        %474 = vmatprep.subr.mxu0 0.0
        %475 = vmatpush1.msra.mxu0 0.0
        %476 = vmatprep.subr.mxu0 0.0
        %477 = vmatpush1.msra.mxu0 0.0
        %478 = vmatprep.subr.mxu0 0.0
        %479 = vmatpush1.msra.mxu0 0.0
        %480 = vmatprep.subr.mxu0 0.0
        %481 = vmatpush1.msra.mxu0 0.0
        %482 = vmatprep.subr.mxu0 0.0
        %483 = vmatpush1.msra.mxu0 0.0
        %484 = vmatprep.subr.mxu0 0.0
        %485 = vmatpush1.msra.mxu0 0.0
        %486 = vmatprep.subr.mxu0 0.0
        %487 = vmatpush1.msra.mxu0 0.0
        %488 = vmatprep.subr.mxu0 0.0
        %489 = vmatpush1.msra.mxu0 0.0
        %490 = vmatprep.subr.mxu0 0.0
        %491 = vmatpush1.msra.mxu0 0.0
        %492 = vmatprep.subr.mxu0 0.0
        %493 = vmatpush1.msra.mxu0 0.0
        %494 = vmatprep.subr.mxu0 0.0
        %495 = vmatpush1.msra.mxu0 0.0
        %496 = vmatprep.subr.mxu0 0.0
        %497 = vmatpush1.msra.mxu0 0.0
        %498 = vmatprep.subr.mxu0 0.0
        %499 = vmatpush1.msra.mxu0 0.0
        %500 = vmatprep.subr.mxu0 0.0
        %501 = vmatpush1.msra.mxu0 0.0
        %502 = vmatprep.subr.mxu0 0.0
        %503 = vmatpush1.msra.mxu0 0.0
        %504 = vmatprep.subr.mxu0 0.0
        %505 = vmatpush1.msra.mxu0 0.0
        %506 = vmatprep.subr.mxu0 0.0
        %507 = vmatpush1.msra.mxu0 0.0
        %508 = vmatprep.subr.mxu0 0.0
        %509 = vmatpush1.msra.mxu0 0.0
        %510 = vmatprep.subr.mxu0 0.0
        %511 = vmatpush1.msra.mxu0 0.0
        %512 = vmatprep.subr.mxu0 0.0
        %513 = vmatpush1.msra.mxu0 0.0
        %514 = vmatprep.subr.mxu0 0.0
        %515 = vmatpush1.msra.mxu0 0.0
        %516 = vmatprep.subr.mxu0 0.0
        %517 = vmatpush1.msra.mxu0 0.0
        %518 = vmatprep.subr.mxu0 0.0
        %519 = vmatpush1.msra.mxu0 0.0
        %520 = vmatprep.subr.mxu0 0.0
        %521 = vmatpush1.msra.mxu0 0.0
        %522 = vmatprep.subr.mxu0 0.0
        %523 = vmatpush1.msra.mxu0 0.0
        %524 = vmatprep.mubr.f32.mxu0 0.0
        %525 = vmatmul.mubr.f32.gmra.mrb[0].mxu0 %v373
        %v526 = vpop.f32.mrb[0].mxu0
        %v527 = vadd.f32 %v369, %v526
        %v528 = vpop.f32.mrb[0].mxu0
        %529 = vmatprep.mubr.f32.mxu0 0.0
        %530 = vmatmul.mubr.f32.gmra.mrb[0].mxu0 %v376
        %v531 = vpop.f32.mrb[0].mxu0
        %v532 = vadd.f32 %v369, %v531
        %v533 = vpop.f32.mrb[0].mxu0
        %534 = vmatprep.mubr.f32.mxu0 0.0
        %535 = vmatmul.mubr.f32.gmra.mrb[0].mxu0 %v379
        %v536 = vpop.f32.mrb[0].mxu0
        %v537 = vadd.f32 %v369, %v536
        %v538 = vpop.f32.mrb[0].mxu0
        %539 = vmatprep.mubr.f32.mxu0 0.0
        %540 = vmatmul.mubr.f32.gmra.mrb[0].mxu0 %v382
        %v541 = vpop.f32.mrb[0].mxu0
        %v542 = vadd.f32 %v369, %v541
        %v543 = vpop.f32.mrb[0].mxu0
        %544 = vmatprep.mubr.f32.mxu0 0.0
        %545 = vmatmul.mubr.f32.gmra.mrb[0].mxu0 %v385
        %v546 = vpop.f32.mrb[0].mxu0
        %v547 = vadd.f32 %v369, %v546
        %v548 = vpop.f32.mrb[0].mxu0
        %549 = vmatprep.mubr.f32.mxu0 0.0
        %550 = vmatmul.mubr.f32.gmra.mrb[0].mxu0 %v388
        %v551 = vpop.f32.mrb[0].mxu0
        %v552 = vadd.f32 %v369, %v551
        %v553 = vpop.f32.mrb[0].mxu0
        %554 = vmatprep.mubr.f32.mxu0 0.0
        %555 = vmatmul.mubr.f32.gmra.mrb[0].mxu0 %v391
        %v556 = vpop.f32.mrb[0].mxu0
        %v557 = vadd.f32 %v369, %v556
        %v558 = vpop.f32.mrb[0].mxu0
        %559 = vmatprep.mubr.f32.mxu0 0.0
        %560 = vmatmul.mubr.f32.gmra.mrb[0].mxu0 %v394
        %v561 = vpop.f32.mrb[0].mxu0
        %v562 = vadd.f32 %v369, %v561
        %v563 = vpop.f32.mrb[0].mxu0
        %564 = vmatprep.mubr.f32.mxu0 0.0
        %565 = vmatmul.mubr.f32.gmra.mrb[0].mxu0 %v397
        %v566 = vpop.f32.mrb[0].mxu0
        %v567 = vadd.f32 %v369, %v566
        %v568 = vpop.f32.mrb[0].mxu0
        %569 = vmatprep.mubr.f32.mxu0 0.0
        %570 = vmatmul.mubr.f32.gmra.mrb[0].mxu0 %v400
        %v571 = vpop.f32.mrb[0].mxu0
        %v572 = vadd.f32 %v369, %v571
        %v573 = vpop.f32.mrb[0].mxu0
        %574 = vmatprep.mubr.f32.mxu0 0.0
        %575 = vmatmul.mubr.f32.gmra.mrb[0].mxu0 %v403
        %v576 = vpop.f32.mrb[0].mxu0
        %v577 = vadd.f32 %v369, %v576
        %v578 = vpop.f32.mrb[0].mxu0
        %579 = vmatprep.mubr.f32.mxu0 0.0
        %580 = vmatmul.mubr.f32.gmra.mrb[0].mxu0 %v406
        %v581 = vpop.f32.mrb[0].mxu0
        %v582 = vadd.f32 %v369, %v581
        %v583 = vpop.f32.mrb[0].mxu0
        %584 = vmatprep.mubr.f32.mxu0 0.0
        %585 = vmatmul.mubr.f32.gmra.mrb[0].mxu0 %v409
        %v586 = vpop.f32.mrb[0].mxu0
        %v587 = vadd.f32 %v369, %v586
        %v588 = vpop.f32.mrb[0].mxu0
        %589 = vmatprep.mubr.f32.mxu0 0.0
        %590 = vmatmul.mubr.f32.gmra.mrb[0].mxu0 %v412
        %v591 = vpop.f32.mrb[0].mxu0
        %v592 = vadd.f32 %v369, %v591
        %v593 = vpop.f32.mrb[0].mxu0
        %594 = vmatprep.mubr.f32.mxu0 0.0
        %595 = vmatmul.mubr.f32.gmra.mrb[0].mxu0 %v415
        %v596 = vpop.f32.mrb[0].mxu0
        %v597 = vadd.f32 %v369, %v596
        %v598 = vpop.f32.mrb[0].mxu0
        %599 = vmatprep.mubr.f32.mxu0 0.0
        %600 = vmatmul.mubr.f32.gmra.mrb[0].mxu0 %v418
        %v601 = vpop.f32.mrb[0].mxu0
        %v602 = vadd.f32 %v369, %v601
        %v603 = vpop.f32.mrb[0].mxu0
        %604 = vmatprep.mubr.f32.mxu0 0.0
        %605 = vmatmul.mubr.f32.gmra.mrb[0].mxu0 %v421
        %v606 = vpop.f32.mrb[0].mxu0
        %v607 = vadd.f32 %v369, %v606
        %v608 = vpop.f32.mrb[0].mxu0
        %609 = vmatprep.mubr.f32.mxu0 0.0
        %610 = vmatmul.mubr.f32.gmra.mrb[0].mxu0 %v424
        %v611 = vpop.f32.mrb[0].mxu0
        %v612 = vadd.f32 %v369, %v611
        %v613 = vpop.f32.mrb[0].mxu0
        %614 = vmatprep.mubr.f32.mxu0 0.0
        %615 = vmatmul.mubr.f32.gmra.mrb[0].mxu0 %v427
        %v616 = vpop.f32.mrb[0].mxu0
        %v617 = vadd.f32 %v369, %v616
        %v618 = vpop.f32.mrb[0].mxu0
        %619 = vmatprep.mubr.f32.mxu0 0.0
        %620 = vmatmul.mubr.f32.gmra.mrb[0].mxu0 %v430
        %v621 = vpop.f32.mrb[0].mxu0
        %v622 = vadd.f32 %v369, %v621
        %v623 = vpop.f32.mrb[0].mxu0
        %624 = vmatprep.mubr.f32.mxu0 0.0
        %625 = vmatmul.mubr.f32.gmra.mrb[0].mxu0 %v433
        %v626 = vpop.f32.mrb[0].mxu0
        %v627 = vadd.f32 %v369, %v626
        %v628 = vpop.f32.mrb[0].mxu0
        %629 = vmatprep.mubr.f32.mxu0 0.0
        %630 = vmatmul.mubr.f32.gmra.mrb[0].mxu0 %v436
        %v631 = vpop.f32.mrb[0].mxu0
        %v632 = vadd.f32 %v369, %v631
        %v633 = vpop.f32.mrb[0].mxu0
        %634 = vmatprep.mubr.f32.mxu0 0.0
        %635 = vmatmul.mubr.f32.gmra.mrb[0].mxu0 %v439
        %v636 = vpop.f32.mrb[0].mxu0
        %v637 = vadd.f32 %v369, %v636
        %v638 = vpop.f32.mrb[0].mxu0
        %639 = vmatprep.mubr.f32.mxu0 0.0
        %640 = vmatmul.mubr.f32.gmra.mrb[0].mxu0 %v442
        %v641 = vpop.f32.mrb[0].mxu0
        %v642 = vadd.f32 %v369, %v641
        %v643 = vpop.f32.mrb[0].mxu0
        %644 = vmatprep.mubr.f32.mxu0 0.0
        %645 = vmatmul.mubr.f32.gmra.mrb[0].mxu0 %v445
        %v646 = vpop.f32.mrb[0].mxu0
        %v647 = vadd.f32 %v369, %v646
        %v648 = vpop.f32.mrb[0].mxu0
        %649 = vmatprep.mubr.f32.mxu0 0.0
        %650 = vmatmul.mubr.f32.gmra.mrb[0].mxu0 %v448
        %v651 = vpop.f32.mrb[0].mxu0
        %v652 = vadd.f32 %v369, %v651
        %v653 = vpop.f32.mrb[0].mxu0
        %654 = vmatprep.mubr.f32.mxu0 0.0
        %655 = vmatmul.mubr.f32.gmra.mrb[0].mxu0 %v451
        %v656 = vpop.f32.mrb[0].mxu0
        %v657 = vadd.f32 %v369, %v656
        %v658 = vpop.f32.mrb[0].mxu0
        %659 = vmatprep.mubr.f32.mxu0 0.0
        %660 = vmatmul.mubr.f32.gmra.mrb[0].mxu0 %v454
        %v661 = vpop.f32.mrb[0].mxu0
        %v662 = vadd.f32 %v369, %v661
        %v663 = vpop.f32.mrb[0].mxu0
        %664 = vdwg.mxu0
        %665 = vst [vmem:[#allocation2] sm:$0xff] %v527
        %666 = vst [vmem:[#allocation2 + $0x8] sm:$0xff] %v532
        %667 = vst [vmem:[#allocation2 + $0x10] sm:$0xff] %v537
        %668 = vst [vmem:[#allocation2 + $0x18] sm:$0xff] %v542
        %669 = vst [vmem:[#allocation2 + $0x20] sm:$0xff] %v547
        %670 = vst [vmem:[#allocation2 + $0x28] sm:$0xff] %v552
        %671 = vst [vmem:[#allocation2 + $0x30] sm:$0xff] %v557
        %672 = vst [vmem:[#allocation2 + $0x38] sm:$0xff] %v562
        %673 = vst [vmem:[#allocation2 + $0x40] sm:$0xff] %v567
        %674 = vst [vmem:[#allocation2 + $0x48] sm:$0xff] %v572
        %675 = vst [vmem:[#allocation2 + $0x50] sm:$0xff] %v577
        %676 = vst [vmem:[#allocation2 + $0x58] sm:$0xff] %v582
        %677 = vst [vmem:[#allocation2 + $0x60] sm:$0xff] %v587
        %678 = vst [vmem:[#allocation2 + $0x68] sm:$0xff] %v592
        %679 = vst [vmem:[#allocation2 + $0x70] sm:$0xff] %v597
        %680 = vst [vmem:[#allocation2 + $0x78] sm:$0xff] %v602
        %681 = vst [vmem:[#allocation2 + $0x80] sm:$0xff] %v607
        %682 = vst [vmem:[#allocation2 + $0x88] sm:$0xff] %v612
        %683 = vst [vmem:[#allocation2 + $0x90] sm:$0xff] %v617
        %684 = vst [vmem:[#allocation2 + $0x98] sm:$0xff] %v622
        %685 = vst [vmem:[#allocation2 + $0xa0] sm:$0xff] %v627
        %686 = vst [vmem:[#allocation2 + $0xa8] sm:$0xff] %v632
        %687 = vst [vmem:[#allocation2 + $0xb0] sm:$0xff] %v637
        %688 = vst [vmem:[#allocation2 + $0xb8] sm:$0xff] %v642
        %689 = vst [vmem:[#allocation2 + $0xc0] sm:$0xff] %v647
        %690 = vst [vmem:[#allocation2 + $0xc8] sm:$0xff] %v652
        %691 = vst [vmem:[#allocation2 + $0xd0] sm:$0xff] %v657
        %692 = vst [vmem:[#allocation2 + $0xd8] sm:$0xff] %v662
        %v693 = vld [vmem:[%s2] sm:$0xff]
        %v694 = vld [vmem:[%s2 + $0x8] sm:$0xff]
        %v695 = vld [vmem:[%s2 + $0x10] sm:$0xff]
        %v696 = vld [vmem:[%s2 + $0x18] sm:$0xff]
        %v697 = vld [vmem:[%s2 + $0x20] sm:$0xff]
        %v698 = vld [vmem:[%s2 + $0x28] sm:$0xff]
        %v699 = vld [vmem:[%s2 + $0x30] sm:$0xff]
        %v700 = vld [vmem:[%s2 + $0x38] sm:$0xff]
        %v701 = vld [vmem:[%s2 + $0x40] sm:$0xff]
        %v702 = vld [vmem:[%s2 + $0x48] sm:$0xff]
        %v703 = vld [vmem:[%s2 + $0x50] sm:$0xff]
        %v704 = vld [vmem:[%s2 + $0x58] sm:$0xff]
        %v705 = vld [vmem:[%s2 + $0x60] sm:$0xff]
        %v706 = vld [vmem:[%s2 + $0x68] sm:$0xff]
        %v707 = vld [vmem:[%s2 + $0x70] sm:$0xff]
        %v708 = vld [vmem:[%s2 + $0x78] sm:$0xff]
        %v709 = vld [vmem:[%s313] sm:$0xff]
        %v710 = vld [vmem:[#allocation2] sm:$0xff]
        %711 = vmatprep.subr.mxu0 0.0
        %712 = vmatpush1.msra.mxu0 %v693
        %713 = vmatprep.subr.mxu0 0.0
        %714 = vmatpush1.msra.mxu0 %v694
        %715 = vmatprep.subr.mxu0 0.0
        %716 = vmatpush1.msra.mxu0 %v695
        %717 = vmatprep.subr.mxu0 0.0
        %718 = vmatpush1.msra.mxu0 %v696
        %719 = vmatprep.subr.mxu0 0.0
        %720 = vmatpush1.msra.mxu0 %v697
        %721 = vmatprep.subr.mxu0 0.0
        %722 = vmatpush1.msra.mxu0 %v698
        %723 = vmatprep.subr.mxu0 0.0
        %724 = vmatpush1.msra.mxu0 %v699
        %725 = vmatprep.subr.mxu0 0.0
        %726 = vmatpush1.msra.mxu0 %v700
        %727 = vmatprep.subr.mxu0 0.0
        %728 = vmatpush1.msra.mxu0 %v701
        %729 = vmatprep.subr.mxu0 0.0
        %730 = vmatpush1.msra.mxu0 %v702
        %731 = vmatprep.subr.mxu0 0.0
        %732 = vmatpush1.msra.mxu0 %v703
        %733 = vmatprep.subr.mxu0 0.0
        %734 = vmatpush1.msra.mxu0 %v704
        %735 = vmatprep.subr.mxu0 0.0
        %736 = vmatpush1.msra.mxu0 %v705
        %737 = vmatprep.subr.mxu0 0.0
        %738 = vmatpush1.msra.mxu0 %v706
        %739 = vmatprep.subr.mxu0 0.0
        %740 = vmatpush1.msra.mxu0 %v707
        %741 = vmatprep.subr.mxu0 0.0
        %742 = vmatpush1.msra.mxu0 %v708
        %743 = vmatprep.subr.mxu0 0.0
        %744 = vmatpush1.msra.mxu0 0.0
        %745 = vmatprep.subr.mxu0 0.0
        %746 = vmatpush1.msra.mxu0 0.0
        %747 = vmatprep.subr.mxu0 0.0
        %748 = vmatpush1.msra.mxu0 0.0
        %749 = vmatprep.subr.mxu0 0.0
        %750 = vmatpush1.msra.mxu0 0.0
        %751 = vmatprep.subr.mxu0 0.0
        %752 = vmatpush1.msra.mxu0 0.0
        %753 = vmatprep.subr.mxu0 0.0
        %754 = vmatpush1.msra.mxu0 0.0
        %755 = vmatprep.subr.mxu0 0.0
        %756 = vmatpush1.msra.mxu0 0.0
        %757 = vmatprep.subr.mxu0 0.0
        %758 = vmatpush1.msra.mxu0 0.0
        %759 = vmatprep.subr.mxu0 0.0
        %760 = vmatpush1.msra.mxu0 0.0
        %761 = vmatprep.subr.mxu0 0.0
        %762 = vmatpush1.msra.mxu0 0.0
        %763 = vmatprep.subr.mxu0 0.0
        %764 = vmatpush1.msra.mxu0 0.0
        %765 = vmatprep.subr.mxu0 0.0
        %766 = vmatpush1.msra.mxu0 0.0
        %767 = vmatprep.subr.mxu0 0.0
        %768 = vmatpush1.msra.mxu0 0.0
        %769 = vmatprep.subr.mxu0 0.0
        %770 = vmatpush1.msra.mxu0 0.0
        %771 = vmatprep.subr.mxu0 0.0
        %772 = vmatpush1.msra.mxu0 0.0
        %773 = vmatprep.subr.mxu0 0.0
        %774 = vmatpush1.msra.mxu0 0.0
        %775 = vmatprep.mubr.f32.mxu0 0.0
        %776 = vmatmul.mubr.f32.gmra.mrb[0].mxu0 %v709
        %v777 = vpop.f32.mrb[0].mxu0
        %v778 = vadd.f32 %v710, %v777
        %v779 = vpop.f32.mrb[0].mxu0
        %780 = vdwg.mxu0
        %v781 = vtanh.pop %v778
        %v782 = vsub.f32 %v781, %v709
        %v783 = vmul.f32 %v330, %v782
        %v784 = vadd.f32 %v709, %v783
        %785 = vst [vmem:[%s309] sm:$0xff] %v784
        %s786 = scalar_lea.vmem [#allocation2], 8
        %v787 = vld [vmem:[%s786] sm:$0xff]
        %788 = vmatprep.subr.mxu0 0.0
        %789 = vmatpush1.msra.mxu0 %v693
        %790 = vmatprep.subr.mxu0 0.0
        %791 = vmatpush1.msra.mxu0 %v694
        %792 = vmatprep.subr.mxu0 0.0
        %793 = vmatpush1.msra.mxu0 %v695
        %794 = vmatprep.subr.mxu0 0.0
        %795 = vmatpush1.msra.mxu0 %v696
        %796 = vmatprep.subr.mxu0 0.0
        %797 = vmatpush1.msra.mxu0 %v697
        %798 = vmatprep.subr.mxu0 0.0
        %799 = vmatpush1.msra.mxu0 %v698
        %800 = vmatprep.subr.mxu0 0.0
        %801 = vmatpush1.msra.mxu0 %v699
        %802 = vmatprep.subr.mxu0 0.0
        %803 = vmatpush1.msra.mxu0 %v700
        %804 = vmatprep.subr.mxu0 0.0
        %805 = vmatpush1.msra.mxu0 %v701
        %806 = vmatprep.subr.mxu0 0.0
        %807 = vmatpush1.msra.mxu0 %v702
        %808 = vmatprep.subr.mxu0 0.0
        %809 = vmatpush1.msra.mxu0 %v703
        %810 = vmatprep.subr.mxu0 0.0
        %811 = vmatpush1.msra.mxu0 %v704
        %812 = vmatprep.subr.mxu0 0.0
        %813 = vmatpush1.msra.mxu0 %v705
        %814 = vmatprep.subr.mxu0 0.0
        %815 = vmatpush1.msra.mxu0 %v706
        %816 = vmatprep.subr.mxu0 0.0
        %817 = vmatpush1.msra.mxu0 %v707
        %818 = vmatprep.subr.mxu0 0.0
        %819 = vmatpush1.msra.mxu0 %v708
        %820 = vmatprep.subr.mxu0 0.0
        %821 = vmatpush1.msra.mxu0 0.0
        %822 = vmatprep.subr.mxu0 0.0
        %823 = vmatpush1.msra.mxu0 0.0
        %824 = vmatprep.subr.mxu0 0.0
        %825 = vmatpush1.msra.mxu0 0.0
        %826 = vmatprep.subr.mxu0 0.0
        %827 = vmatpush1.msra.mxu0 0.0
        %828 = vmatprep.subr.mxu0 0.0
        %829 = vmatpush1.msra.mxu0 0.0
        %830 = vmatprep.subr.mxu0 0.0
        %831 = vmatpush1.msra.mxu0 0.0
        %832 = vmatprep.subr.mxu0 0.0
        %833 = vmatpush1.msra.mxu0 0.0
        %834 = vmatprep.subr.mxu0 0.0
        %835 = vmatpush1.msra.mxu0 0.0
        %836 = vmatprep.subr.mxu0 0.0
        %837 = vmatpush1.msra.mxu0 0.0
        %838 = vmatprep.subr.mxu0 0.0
        %839 = vmatpush1.msra.mxu0 0.0
        %840 = vmatprep.subr.mxu0 0.0
        %841 = vmatpush1.msra.mxu0 0.0
        %842 = vmatprep.subr.mxu0 0.0
        %843 = vmatpush1.msra.mxu0 0.0
        %844 = vmatprep.subr.mxu0 0.0
        %845 = vmatpush1.msra.mxu0 0.0
        %846 = vmatprep.subr.mxu0 0.0
        %847 = vmatpush1.msra.mxu0 0.0
        %848 = vmatprep.subr.mxu0 0.0
        %849 = vmatpush1.msra.mxu0 0.0
        %850 = vmatprep.subr.mxu0 0.0
        %851 = vmatpush1.msra.mxu0 0.0
        %852 = vmatprep.mubr.f32.mxu0 0.0
        %853 = vmatmul.mubr.f32.gmra.mrb[0].mxu0 %v784
        %v854 = vpop.f32.mrb[0].mxu0
        %v855 = vadd.f32 %v787, %v854
        %v856 = vpop.f32.mrb[0].mxu0
        %857 = vdwg.mxu0
        %v858 = vtanh.pop %v855
        %v859 = vsub.f32 %v858, %v784
        %v860 = vmul.f32 %v330, %v859
        %v861 = vadd.f32 %v784, %v860
        %s862 = scalar_lea.vmem %s309, 8 [#allocation7]
        %863 = vst [vmem:[%s862] sm:$0xff] %v861
        %s864 = scalar_lea.vmem [#allocation2], 16
        %v865 = vld [vmem:[%s864] sm:$0xff]
        %866 = vmatprep.subr.mxu0 0.0
        %867 = vmatpush1.msra.mxu0 %v693
        %868 = vmatprep.subr.mxu0 0.0
        %869 = vmatpush1.msra.mxu0 %v694
        %870 = vmatprep.subr.mxu0 0.0
        %871 = vmatpush1.msra.mxu0 %v695
        %872 = vmatprep.subr.mxu0 0.0
        %873 = vmatpush1.msra.mxu0 %v696
        %874 = vmatprep.subr.mxu0 0.0
        %875 = vmatpush1.msra.mxu0 %v697
        %876 = vmatprep.subr.mxu0 0.0
        %877 = vmatpush1.msra.mxu0 %v698
        %878 = vmatprep.subr.mxu0 0.0
        %879 = vmatpush1.msra.mxu0 %v699
        %880 = vmatprep.subr.mxu0 0.0
        %881 = vmatpush1.msra.mxu0 %v700
        %882 = vmatprep.subr.mxu0 0.0
        %883 = vmatpush1.msra.mxu0 %v701
        %884 = vmatprep.subr.mxu0 0.0
        %885 = vmatpush1.msra.mxu0 %v702
        %886 = vmatprep.subr.mxu0 0.0
        %887 = vmatpush1.msra.mxu0 %v703
        %888 = vmatprep.subr.mxu0 0.0
        %889 = vmatpush1.msra.mxu0 %v704
        %890 = vmatprep.subr.mxu0 0.0
        %891 = vmatpush1.msra.mxu0 %v705
        %892 = vmatprep.subr.mxu0 0.0
        %893 = vmatpush1.msra.mxu0 %v706
        %894 = vmatprep.subr.mxu0 0.0
        %895 = vmatpush1.msra.mxu0 %v707
        %896 = vmatprep.subr.mxu0 0.0
        %897 = vmatpush1.msra.mxu0 %v708
        %898 = vmatprep.subr.mxu0 0.0
        %899 = vmatpush1.msra.mxu0 0.0
        %900 = vmatprep.subr.mxu0 0.0
        %901 = vmatpush1.msra.mxu0 0.0
        %902 = vmatprep.subr.mxu0 0.0
        %903 = vmatpush1.msra.mxu0 0.0
        %904 = vmatprep.subr.mxu0 0.0
        %905 = vmatpush1.msra.mxu0 0.0
        %906 = vmatprep.subr.mxu0 0.0
        %907 = vmatpush1.msra.mxu0 0.0
        %908 = vmatprep.subr.mxu0 0.0
        %909 = vmatpush1.msra.mxu0 0.0
        %910 = vmatprep.subr.mxu0 0.0
        %911 = vmatpush1.msra.mxu0 0.0
        %912 = vmatprep.subr.mxu0 0.0
        %913 = vmatpush1.msra.mxu0 0.0
        %914 = vmatprep.subr.mxu0 0.0
        %915 = vmatpush1.msra.mxu0 0.0
        %916 = vmatprep.subr.mxu0 0.0
        %917 = vmatpush1.msra.mxu0 0.0
        %918 = vmatprep.subr.mxu0 0.0
        %919 = vmatpush1.msra.mxu0 0.0
        %920 = vmatprep.subr.mxu0 0.0
        %921 = vmatpush1.msra.mxu0 0.0
        %922 = vmatprep.subr.mxu0 0.0
        %923 = vmatpush1.msra.mxu0 0.0
        %924 = vmatprep.subr.mxu0 0.0
        %925 = vmatpush1.msra.mxu0 0.0
        %926 = vmatprep.subr.mxu0 0.0
        %927 = vmatpush1.msra.mxu0 0.0
        %928 = vmatprep.subr.mxu0 0.0
        %929 = vmatpush1.msra.mxu0 0.0
        %930 = vmatprep.mubr.f32.mxu0 0.0
        %931 = vmatmul.mubr.f32.gmra.mrb[0].mxu0 %v861
        %v932 = vpop.f32.mrb[0].mxu0
        %v933 = vadd.f32 %v865, %v932
        %v934 = vpop.f32.mrb[0].mxu0
        %935 = vdwg.mxu0
        %v936 = vtanh.pop %v933
        %v937 = vsub.f32 %v936, %v861
        %v938 = vmul.f32 %v330, %v937
        %v939 = vadd.f32 %v861, %v938
        %s940 = scalar_lea.vmem %s309, 16 [#allocation7]
        %941 = vst [vmem:[%s940] sm:$0xff] %v939
        %s942 = scalar_lea.vmem [#allocation2], 24
        %v943 = vld [vmem:[%s942] sm:$0xff]
        %944 = vmatprep.subr.mxu0 0.0
        %945 = vmatpush1.msra.mxu0 %v693
        %946 = vmatprep.subr.mxu0 0.0
        %947 = vmatpush1.msra.mxu0 %v694
        %948 = vmatprep.subr.mxu0 0.0
        %949 = vmatpush1.msra.mxu0 %v695
        %950 = vmatprep.subr.mxu0 0.0
        %951 = vmatpush1.msra.mxu0 %v696
        %952 = vmatprep.subr.mxu0 0.0
        %953 = vmatpush1.msra.mxu0 %v697
        %954 = vmatprep.subr.mxu0 0.0
        %955 = vmatpush1.msra.mxu0 %v698
        %956 = vmatprep.subr.mxu0 0.0
        %957 = vmatpush1.msra.mxu0 %v699
        %958 = vmatprep.subr.mxu0 0.0
        %959 = vmatpush1.msra.mxu0 %v700
        %960 = vmatprep.subr.mxu0 0.0
        %961 = vmatpush1.msra.mxu0 %v701
        %962 = vmatprep.subr.mxu0 0.0
        %963 = vmatpush1.msra.mxu0 %v702
        %964 = vmatprep.subr.mxu0 0.0
        %965 = vmatpush1.msra.mxu0 %v703
        %966 = vmatprep.subr.mxu0 0.0
        %967 = vmatpush1.msra.mxu0 %v704
        %968 = vmatprep.subr.mxu0 0.0
        %969 = vmatpush1.msra.mxu0 %v705
        %970 = vmatprep.subr.mxu0 0.0
        %971 = vmatpush1.msra.mxu0 %v706
        %972 = vmatprep.subr.mxu0 0.0
        %973 = vmatpush1.msra.mxu0 %v707
        %974 = vmatprep.subr.mxu0 0.0
        %975 = vmatpush1.msra.mxu0 %v708
        %976 = vmatprep.subr.mxu0 0.0
        %977 = vmatpush1.msra.mxu0 0.0
        %978 = vmatprep.subr.mxu0 0.0
        %979 = vmatpush1.msra.mxu0 0.0
        %980 = vmatprep.subr.mxu0 0.0
        %981 = vmatpush1.msra.mxu0 0.0
        %982 = vmatprep.subr.mxu0 0.0
        %983 = vmatpush1.msra.mxu0 0.0
        %984 = vmatprep.subr.mxu0 0.0
        %985 = vmatpush1.msra.mxu0 0.0
        %986 = vmatprep.subr.mxu0 0.0
        %987 = vmatpush1.msra.mxu0 0.0
        %988 = vmatprep.subr.mxu0 0.0
        %989 = vmatpush1.msra.mxu0 0.0
        %990 = vmatprep.subr.mxu0 0.0
        %991 = vmatpush1.msra.mxu0 0.0
        %992 = vmatprep.subr.mxu0 0.0
        %993 = vmatpush1.msra.mxu0 0.0
        %994 = vmatprep.subr.mxu0 0.0
        %995 = vmatpush1.msra.mxu0 0.0
        %996 = vmatprep.subr.mxu0 0.0
        %997 = vmatpush1.msra.mxu0 0.0
        %998 = vmatprep.subr.mxu0 0.0
        %999 = vmatpush1.msra.mxu0 0.0
        %1000 = vmatprep.subr.mxu0 0.0
        %1001 = vmatpush1.msra.mxu0 0.0
        %1002 = vmatprep.subr.mxu0 0.0
        %1003 = vmatpush1.msra.mxu0 0.0
        %1004 = vmatprep.subr.mxu0 0.0
        %1005 = vmatpush1.msra.mxu0 0.0
        %1006 = vmatprep.subr.mxu0 0.0
        %1007 = vmatpush1.msra.mxu0 0.0
        %1008 = vmatprep.mubr.f32.mxu0 0.0
        %1009 = vmatmul.mubr.f32.gmra.mrb[0].mxu0 %v939
        %v1010 = vpop.f32.mrb[0].mxu0
        %v1011 = vadd.f32 %v943, %v1010
        %v1012 = vpop.f32.mrb[0].mxu0
        %1013 = vdwg.mxu0
        %v1014 = vtanh.pop %v1011
        %v1015 = vsub.f32 %v1014, %v939
        %v1016 = vmul.f32 %v330, %v1015
        %v1017 = vadd.f32 %v939, %v1016
        %s1018 = scalar_lea.vmem %s309, 24 [#allocation7]
        %1019 = vst [vmem:[%s1018] sm:$0xff] %v1017
        %s1020 = scalar_lea.vmem [#allocation2], 32
        %v1021 = vld [vmem:[%s1020] sm:$0xff]
        %1022 = vmatprep.subr.mxu0 0.0
        %1023 = vmatpush1.msra.mxu0 %v693
        %1024 = vmatprep.subr.mxu0 0.0
        %1025 = vmatpush1.msra.mxu0 %v694
        %1026 = vmatprep.subr.mxu0 0.0
        %1027 = vmatpush1.msra.mxu0 %v695
        %1028 = vmatprep.subr.mxu0 0.0
        %1029 = vmatpush1.msra.mxu0 %v696
        %1030 = vmatprep.subr.mxu0 0.0
        %1031 = vmatpush1.msra.mxu0 %v697
        %1032 = vmatprep.subr.mxu0 0.0
        %1033 = vmatpush1.msra.mxu0 %v698
        %1034 = vmatprep.subr.mxu0 0.0
        %1035 = vmatpush1.msra.mxu0 %v699
        %1036 = vmatprep.subr.mxu0 0.0
        %1037 = vmatpush1.msra.mxu0 %v700
        %1038 = vmatprep.subr.mxu0 0.0
        %1039 = vmatpush1.msra.mxu0 %v701
        %1040 = vmatprep.subr.mxu0 0.0
        %1041 = vmatpush1.msra.mxu0 %v702
        %1042 = vmatprep.subr.mxu0 0.0
        %1043 = vmatpush1.msra.mxu0 %v703
        %1044 = vmatprep.subr.mxu0 0.0
        %1045 = vmatpush1.msra.mxu0 %v704
        %1046 = vmatprep.subr.mxu0 0.0
        %1047 = vmatpush1.msra.mxu0 %v705
        %1048 = vmatprep.subr.mxu0 0.0
        %1049 = vmatpush1.msra.mxu0 %v706
        %1050 = vmatprep.subr.mxu0 0.0
        %1051 = vmatpush1.msra.mxu0 %v707
        %1052 = vmatprep.subr.mxu0 0.0
        %1053 = vmatpush1.msra.mxu0 %v708
        %1054 = vmatprep.subr.mxu0 0.0
        %1055 = vmatpush1.msra.mxu0 0.0
        %1056 = vmatprep.subr.mxu0 0.0
        %1057 = vmatpush1.msra.mxu0 0.0
        %1058 = vmatprep.subr.mxu0 0.0
        %1059 = vmatpush1.msra.mxu0 0.0
        %1060 = vmatprep.subr.mxu0 0.0
        %1061 = vmatpush1.msra.mxu0 0.0
        %1062 = vmatprep.subr.mxu0 0.0
        %1063 = vmatpush1.msra.mxu0 0.0
        %1064 = vmatprep.subr.mxu0 0.0
        %1065 = vmatpush1.msra.mxu0 0.0
        %1066 = vmatprep.subr.mxu0 0.0
        %1067 = vmatpush1.msra.mxu0 0.0
        %1068 = vmatprep.subr.mxu0 0.0
        %1069 = vmatpush1.msra.mxu0 0.0
        %1070 = vmatprep.subr.mxu0 0.0
        %1071 = vmatpush1.msra.mxu0 0.0
        %1072 = vmatprep.subr.mxu0 0.0
        %1073 = vmatpush1.msra.mxu0 0.0
        %1074 = vmatprep.subr.mxu0 0.0
        %1075 = vmatpush1.msra.mxu0 0.0
        %1076 = vmatprep.subr.mxu0 0.0
        %1077 = vmatpush1.msra.mxu0 0.0
        %1078 = vmatprep.subr.mxu0 0.0
        %1079 = vmatpush1.msra.mxu0 0.0
        %1080 = vmatprep.subr.mxu0 0.0
        %1081 = vmatpush1.msra.mxu0 0.0
        %1082 = vmatprep.subr.mxu0 0.0
        %1083 = vmatpush1.msra.mxu0 0.0
        %1084 = vmatprep.subr.mxu0 0.0
        %1085 = vmatpush1.msra.mxu0 0.0
        %1086 = vmatprep.mubr.f32.mxu0 0.0
        %1087 = vmatmul.mubr.f32.gmra.mrb[0].mxu0 %v1017
        %v1088 = vpop.f32.mrb[0].mxu0
        %v1089 = vadd.f32 %v1021, %v1088
        %v1090 = vpop.f32.mrb[0].mxu0
        %1091 = vdwg.mxu0
        %v1092 = vtanh.pop %v1089
        %v1093 = vsub.f32 %v1092, %v1017
        %v1094 = vmul.f32 %v330, %v1093
        %v1095 = vadd.f32 %v1017, %v1094
        %s1096 = scalar_lea.vmem %s309, 32 [#allocation7]
        %1097 = vst [vmem:[%s1096] sm:$0xff] %v1095
        %s1098 = scalar_lea.vmem [#allocation2], 40
        %v1099 = vld [vmem:[%s1098] sm:$0xff]
        %1100 = vmatprep.subr.mxu0 0.0
        %1101 = vmatpush1.msra.mxu0 %v693
        %1102 = vmatprep.subr.mxu0 0.0
        %1103 = vmatpush1.msra.mxu0 %v694
        %1104 = vmatprep.subr.mxu0 0.0
        %1105 = vmatpush1.msra.mxu0 %v695
        %1106 = vmatprep.subr.mxu0 0.0
        %1107 = vmatpush1.msra.mxu0 %v696
        %1108 = vmatprep.subr.mxu0 0.0
        %1109 = vmatpush1.msra.mxu0 %v697
        %1110 = vmatprep.subr.mxu0 0.0
        %1111 = vmatpush1.msra.mxu0 %v698
        %1112 = vmatprep.subr.mxu0 0.0
        %1113 = vmatpush1.msra.mxu0 %v699
        %1114 = vmatprep.subr.mxu0 0.0
        %1115 = vmatpush1.msra.mxu0 %v700
        %1116 = vmatprep.subr.mxu0 0.0
        %1117 = vmatpush1.msra.mxu0 %v701
        %1118 = vmatprep.subr.mxu0 0.0
        %1119 = vmatpush1.msra.mxu0 %v702
        %1120 = vmatprep.subr.mxu0 0.0
        %1121 = vmatpush1.msra.mxu0 %v703
        %1122 = vmatprep.subr.mxu0 0.0
        %1123 = vmatpush1.msra.mxu0 %v704
        %1124 = vmatprep.subr.mxu0 0.0
        %1125 = vmatpush1.msra.mxu0 %v705
        %1126 = vmatprep.subr.mxu0 0.0
        %1127 = vmatpush1.msra.mxu0 %v706
        %1128 = vmatprep.subr.mxu0 0.0
        %1129 = vmatpush1.msra.mxu0 %v707
        %1130 = vmatprep.subr.mxu0 0.0
        %1131 = vmatpush1.msra.mxu0 %v708
        %1132 = vmatprep.subr.mxu0 0.0
        %1133 = vmatpush1.msra.mxu0 0.0
        %1134 = vmatprep.subr.mxu0 0.0
        %1135 = vmatpush1.msra.mxu0 0.0
        %1136 = vmatprep.subr.mxu0 0.0
        %1137 = vmatpush1.msra.mxu0 0.0
        %1138 = vmatprep.subr.mxu0 0.0
        %1139 = vmatpush1.msra.mxu0 0.0
        %1140 = vmatprep.subr.mxu0 0.0
        %1141 = vmatpush1.msra.mxu0 0.0
        %1142 = vmatprep.subr.mxu0 0.0
        %1143 = vmatpush1.msra.mxu0 0.0
        %1144 = vmatprep.subr.mxu0 0.0
        %1145 = vmatpush1.msra.mxu0 0.0
        %1146 = vmatprep.subr.mxu0 0.0
        %1147 = vmatpush1.msra.mxu0 0.0
        %1148 = vmatprep.subr.mxu0 0.0
        %1149 = vmatpush1.msra.mxu0 0.0
        %1150 = vmatprep.subr.mxu0 0.0
        %1151 = vmatpush1.msra.mxu0 0.0
        %1152 = vmatprep.subr.mxu0 0.0
        %1153 = vmatpush1.msra.mxu0 0.0
        %1154 = vmatprep.subr.mxu0 0.0
        %1155 = vmatpush1.msra.mxu0 0.0
        %1156 = vmatprep.subr.mxu0 0.0
        %1157 = vmatpush1.msra.mxu0 0.0
        %1158 = vmatprep.subr.mxu0 0.0
        %1159 = vmatpush1.msra.mxu0 0.0
        %1160 = vmatprep.subr.mxu0 0.0
        %1161 = vmatpush1.msra.mxu0 0.0
        %1162 = vmatprep.subr.mxu0 0.0
        %1163 = vmatpush1.msra.mxu0 0.0
        %1164 = vmatprep.mubr.f32.mxu0 0.0
        %1165 = vmatmul.mubr.f32.gmra.mrb[0].mxu0 %v1095
        %v1166 = vpop.f32.mrb[0].mxu0
        %v1167 = vadd.f32 %v1099, %v1166
        %v1168 = vpop.f32.mrb[0].mxu0
        %1169 = vdwg.mxu0
        %v1170 = vtanh.pop %v1167
        %v1171 = vsub.f32 %v1170, %v1095
        %v1172 = vmul.f32 %v330, %v1171
        %v1173 = vadd.f32 %v1095, %v1172
        %s1174 = scalar_lea.vmem %s309, 40 [#allocation7]
        %1175 = vst [vmem:[%s1174] sm:$0xff] %v1173
        %s1176 = scalar_lea.vmem [#allocation2], 48
        %v1177 = vld [vmem:[%s1176] sm:$0xff]
        %1178 = vmatprep.subr.mxu0 0.0
        %1179 = vmatpush1.msra.mxu0 %v693
        %1180 = vmatprep.subr.mxu0 0.0
        %1181 = vmatpush1.msra.mxu0 %v694
        %1182 = vmatprep.subr.mxu0 0.0
        %1183 = vmatpush1.msra.mxu0 %v695
        %1184 = vmatprep.subr.mxu0 0.0
        %1185 = vmatpush1.msra.mxu0 %v696
        %1186 = vmatprep.subr.mxu0 0.0
        %1187 = vmatpush1.msra.mxu0 %v697
        %1188 = vmatprep.subr.mxu0 0.0
        %1189 = vmatpush1.msra.mxu0 %v698
        %1190 = vmatprep.subr.mxu0 0.0
        %1191 = vmatpush1.msra.mxu0 %v699
        %1192 = vmatprep.subr.mxu0 0.0
        %1193 = vmatpush1.msra.mxu0 %v700
        %1194 = vmatprep.subr.mxu0 0.0
        %1195 = vmatpush1.msra.mxu0 %v701
        %1196 = vmatprep.subr.mxu0 0.0
        %1197 = vmatpush1.msra.mxu0 %v702
        %1198 = vmatprep.subr.mxu0 0.0
        %1199 = vmatpush1.msra.mxu0 %v703
        %1200 = vmatprep.subr.mxu0 0.0
        %1201 = vmatpush1.msra.mxu0 %v704
        %1202 = vmatprep.subr.mxu0 0.0
        %1203 = vmatpush1.msra.mxu0 %v705
        %1204 = vmatprep.subr.mxu0 0.0
        %1205 = vmatpush1.msra.mxu0 %v706
        %1206 = vmatprep.subr.mxu0 0.0
        %1207 = vmatpush1.msra.mxu0 %v707
        %1208 = vmatprep.subr.mxu0 0.0
        %1209 = vmatpush1.msra.mxu0 %v708
        %1210 = vmatprep.subr.mxu0 0.0
        %1211 = vmatpush1.msra.mxu0 0.0
        %1212 = vmatprep.subr.mxu0 0.0
        %1213 = vmatpush1.msra.mxu0 0.0
        %1214 = vmatprep.subr.mxu0 0.0
        %1215 = vmatpush1.msra.mxu0 0.0
        %1216 = vmatprep.subr.mxu0 0.0
        %1217 = vmatpush1.msra.mxu0 0.0
        %1218 = vmatprep.subr.mxu0 0.0
        %1219 = vmatpush1.msra.mxu0 0.0
        %1220 = vmatprep.subr.mxu0 0.0
        %1221 = vmatpush1.msra.mxu0 0.0
        %1222 = vmatprep.subr.mxu0 0.0
        %1223 = vmatpush1.msra.mxu0 0.0
        %1224 = vmatprep.subr.mxu0 0.0
        %1225 = vmatpush1.msra.mxu0 0.0
        %1226 = vmatprep.subr.mxu0 0.0
        %1227 = vmatpush1.msra.mxu0 0.0
        %1228 = vmatprep.subr.mxu0 0.0
        %1229 = vmatpush1.msra.mxu0 0.0
        %1230 = vmatprep.subr.mxu0 0.0
        %1231 = vmatpush1.msra.mxu0 0.0
        %1232 = vmatprep.subr.mxu0 0.0
        %1233 = vmatpush1.msra.mxu0 0.0
        %1234 = vmatprep.subr.mxu0 0.0
        %1235 = vmatpush1.msra.mxu0 0.0
        %1236 = vmatprep.subr.mxu0 0.0
        %1237 = vmatpush1.msra.mxu0 0.0
        %1238 = vmatprep.subr.mxu0 0.0
        %1239 = vmatpush1.msra.mxu0 0.0
        %1240 = vmatprep.subr.mxu0 0.0
        %1241 = vmatpush1.msra.mxu0 0.0
        %1242 = vmatprep.mubr.f32.mxu0 0.0
        %1243 = vmatmul.mubr.f32.gmra.mrb[0].mxu0 %v1173
        %v1244 = vpop.f32.mrb[0].mxu0
        %v1245 = vadd.f32 %v1177, %v1244
        %v1246 = vpop.f32.mrb[0].mxu0
        %1247 = vdwg.mxu0
        %v1248 = vtanh.pop %v1245
        %v1249 = vsub.f32 %v1248, %v1173
        %v1250 = vmul.f32 %v330, %v1249
        %v1251 = vadd.f32 %v1173, %v1250
        %s1252 = scalar_lea.vmem %s309, 48 [#allocation7]
        %1253 = vst [vmem:[%s1252] sm:$0xff] %v1251
        %s1254 = scalar_lea.vmem [#allocation2], 56
        %v1255 = vld [vmem:[%s1254] sm:$0xff]
        %1256 = vmatprep.subr.mxu0 0.0
        %1257 = vmatpush1.msra.mxu0 %v693
        %1258 = vmatprep.subr.mxu0 0.0
        %1259 = vmatpush1.msra.mxu0 %v694
        %1260 = vmatprep.subr.mxu0 0.0
        %1261 = vmatpush1.msra.mxu0 %v695
        %1262 = vmatprep.subr.mxu0 0.0
        %1263 = vmatpush1.msra.mxu0 %v696
        %1264 = vmatprep.subr.mxu0 0.0
        %1265 = vmatpush1.msra.mxu0 %v697
        %1266 = vmatprep.subr.mxu0 0.0
        %1267 = vmatpush1.msra.mxu0 %v698
        %1268 = vmatprep.subr.mxu0 0.0
        %1269 = vmatpush1.msra.mxu0 %v699
        %1270 = vmatprep.subr.mxu0 0.0
        %1271 = vmatpush1.msra.mxu0 %v700
        %1272 = vmatprep.subr.mxu0 0.0
        %1273 = vmatpush1.msra.mxu0 %v701
        %1274 = vmatprep.subr.mxu0 0.0
        %1275 = vmatpush1.msra.mxu0 %v702
        %1276 = vmatprep.subr.mxu0 0.0
        %1277 = vmatpush1.msra.mxu0 %v703
        %1278 = vmatprep.subr.mxu0 0.0
        %1279 = vmatpush1.msra.mxu0 %v704
        %1280 = vmatprep.subr.mxu0 0.0
        %1281 = vmatpush1.msra.mxu0 %v705
        %1282 = vmatprep.subr.mxu0 0.0
        %1283 = vmatpush1.msra.mxu0 %v706
        %1284 = vmatprep.subr.mxu0 0.0
        %1285 = vmatpush1.msra.mxu0 %v707
        %1286 = vmatprep.subr.mxu0 0.0
        %1287 = vmatpush1.msra.mxu0 %v708
        %1288 = vmatprep.subr.mxu0 0.0
        %1289 = vmatpush1.msra.mxu0 0.0
        %1290 = vmatprep.subr.mxu0 0.0
        %1291 = vmatpush1.msra.mxu0 0.0
        %1292 = vmatprep.subr.mxu0 0.0
        %1293 = vmatpush1.msra.mxu0 0.0
        %1294 = vmatprep.subr.mxu0 0.0
        %1295 = vmatpush1.msra.mxu0 0.0
        %1296 = vmatprep.subr.mxu0 0.0
        %1297 = vmatpush1.msra.mxu0 0.0
        %1298 = vmatprep.subr.mxu0 0.0
        %1299 = vmatpush1.msra.mxu0 0.0
        %1300 = vmatprep.subr.mxu0 0.0
        %1301 = vmatpush1.msra.mxu0 0.0
        %1302 = vmatprep.subr.mxu0 0.0
        %1303 = vmatpush1.msra.mxu0 0.0
        %1304 = vmatprep.subr.mxu0 0.0
        %1305 = vmatpush1.msra.mxu0 0.0
        %1306 = vmatprep.subr.mxu0 0.0
        %1307 = vmatpush1.msra.mxu0 0.0
        %1308 = vmatprep.subr.mxu0 0.0
        %1309 = vmatpush1.msra.mxu0 0.0
        %1310 = vmatprep.subr.mxu0 0.0
        %1311 = vmatpush1.msra.mxu0 0.0
        %1312 = vmatprep.subr.mxu0 0.0
        %1313 = vmatpush1.msra.mxu0 0.0
        %1314 = vmatprep.subr.mxu0 0.0
        %1315 = vmatpush1.msra.mxu0 0.0
        %1316 = vmatprep.subr.mxu0 0.0
        %1317 = vmatpush1.msra.mxu0 0.0
        %1318 = vmatprep.subr.mxu0 0.0
        %1319 = vmatpush1.msra.mxu0 0.0
        %1320 = vmatprep.mubr.f32.mxu0 0.0
        %1321 = vmatmul.mubr.f32.gmra.mrb[0].mxu0 %v1251
        %v1322 = vpop.f32.mrb[0].mxu0
        %v1323 = vadd.f32 %v1255, %v1322
        %v1324 = vpop.f32.mrb[0].mxu0
        %1325 = vdwg.mxu0
        %v1326 = vtanh.pop %v1323
        %v1327 = vsub.f32 %v1326, %v1251
        %v1328 = vmul.f32 %v330, %v1327
        %v1329 = vadd.f32 %v1251, %v1328
        %s1330 = scalar_lea.vmem %s309, 56 [#allocation7]
        %1331 = vst [vmem:[%s1330] sm:$0xff] %v1329
        %s1332 = scalar_lea.vmem [#allocation2], 64
        %v1333 = vld [vmem:[%s1332] sm:$0xff]
        %1334 = vmatprep.subr.mxu0 0.0
        %1335 = vmatpush1.msra.mxu0 %v693
        %1336 = vmatprep.subr.mxu0 0.0
        %1337 = vmatpush1.msra.mxu0 %v694
        %1338 = vmatprep.subr.mxu0 0.0
        %1339 = vmatpush1.msra.mxu0 %v695
        %1340 = vmatprep.subr.mxu0 0.0
        %1341 = vmatpush1.msra.mxu0 %v696
        %1342 = vmatprep.subr.mxu0 0.0
        %1343 = vmatpush1.msra.mxu0 %v697
        %1344 = vmatprep.subr.mxu0 0.0
        %1345 = vmatpush1.msra.mxu0 %v698
        %1346 = vmatprep.subr.mxu0 0.0
        %1347 = vmatpush1.msra.mxu0 %v699
        %1348 = vmatprep.subr.mxu0 0.0
        %1349 = vmatpush1.msra.mxu0 %v700
        %1350 = vmatprep.subr.mxu0 0.0
        %1351 = vmatpush1.msra.mxu0 %v701
        %1352 = vmatprep.subr.mxu0 0.0
        %1353 = vmatpush1.msra.mxu0 %v702
        %1354 = vmatprep.subr.mxu0 0.0
        %1355 = vmatpush1.msra.mxu0 %v703
        %1356 = vmatprep.subr.mxu0 0.0
        %1357 = vmatpush1.msra.mxu0 %v704
        %1358 = vmatprep.subr.mxu0 0.0
        %1359 = vmatpush1.msra.mxu0 %v705
        %1360 = vmatprep.subr.mxu0 0.0
        %1361 = vmatpush1.msra.mxu0 %v706
        %1362 = vmatprep.subr.mxu0 0.0
        %1363 = vmatpush1.msra.mxu0 %v707
        %1364 = vmatprep.subr.mxu0 0.0
        %1365 = vmatpush1.msra.mxu0 %v708
        %1366 = vmatprep.subr.mxu0 0.0
        %1367 = vmatpush1.msra.mxu0 0.0
        %1368 = vmatprep.subr.mxu0 0.0
        %1369 = vmatpush1.msra.mxu0 0.0
        %1370 = vmatprep.subr.mxu0 0.0
        %1371 = vmatpush1.msra.mxu0 0.0
        %1372 = vmatprep.subr.mxu0 0.0
        %1373 = vmatpush1.msra.mxu0 0.0
        %1374 = vmatprep.subr.mxu0 0.0
        %1375 = vmatpush1.msra.mxu0 0.0
        %1376 = vmatprep.subr.mxu0 0.0
        %1377 = vmatpush1.msra.mxu0 0.0
        %1378 = vmatprep.subr.mxu0 0.0
        %1379 = vmatpush1.msra.mxu0 0.0
        %1380 = vmatprep.subr.mxu0 0.0
        %1381 = vmatpush1.msra.mxu0 0.0
        %1382 = vmatprep.subr.mxu0 0.0
        %1383 = vmatpush1.msra.mxu0 0.0
        %1384 = vmatprep.subr.mxu0 0.0
        %1385 = vmatpush1.msra.mxu0 0.0
        %1386 = vmatprep.subr.mxu0 0.0
        %1387 = vmatpush1.msra.mxu0 0.0
        %1388 = vmatprep.subr.mxu0 0.0
        %1389 = vmatpush1.msra.mxu0 0.0
        %1390 = vmatprep.subr.mxu0 0.0
        %1391 = vmatpush1.msra.mxu0 0.0
        %1392 = vmatprep.subr.mxu0 0.0
        %1393 = vmatpush1.msra.mxu0 0.0
        %1394 = vmatprep.subr.mxu0 0.0
        %1395 = vmatpush1.msra.mxu0 0.0
        %1396 = vmatprep.subr.mxu0 0.0
        %1397 = vmatpush1.msra.mxu0 0.0
        %1398 = vmatprep.mubr.f32.mxu0 0.0
        %1399 = vmatmul.mubr.f32.gmra.mrb[0].mxu0 %v1329
        %v1400 = vpop.f32.mrb[0].mxu0
        %v1401 = vadd.f32 %v1333, %v1400
        %v1402 = vpop.f32.mrb[0].mxu0
        %1403 = vdwg.mxu0
        %v1404 = vtanh.pop %v1401
        %v1405 = vsub.f32 %v1404, %v1329
        %v1406 = vmul.f32 %v330, %v1405
        %v1407 = vadd.f32 %v1329, %v1406
        %s1408 = scalar_lea.vmem %s309, 64 [#allocation7]
        %1409 = vst [vmem:[%s1408] sm:$0xff] %v1407
        %s1410 = scalar_lea.vmem [#allocation2], 72
        %v1411 = vld [vmem:[%s1410] sm:$0xff]
        %1412 = vmatprep.subr.mxu0 0.0
        %1413 = vmatpush1.msra.mxu0 %v693
        %1414 = vmatprep.subr.mxu0 0.0
        %1415 = vmatpush1.msra.mxu0 %v694
        %1416 = vmatprep.subr.mxu0 0.0
        %1417 = vmatpush1.msra.mxu0 %v695
        %1418 = vmatprep.subr.mxu0 0.0
        %1419 = vmatpush1.msra.mxu0 %v696
        %1420 = vmatprep.subr.mxu0 0.0
        %1421 = vmatpush1.msra.mxu0 %v697
        %1422 = vmatprep.subr.mxu0 0.0
        %1423 = vmatpush1.msra.mxu0 %v698
        %1424 = vmatprep.subr.mxu0 0.0
        %1425 = vmatpush1.msra.mxu0 %v699
        %1426 = vmatprep.subr.mxu0 0.0
        %1427 = vmatpush1.msra.mxu0 %v700
        %1428 = vmatprep.subr.mxu0 0.0
        %1429 = vmatpush1.msra.mxu0 %v701
        %1430 = vmatprep.subr.mxu0 0.0
        %1431 = vmatpush1.msra.mxu0 %v702
        %1432 = vmatprep.subr.mxu0 0.0
        %1433 = vmatpush1.msra.mxu0 %v703
        %1434 = vmatprep.subr.mxu0 0.0
        %1435 = vmatpush1.msra.mxu0 %v704
        %1436 = vmatprep.subr.mxu0 0.0
        %1437 = vmatpush1.msra.mxu0 %v705
        %1438 = vmatprep.subr.mxu0 0.0
        %1439 = vmatpush1.msra.mxu0 %v706
        %1440 = vmatprep.subr.mxu0 0.0
        %1441 = vmatpush1.msra.mxu0 %v707
        %1442 = vmatprep.subr.mxu0 0.0
        %1443 = vmatpush1.msra.mxu0 %v708
        %1444 = vmatprep.subr.mxu0 0.0
        %1445 = vmatpush1.msra.mxu0 0.0
        %1446 = vmatprep.subr.mxu0 0.0
        %1447 = vmatpush1.msra.mxu0 0.0
        %1448 = vmatprep.subr.mxu0 0.0
        %1449 = vmatpush1.msra.mxu0 0.0
        %1450 = vmatprep.subr.mxu0 0.0
        %1451 = vmatpush1.msra.mxu0 0.0
        %1452 = vmatprep.subr.mxu0 0.0
        %1453 = vmatpush1.msra.mxu0 0.0
        %1454 = vmatprep.subr.mxu0 0.0
        %1455 = vmatpush1.msra.mxu0 0.0
        %1456 = vmatprep.subr.mxu0 0.0
        %1457 = vmatpush1.msra.mxu0 0.0
        %1458 = vmatprep.subr.mxu0 0.0
        %1459 = vmatpush1.msra.mxu0 0.0
        %1460 = vmatprep.subr.mxu0 0.0
        %1461 = vmatpush1.msra.mxu0 0.0
        %1462 = vmatprep.subr.mxu0 0.0
        %1463 = vmatpush1.msra.mxu0 0.0
        %1464 = vmatprep.subr.mxu0 0.0
        %1465 = vmatpush1.msra.mxu0 0.0
        %1466 = vmatprep.subr.mxu0 0.0
        %1467 = vmatpush1.msra.mxu0 0.0
        %1468 = vmatprep.subr.mxu0 0.0
        %1469 = vmatpush1.msra.mxu0 0.0
        %1470 = vmatprep.subr.mxu0 0.0
        %1471 = vmatpush1.msra.mxu0 0.0
        %1472 = vmatprep.subr.mxu0 0.0
        %1473 = vmatpush1.msra.mxu0 0.0
        %1474 = vmatprep.subr.mxu0 0.0
        %1475 = vmatpush1.msra.mxu0 0.0
        %1476 = vmatprep.mubr.f32.mxu0 0.0
        %1477 = vmatmul.mubr.f32.gmra.mrb[0].mxu0 %v1407
        %v1478 = vpop.f32.mrb[0].mxu0
        %v1479 = vadd.f32 %v1411, %v1478
        %v1480 = vpop.f32.mrb[0].mxu0
        %1481 = vdwg.mxu0
        %v1482 = vtanh.pop %v1479
        %v1483 = vsub.f32 %v1482, %v1407
        %v1484 = vmul.f32 %v330, %v1483
        %v1485 = vadd.f32 %v1407, %v1484
        %s1486 = scalar_lea.vmem %s309, 72 [#allocation7]
        %1487 = vst [vmem:[%s1486] sm:$0xff] %v1485
        %s1488 = scalar_lea.vmem [#allocation2], 80
        %v1489 = vld [vmem:[%s1488] sm:$0xff]
        %1490 = vmatprep.subr.mxu0 0.0
        %1491 = vmatpush1.msra.mxu0 %v693
        %1492 = vmatprep.subr.mxu0 0.0
        %1493 = vmatpush1.msra.mxu0 %v694
        %1494 = vmatprep.subr.mxu0 0.0
        %1495 = vmatpush1.msra.mxu0 %v695
        %1496 = vmatprep.subr.mxu0 0.0
        %1497 = vmatpush1.msra.mxu0 %v696
        %1498 = vmatprep.subr.mxu0 0.0
        %1499 = vmatpush1.msra.mxu0 %v697
        %1500 = vmatprep.subr.mxu0 0.0
        %1501 = vmatpush1.msra.mxu0 %v698
        %1502 = vmatprep.subr.mxu0 0.0
        %1503 = vmatpush1.msra.mxu0 %v699
        %1504 = vmatprep.subr.mxu0 0.0
        %1505 = vmatpush1.msra.mxu0 %v700
        %1506 = vmatprep.subr.mxu0 0.0
        %1507 = vmatpush1.msra.mxu0 %v701
        %1508 = vmatprep.subr.mxu0 0.0
        %1509 = vmatpush1.msra.mxu0 %v702
        %1510 = vmatprep.subr.mxu0 0.0
        %1511 = vmatpush1.msra.mxu0 %v703
        %1512 = vmatprep.subr.mxu0 0.0
        %1513 = vmatpush1.msra.mxu0 %v704
        %1514 = vmatprep.subr.mxu0 0.0
        %1515 = vmatpush1.msra.mxu0 %v705
        %1516 = vmatprep.subr.mxu0 0.0
        %1517 = vmatpush1.msra.mxu0 %v706
        %1518 = vmatprep.subr.mxu0 0.0
        %1519 = vmatpush1.msra.mxu0 %v707
        %1520 = vmatprep.subr.mxu0 0.0
        %1521 = vmatpush1.msra.mxu0 %v708
        %1522 = vmatprep.subr.mxu0 0.0
        %1523 = vmatpush1.msra.mxu0 0.0
        %1524 = vmatprep.subr.mxu0 0.0
        %1525 = vmatpush1.msra.mxu0 0.0
        %1526 = vmatprep.subr.mxu0 0.0
        %1527 = vmatpush1.msra.mxu0 0.0
        %1528 = vmatprep.subr.mxu0 0.0
        %1529 = vmatpush1.msra.mxu0 0.0
        %1530 = vmatprep.subr.mxu0 0.0
        %1531 = vmatpush1.msra.mxu0 0.0
        %1532 = vmatprep.subr.mxu0 0.0
        %1533 = vmatpush1.msra.mxu0 0.0
        %1534 = vmatprep.subr.mxu0 0.0
        %1535 = vmatpush1.msra.mxu0 0.0
        %1536 = vmatprep.subr.mxu0 0.0
        %1537 = vmatpush1.msra.mxu0 0.0
        %1538 = vmatprep.subr.mxu0 0.0
        %1539 = vmatpush1.msra.mxu0 0.0
        %1540 = vmatprep.subr.mxu0 0.0
        %1541 = vmatpush1.msra.mxu0 0.0
        %1542 = vmatprep.subr.mxu0 0.0
        %1543 = vmatpush1.msra.mxu0 0.0
        %1544 = vmatprep.subr.mxu0 0.0
        %1545 = vmatpush1.msra.mxu0 0.0
        %1546 = vmatprep.subr.mxu0 0.0
        %1547 = vmatpush1.msra.mxu0 0.0
        %1548 = vmatprep.subr.mxu0 0.0
        %1549 = vmatpush1.msra.mxu0 0.0
        %1550 = vmatprep.subr.mxu0 0.0
        %1551 = vmatpush1.msra.mxu0 0.0
        %1552 = vmatprep.subr.mxu0 0.0
        %1553 = vmatpush1.msra.mxu0 0.0
        %1554 = vmatprep.mubr.f32.mxu0 0.0
        %1555 = vmatmul.mubr.f32.gmra.mrb[0].mxu0 %v1485
        %v1556 = vpop.f32.mrb[0].mxu0
        %v1557 = vadd.f32 %v1489, %v1556
        %v1558 = vpop.f32.mrb[0].mxu0
        %1559 = vdwg.mxu0
        %v1560 = vtanh.pop %v1557
        %v1561 = vsub.f32 %v1560, %v1485
        %v1562 = vmul.f32 %v330, %v1561
        %v1563 = vadd.f32 %v1485, %v1562
        %s1564 = scalar_lea.vmem %s309, 80 [#allocation7]
        %1565 = vst [vmem:[%s1564] sm:$0xff] %v1563
        %s1566 = scalar_lea.vmem [#allocation2], 88
        %v1567 = vld [vmem:[%s1566] sm:$0xff]
        %1568 = vmatprep.subr.mxu0 0.0
        %1569 = vmatpush1.msra.mxu0 %v693
        %1570 = vmatprep.subr.mxu0 0.0
        %1571 = vmatpush1.msra.mxu0 %v694
        %1572 = vmatprep.subr.mxu0 0.0
        %1573 = vmatpush1.msra.mxu0 %v695
        %1574 = vmatprep.subr.mxu0 0.0
        %1575 = vmatpush1.msra.mxu0 %v696
        %1576 = vmatprep.subr.mxu0 0.0
        %1577 = vmatpush1.msra.mxu0 %v697
        %1578 = vmatprep.subr.mxu0 0.0
        %1579 = vmatpush1.msra.mxu0 %v698
        %1580 = vmatprep.subr.mxu0 0.0
        %1581 = vmatpush1.msra.mxu0 %v699
        %1582 = vmatprep.subr.mxu0 0.0
        %1583 = vmatpush1.msra.mxu0 %v700
        %1584 = vmatprep.subr.mxu0 0.0
        %1585 = vmatpush1.msra.mxu0 %v701
        %1586 = vmatprep.subr.mxu0 0.0
        %1587 = vmatpush1.msra.mxu0 %v702
        %1588 = vmatprep.subr.mxu0 0.0
        %1589 = vmatpush1.msra.mxu0 %v703
        %1590 = vmatprep.subr.mxu0 0.0
        %1591 = vmatpush1.msra.mxu0 %v704
        %1592 = vmatprep.subr.mxu0 0.0
        %1593 = vmatpush1.msra.mxu0 %v705
        %1594 = vmatprep.subr.mxu0 0.0
        %1595 = vmatpush1.msra.mxu0 %v706
        %1596 = vmatprep.subr.mxu0 0.0
        %1597 = vmatpush1.msra.mxu0 %v707
        %1598 = vmatprep.subr.mxu0 0.0
        %1599 = vmatpush1.msra.mxu0 %v708
        %1600 = vmatprep.subr.mxu0 0.0
        %1601 = vmatpush1.msra.mxu0 0.0
        %1602 = vmatprep.subr.mxu0 0.0
        %1603 = vmatpush1.msra.mxu0 0.0
        %1604 = vmatprep.subr.mxu0 0.0
        %1605 = vmatpush1.msra.mxu0 0.0
        %1606 = vmatprep.subr.mxu0 0.0
        %1607 = vmatpush1.msra.mxu0 0.0
        %1608 = vmatprep.subr.mxu0 0.0
        %1609 = vmatpush1.msra.mxu0 0.0
        %1610 = vmatprep.subr.mxu0 0.0
        %1611 = vmatpush1.msra.mxu0 0.0
        %1612 = vmatprep.subr.mxu0 0.0
        %1613 = vmatpush1.msra.mxu0 0.0
        %1614 = vmatprep.subr.mxu0 0.0
        %1615 = vmatpush1.msra.mxu0 0.0
        %1616 = vmatprep.subr.mxu0 0.0
        %1617 = vmatpush1.msra.mxu0 0.0
        %1618 = vmatprep.subr.mxu0 0.0
        %1619 = vmatpush1.msra.mxu0 0.0
        %1620 = vmatprep.subr.mxu0 0.0
        %1621 = vmatpush1.msra.mxu0 0.0
        %1622 = vmatprep.subr.mxu0 0.0
        %1623 = vmatpush1.msra.mxu0 0.0
        %1624 = vmatprep.subr.mxu0 0.0
        %1625 = vmatpush1.msra.mxu0 0.0
        %1626 = vmatprep.subr.mxu0 0.0
        %1627 = vmatpush1.msra.mxu0 0.0
        %1628 = vmatprep.subr.mxu0 0.0
        %1629 = vmatpush1.msra.mxu0 0.0
        %1630 = vmatprep.subr.mxu0 0.0
        %1631 = vmatpush1.msra.mxu0 0.0
        %1632 = vmatprep.mubr.f32.mxu0 0.0
        %1633 = vmatmul.mubr.f32.gmra.mrb[0].mxu0 %v1563
        %v1634 = vpop.f32.mrb[0].mxu0
        %v1635 = vadd.f32 %v1567, %v1634
        %v1636 = vpop.f32.mrb[0].mxu0
        %1637 = vdwg.mxu0
        %v1638 = vtanh.pop %v1635
        %v1639 = vsub.f32 %v1638, %v1563
        %v1640 = vmul.f32 %v330, %v1639
        %v1641 = vadd.f32 %v1563, %v1640
        %s1642 = scalar_lea.vmem %s309, 88 [#allocation7]
        %1643 = vst [vmem:[%s1642] sm:$0xff] %v1641
        %s1644 = scalar_lea.vmem [#allocation2], 96
        %v1645 = vld [vmem:[%s1644] sm:$0xff]
        %1646 = vmatprep.subr.mxu0 0.0
        %1647 = vmatpush1.msra.mxu0 %v693
        %1648 = vmatprep.subr.mxu0 0.0
        %1649 = vmatpush1.msra.mxu0 %v694
        %1650 = vmatprep.subr.mxu0 0.0
        %1651 = vmatpush1.msra.mxu0 %v695
        %1652 = vmatprep.subr.mxu0 0.0
        %1653 = vmatpush1.msra.mxu0 %v696
        %1654 = vmatprep.subr.mxu0 0.0
        %1655 = vmatpush1.msra.mxu0 %v697
        %1656 = vmatprep.subr.mxu0 0.0
        %1657 = vmatpush1.msra.mxu0 %v698
        %1658 = vmatprep.subr.mxu0 0.0
        %1659 = vmatpush1.msra.mxu0 %v699
        %1660 = vmatprep.subr.mxu0 0.0
        %1661 = vmatpush1.msra.mxu0 %v700
        %1662 = vmatprep.subr.mxu0 0.0
        %1663 = vmatpush1.msra.mxu0 %v701
        %1664 = vmatprep.subr.mxu0 0.0
        %1665 = vmatpush1.msra.mxu0 %v702
        %1666 = vmatprep.subr.mxu0 0.0
        %1667 = vmatpush1.msra.mxu0 %v703
        %1668 = vmatprep.subr.mxu0 0.0
        %1669 = vmatpush1.msra.mxu0 %v704
        %1670 = vmatprep.subr.mxu0 0.0
        %1671 = vmatpush1.msra.mxu0 %v705
        %1672 = vmatprep.subr.mxu0 0.0
        %1673 = vmatpush1.msra.mxu0 %v706
        %1674 = vmatprep.subr.mxu0 0.0
        %1675 = vmatpush1.msra.mxu0 %v707
        %1676 = vmatprep.subr.mxu0 0.0
        %1677 = vmatpush1.msra.mxu0 %v708
        %1678 = vmatprep.subr.mxu0 0.0
        %1679 = vmatpush1.msra.mxu0 0.0
        %1680 = vmatprep.subr.mxu0 0.0
        %1681 = vmatpush1.msra.mxu0 0.0
        %1682 = vmatprep.subr.mxu0 0.0
        %1683 = vmatpush1.msra.mxu0 0.0
        %1684 = vmatprep.subr.mxu0 0.0
        %1685 = vmatpush1.msra.mxu0 0.0
        %1686 = vmatprep.subr.mxu0 0.0
        %1687 = vmatpush1.msra.mxu0 0.0
        %1688 = vmatprep.subr.mxu0 0.0
        %1689 = vmatpush1.msra.mxu0 0.0
        %1690 = vmatprep.subr.mxu0 0.0
        %1691 = vmatpush1.msra.mxu0 0.0
        %1692 = vmatprep.subr.mxu0 0.0
        %1693 = vmatpush1.msra.mxu0 0.0
        %1694 = vmatprep.subr.mxu0 0.0
        %1695 = vmatpush1.msra.mxu0 0.0
        %1696 = vmatprep.subr.mxu0 0.0
        %1697 = vmatpush1.msra.mxu0 0.0
        %1698 = vmatprep.subr.mxu0 0.0
        %1699 = vmatpush1.msra.mxu0 0.0
        %1700 = vmatprep.subr.mxu0 0.0
        %1701 = vmatpush1.msra.mxu0 0.0
        %1702 = vmatprep.subr.mxu0 0.0
        %1703 = vmatpush1.msra.mxu0 0.0
        %1704 = vmatprep.subr.mxu0 0.0
        %1705 = vmatpush1.msra.mxu0 0.0
        %1706 = vmatprep.subr.mxu0 0.0
        %1707 = vmatpush1.msra.mxu0 0.0
        %1708 = vmatprep.subr.mxu0 0.0
        %1709 = vmatpush1.msra.mxu0 0.0
        %1710 = vmatprep.mubr.f32.mxu0 0.0
        %1711 = vmatmul.mubr.f32.gmra.mrb[0].mxu0 %v1641
        %v1712 = vpop.f32.mrb[0].mxu0
        %v1713 = vadd.f32 %v1645, %v1712
        %v1714 = vpop.f32.mrb[0].mxu0
        %1715 = vdwg.mxu0
        %v1716 = vtanh.pop %v1713
        %v1717 = vsub.f32 %v1716, %v1641
        %v1718 = vmul.f32 %v330, %v1717
        %v1719 = vadd.f32 %v1641, %v1718
        %s1720 = scalar_lea.vmem %s309, 96 [#allocation7]
        %1721 = vst [vmem:[%s1720] sm:$0xff] %v1719
        %s1722 = scalar_lea.vmem [#allocation2], 104
        %v1723 = vld [vmem:[%s1722] sm:$0xff]
        %1724 = vmatprep.subr.mxu0 0.0
        %1725 = vmatpush1.msra.mxu0 %v693
        %1726 = vmatprep.subr.mxu0 0.0
        %1727 = vmatpush1.msra.mxu0 %v694
        %1728 = vmatprep.subr.mxu0 0.0
        %1729 = vmatpush1.msra.mxu0 %v695
        %1730 = vmatprep.subr.mxu0 0.0
        %1731 = vmatpush1.msra.mxu0 %v696
        %1732 = vmatprep.subr.mxu0 0.0
        %1733 = vmatpush1.msra.mxu0 %v697
        %1734 = vmatprep.subr.mxu0 0.0
        %1735 = vmatpush1.msra.mxu0 %v698
        %1736 = vmatprep.subr.mxu0 0.0
        %1737 = vmatpush1.msra.mxu0 %v699
        %1738 = vmatprep.subr.mxu0 0.0
        %1739 = vmatpush1.msra.mxu0 %v700
        %1740 = vmatprep.subr.mxu0 0.0
        %1741 = vmatpush1.msra.mxu0 %v701
        %1742 = vmatprep.subr.mxu0 0.0
        %1743 = vmatpush1.msra.mxu0 %v702
        %1744 = vmatprep.subr.mxu0 0.0
        %1745 = vmatpush1.msra.mxu0 %v703
        %1746 = vmatprep.subr.mxu0 0.0
        %1747 = vmatpush1.msra.mxu0 %v704
        %1748 = vmatprep.subr.mxu0 0.0
        %1749 = vmatpush1.msra.mxu0 %v705
        %1750 = vmatprep.subr.mxu0 0.0
        %1751 = vmatpush1.msra.mxu0 %v706
        %1752 = vmatprep.subr.mxu0 0.0
        %1753 = vmatpush1.msra.mxu0 %v707
        %1754 = vmatprep.subr.mxu0 0.0
        %1755 = vmatpush1.msra.mxu0 %v708
        %1756 = vmatprep.subr.mxu0 0.0
        %1757 = vmatpush1.msra.mxu0 0.0
        %1758 = vmatprep.subr.mxu0 0.0
        %1759 = vmatpush1.msra.mxu0 0.0
        %1760 = vmatprep.subr.mxu0 0.0
        %1761 = vmatpush1.msra.mxu0 0.0
        %1762 = vmatprep.subr.mxu0 0.0
        %1763 = vmatpush1.msra.mxu0 0.0
        %1764 = vmatprep.subr.mxu0 0.0
        %1765 = vmatpush1.msra.mxu0 0.0
        %1766 = vmatprep.subr.mxu0 0.0
        %1767 = vmatpush1.msra.mxu0 0.0
        %1768 = vmatprep.subr.mxu0 0.0
        %1769 = vmatpush1.msra.mxu0 0.0
        %1770 = vmatprep.subr.mxu0 0.0
        %1771 = vmatpush1.msra.mxu0 0.0
        %1772 = vmatprep.subr.mxu0 0.0
        %1773 = vmatpush1.msra.mxu0 0.0
        %1774 = vmatprep.subr.mxu0 0.0
        %1775 = vmatpush1.msra.mxu0 0.0
        %1776 = vmatprep.subr.mxu0 0.0
        %1777 = vmatpush1.msra.mxu0 0.0
        %1778 = vmatprep.subr.mxu0 0.0
        %1779 = vmatpush1.msra.mxu0 0.0
        %1780 = vmatprep.subr.mxu0 0.0
        %1781 = vmatpush1.msra.mxu0 0.0
        %1782 = vmatprep.subr.mxu0 0.0
        %1783 = vmatpush1.msra.mxu0 0.0
        %1784 = vmatprep.subr.mxu0 0.0
        %1785 = vmatpush1.msra.mxu0 0.0
        %1786 = vmatprep.subr.mxu0 0.0
        %1787 = vmatpush1.msra.mxu0 0.0
        %1788 = vmatprep.mubr.f32.mxu0 0.0
        %1789 = vmatmul.mubr.f32.gmra.mrb[0].mxu0 %v1719
        %v1790 = vpop.f32.mrb[0].mxu0
        %v1791 = vadd.f32 %v1723, %v1790
        %v1792 = vpop.f32.mrb[0].mxu0
        %1793 = vdwg.mxu0
        %v1794 = vtanh.pop %v1791
        %v1795 = vsub.f32 %v1794, %v1719
        %v1796 = vmul.f32 %v330, %v1795
        %v1797 = vadd.f32 %v1719, %v1796
        %s1798 = scalar_lea.vmem %s309, 104 [#allocation7]
        %1799 = vst [vmem:[%s1798] sm:$0xff] %v1797
        %s1800 = scalar_lea.vmem [#allocation2], 112
        %v1801 = vld [vmem:[%s1800] sm:$0xff]
        %1802 = vmatprep.subr.mxu0 0.0
        %1803 = vmatpush1.msra.mxu0 %v693
        %1804 = vmatprep.subr.mxu0 0.0
        %1805 = vmatpush1.msra.mxu0 %v694
        %1806 = vmatprep.subr.mxu0 0.0
        %1807 = vmatpush1.msra.mxu0 %v695
        %1808 = vmatprep.subr.mxu0 0.0
        %1809 = vmatpush1.msra.mxu0 %v696
        %1810 = vmatprep.subr.mxu0 0.0
        %1811 = vmatpush1.msra.mxu0 %v697
        %1812 = vmatprep.subr.mxu0 0.0
        %1813 = vmatpush1.msra.mxu0 %v698
        %1814 = vmatprep.subr.mxu0 0.0
        %1815 = vmatpush1.msra.mxu0 %v699
        %1816 = vmatprep.subr.mxu0 0.0
        %1817 = vmatpush1.msra.mxu0 %v700
        %1818 = vmatprep.subr.mxu0 0.0
        %1819 = vmatpush1.msra.mxu0 %v701
        %1820 = vmatprep.subr.mxu0 0.0
        %1821 = vmatpush1.msra.mxu0 %v702
        %1822 = vmatprep.subr.mxu0 0.0
        %1823 = vmatpush1.msra.mxu0 %v703
        %1824 = vmatprep.subr.mxu0 0.0
        %1825 = vmatpush1.msra.mxu0 %v704
        %1826 = vmatprep.subr.mxu0 0.0
        %1827 = vmatpush1.msra.mxu0 %v705
        %1828 = vmatprep.subr.mxu0 0.0
        %1829 = vmatpush1.msra.mxu0 %v706
        %1830 = vmatprep.subr.mxu0 0.0
        %1831 = vmatpush1.msra.mxu0 %v707
        %1832 = vmatprep.subr.mxu0 0.0
        %1833 = vmatpush1.msra.mxu0 %v708
        %1834 = vmatprep.subr.mxu0 0.0
        %1835 = vmatpush1.msra.mxu0 0.0
        %1836 = vmatprep.subr.mxu0 0.0
        %1837 = vmatpush1.msra.mxu0 0.0
        %1838 = vmatprep.subr.mxu0 0.0
        %1839 = vmatpush1.msra.mxu0 0.0
        %1840 = vmatprep.subr.mxu0 0.0
        %1841 = vmatpush1.msra.mxu0 0.0
        %1842 = vmatprep.subr.mxu0 0.0
        %1843 = vmatpush1.msra.mxu0 0.0
        %1844 = vmatprep.subr.mxu0 0.0
        %1845 = vmatpush1.msra.mxu0 0.0
        %1846 = vmatprep.subr.mxu0 0.0
        %1847 = vmatpush1.msra.mxu0 0.0
        %1848 = vmatprep.subr.mxu0 0.0
        %1849 = vmatpush1.msra.mxu0 0.0
        %1850 = vmatprep.subr.mxu0 0.0
        %1851 = vmatpush1.msra.mxu0 0.0
        %1852 = vmatprep.subr.mxu0 0.0
        %1853 = vmatpush1.msra.mxu0 0.0
        %1854 = vmatprep.subr.mxu0 0.0
        %1855 = vmatpush1.msra.mxu0 0.0
        %1856 = vmatprep.subr.mxu0 0.0
        %1857 = vmatpush1.msra.mxu0 0.0
        %1858 = vmatprep.subr.mxu0 0.0
        %1859 = vmatpush1.msra.mxu0 0.0
        %1860 = vmatprep.subr.mxu0 0.0
        %1861 = vmatpush1.msra.mxu0 0.0
        %1862 = vmatprep.subr.mxu0 0.0
        %1863 = vmatpush1.msra.mxu0 0.0
        %1864 = vmatprep.subr.mxu0 0.0
        %1865 = vmatpush1.msra.mxu0 0.0
        %1866 = vmatprep.mubr.f32.mxu0 0.0
        %1867 = vmatmul.mubr.f32.gmra.mrb[0].mxu0 %v1797
        %v1868 = vpop.f32.mrb[0].mxu0
        %v1869 = vadd.f32 %v1801, %v1868
        %v1870 = vpop.f32.mrb[0].mxu0
        %1871 = vdwg.mxu0
        %v1872 = vtanh.pop %v1869
        %v1873 = vsub.f32 %v1872, %v1797
        %v1874 = vmul.f32 %v330, %v1873
        %v1875 = vadd.f32 %v1797, %v1874
        %s1876 = scalar_lea.vmem %s309, 112 [#allocation7]
        %1877 = vst [vmem:[%s1876] sm:$0xff] %v1875
        %s1878 = scalar_lea.vmem [#allocation2], 120
        %v1879 = vld [vmem:[%s1878] sm:$0xff]
        %1880 = vmatprep.subr.mxu0 0.0
        %1881 = vmatpush1.msra.mxu0 %v693
        %1882 = vmatprep.subr.mxu0 0.0
        %1883 = vmatpush1.msra.mxu0 %v694
        %1884 = vmatprep.subr.mxu0 0.0
        %1885 = vmatpush1.msra.mxu0 %v695
        %1886 = vmatprep.subr.mxu0 0.0
        %1887 = vmatpush1.msra.mxu0 %v696
        %1888 = vmatprep.subr.mxu0 0.0
        %1889 = vmatpush1.msra.mxu0 %v697
        %1890 = vmatprep.subr.mxu0 0.0
        %1891 = vmatpush1.msra.mxu0 %v698
        %1892 = vmatprep.subr.mxu0 0.0
        %1893 = vmatpush1.msra.mxu0 %v699
        %1894 = vmatprep.subr.mxu0 0.0
        %1895 = vmatpush1.msra.mxu0 %v700
        %1896 = vmatprep.subr.mxu0 0.0
        %1897 = vmatpush1.msra.mxu0 %v701
        %1898 = vmatprep.subr.mxu0 0.0
        %1899 = vmatpush1.msra.mxu0 %v702
        %1900 = vmatprep.subr.mxu0 0.0
        %1901 = vmatpush1.msra.mxu0 %v703
        %1902 = vmatprep.subr.mxu0 0.0
        %1903 = vmatpush1.msra.mxu0 %v704
        %1904 = vmatprep.subr.mxu0 0.0
        %1905 = vmatpush1.msra.mxu0 %v705
        %1906 = vmatprep.subr.mxu0 0.0
        %1907 = vmatpush1.msra.mxu0 %v706
        %1908 = vmatprep.subr.mxu0 0.0
        %1909 = vmatpush1.msra.mxu0 %v707
        %1910 = vmatprep.subr.mxu0 0.0
        %1911 = vmatpush1.msra.mxu0 %v708
        %1912 = vmatprep.subr.mxu0 0.0
        %1913 = vmatpush1.msra.mxu0 0.0
        %1914 = vmatprep.subr.mxu0 0.0
        %1915 = vmatpush1.msra.mxu0 0.0
        %1916 = vmatprep.subr.mxu0 0.0
        %1917 = vmatpush1.msra.mxu0 0.0
        %1918 = vmatprep.subr.mxu0 0.0
        %1919 = vmatpush1.msra.mxu0 0.0
        %1920 = vmatprep.subr.mxu0 0.0
        %1921 = vmatpush1.msra.mxu0 0.0
        %1922 = vmatprep.subr.mxu0 0.0
        %1923 = vmatpush1.msra.mxu0 0.0
        %1924 = vmatprep.subr.mxu0 0.0
        %1925 = vmatpush1.msra.mxu0 0.0
        %1926 = vmatprep.subr.mxu0 0.0
        %1927 = vmatpush1.msra.mxu0 0.0
        %1928 = vmatprep.subr.mxu0 0.0
        %1929 = vmatpush1.msra.mxu0 0.0
        %1930 = vmatprep.subr.mxu0 0.0
        %1931 = vmatpush1.msra.mxu0 0.0
        %1932 = vmatprep.subr.mxu0 0.0
        %1933 = vmatpush1.msra.mxu0 0.0
        %1934 = vmatprep.subr.mxu0 0.0
        %1935 = vmatpush1.msra.mxu0 0.0
        %1936 = vmatprep.subr.mxu0 0.0
        %1937 = vmatpush1.msra.mxu0 0.0
        %1938 = vmatprep.subr.mxu0 0.0
        %1939 = vmatpush1.msra.mxu0 0.0
        %1940 = vmatprep.subr.mxu0 0.0
        %1941 = vmatpush1.msra.mxu0 0.0
        %1942 = vmatprep.subr.mxu0 0.0
        %1943 = vmatpush1.msra.mxu0 0.0
        %1944 = vmatprep.mubr.f32.mxu0 0.0
        %1945 = vmatmul.mubr.f32.gmra.mrb[0].mxu0 %v1875
        %v1946 = vpop.f32.mrb[0].mxu0
        %v1947 = vadd.f32 %v1879, %v1946
        %v1948 = vpop.f32.mrb[0].mxu0
        %1949 = vdwg.mxu0
        %v1950 = vtanh.pop %v1947
        %v1951 = vsub.f32 %v1950, %v1875
        %v1952 = vmul.f32 %v330, %v1951
        %v1953 = vadd.f32 %v1875, %v1952
        %s1954 = scalar_lea.vmem %s309, 120 [#allocation7]
        %1955 = vst [vmem:[%s1954] sm:$0xff] %v1953
        %s1956 = scalar_lea.vmem [#allocation2], 128
        %v1957 = vld [vmem:[%s1956] sm:$0xff]
        %1958 = vmatprep.subr.mxu0 0.0
        %1959 = vmatpush1.msra.mxu0 %v693
        %1960 = vmatprep.subr.mxu0 0.0
        %1961 = vmatpush1.msra.mxu0 %v694
        %1962 = vmatprep.subr.mxu0 0.0
        %1963 = vmatpush1.msra.mxu0 %v695
        %1964 = vmatprep.subr.mxu0 0.0
        %1965 = vmatpush1.msra.mxu0 %v696
        %1966 = vmatprep.subr.mxu0 0.0
        %1967 = vmatpush1.msra.mxu0 %v697
        %1968 = vmatprep.subr.mxu0 0.0
        %1969 = vmatpush1.msra.mxu0 %v698
        %1970 = vmatprep.subr.mxu0 0.0
        %1971 = vmatpush1.msra.mxu0 %v699
        %1972 = vmatprep.subr.mxu0 0.0
        %1973 = vmatpush1.msra.mxu0 %v700
        %1974 = vmatprep.subr.mxu0 0.0
        %1975 = vmatpush1.msra.mxu0 %v701
        %1976 = vmatprep.subr.mxu0 0.0
        %1977 = vmatpush1.msra.mxu0 %v702
        %1978 = vmatprep.subr.mxu0 0.0
        %1979 = vmatpush1.msra.mxu0 %v703
        %1980 = vmatprep.subr.mxu0 0.0
        %1981 = vmatpush1.msra.mxu0 %v704
        %1982 = vmatprep.subr.mxu0 0.0
        %1983 = vmatpush1.msra.mxu0 %v705
        %1984 = vmatprep.subr.mxu0 0.0
        %1985 = vmatpush1.msra.mxu0 %v706
        %1986 = vmatprep.subr.mxu0 0.0
        %1987 = vmatpush1.msra.mxu0 %v707
        %1988 = vmatprep.subr.mxu0 0.0
        %1989 = vmatpush1.msra.mxu0 %v708
        %1990 = vmatprep.subr.mxu0 0.0
        %1991 = vmatpush1.msra.mxu0 0.0
        %1992 = vmatprep.subr.mxu0 0.0
        %1993 = vmatpush1.msra.mxu0 0.0
        %1994 = vmatprep.subr.mxu0 0.0
        %1995 = vmatpush1.msra.mxu0 0.0
        %1996 = vmatprep.subr.mxu0 0.0
        %1997 = vmatpush1.msra.mxu0 0.0
        %1998 = vmatprep.subr.mxu0 0.0
        %1999 = vmatpush1.msra.mxu0 0.0
        %2000 = vmatprep.subr.mxu0 0.0
        %2001 = vmatpush1.msra.mxu0 0.0
        %2002 = vmatprep.subr.mxu0 0.0
        %2003 = vmatpush1.msra.mxu0 0.0
        %2004 = vmatprep.subr.mxu0 0.0
        %2005 = vmatpush1.msra.mxu0 0.0
        %2006 = vmatprep.subr.mxu0 0.0
        %2007 = vmatpush1.msra.mxu0 0.0
        %2008 = vmatprep.subr.mxu0 0.0
        %2009 = vmatpush1.msra.mxu0 0.0
        %2010 = vmatprep.subr.mxu0 0.0
        %2011 = vmatpush1.msra.mxu0 0.0
        %2012 = vmatprep.subr.mxu0 0.0
        %2013 = vmatpush1.msra.mxu0 0.0
        %2014 = vmatprep.subr.mxu0 0.0
        %2015 = vmatpush1.msra.mxu0 0.0
        %2016 = vmatprep.subr.mxu0 0.0
        %2017 = vmatpush1.msra.mxu0 0.0
        %2018 = vmatprep.subr.mxu0 0.0
        %2019 = vmatpush1.msra.mxu0 0.0
        %2020 = vmatprep.subr.mxu0 0.0
        %2021 = vmatpush1.msra.mxu0 0.0
        %2022 = vmatprep.mubr.f32.mxu0 0.0
        %2023 = vmatmul.mubr.f32.gmra.mrb[0].mxu0 %v1953
        %v2024 = vpop.f32.mrb[0].mxu0
        %v2025 = vadd.f32 %v1957, %v2024
        %v2026 = vpop.f32.mrb[0].mxu0
        %2027 = vdwg.mxu0
        %v2028 = vtanh.pop %v2025
        %v2029 = vsub.f32 %v2028, %v1953
        %v2030 = vmul.f32 %v330, %v2029
        %v2031 = vadd.f32 %v1953, %v2030
        %s2032 = scalar_lea.vmem %s309, 128 [#allocation7]
        %2033 = vst [vmem:[%s2032] sm:$0xff] %v2031
        %s2034 = scalar_lea.vmem [#allocation2], 136
        %v2035 = vld [vmem:[%s2034] sm:$0xff]
        %2036 = vmatprep.subr.mxu0 0.0
        %2037 = vmatpush1.msra.mxu0 %v693
        %2038 = vmatprep.subr.mxu0 0.0
        %2039 = vmatpush1.msra.mxu0 %v694
        %2040 = vmatprep.subr.mxu0 0.0
        %2041 = vmatpush1.msra.mxu0 %v695
        %2042 = vmatprep.subr.mxu0 0.0
        %2043 = vmatpush1.msra.mxu0 %v696
        %2044 = vmatprep.subr.mxu0 0.0
        %2045 = vmatpush1.msra.mxu0 %v697
        %2046 = vmatprep.subr.mxu0 0.0
        %2047 = vmatpush1.msra.mxu0 %v698
        %2048 = vmatprep.subr.mxu0 0.0
        %2049 = vmatpush1.msra.mxu0 %v699
        %2050 = vmatprep.subr.mxu0 0.0
        %2051 = vmatpush1.msra.mxu0 %v700
        %2052 = vmatprep.subr.mxu0 0.0
        %2053 = vmatpush1.msra.mxu0 %v701
        %2054 = vmatprep.subr.mxu0 0.0
        %2055 = vmatpush1.msra.mxu0 %v702
        %2056 = vmatprep.subr.mxu0 0.0
        %2057 = vmatpush1.msra.mxu0 %v703
        %2058 = vmatprep.subr.mxu0 0.0
        %2059 = vmatpush1.msra.mxu0 %v704
        %2060 = vmatprep.subr.mxu0 0.0
        %2061 = vmatpush1.msra.mxu0 %v705
        %2062 = vmatprep.subr.mxu0 0.0
        %2063 = vmatpush1.msra.mxu0 %v706
        %2064 = vmatprep.subr.mxu0 0.0
        %2065 = vmatpush1.msra.mxu0 %v707
        %2066 = vmatprep.subr.mxu0 0.0
        %2067 = vmatpush1.msra.mxu0 %v708
        %2068 = vmatprep.subr.mxu0 0.0
        %2069 = vmatpush1.msra.mxu0 0.0
        %2070 = vmatprep.subr.mxu0 0.0
        %2071 = vmatpush1.msra.mxu0 0.0
        %2072 = vmatprep.subr.mxu0 0.0
        %2073 = vmatpush1.msra.mxu0 0.0
        %2074 = vmatprep.subr.mxu0 0.0
        %2075 = vmatpush1.msra.mxu0 0.0
        %2076 = vmatprep.subr.mxu0 0.0
        %2077 = vmatpush1.msra.mxu0 0.0
        %2078 = vmatprep.subr.mxu0 0.0
        %2079 = vmatpush1.msra.mxu0 0.0
        %2080 = vmatprep.subr.mxu0 0.0
        %2081 = vmatpush1.msra.mxu0 0.0
        %2082 = vmatprep.subr.mxu0 0.0
        %2083 = vmatpush1.msra.mxu0 0.0
        %2084 = vmatprep.subr.mxu0 0.0
        %2085 = vmatpush1.msra.mxu0 0.0
        %2086 = vmatprep.subr.mxu0 0.0
        %2087 = vmatpush1.msra.mxu0 0.0
        %2088 = vmatprep.subr.mxu0 0.0
        %2089 = vmatpush1.msra.mxu0 0.0
        %2090 = vmatprep.subr.mxu0 0.0
        %2091 = vmatpush1.msra.mxu0 0.0
        %2092 = vmatprep.subr.mxu0 0.0
        %2093 = vmatpush1.msra.mxu0 0.0
        %2094 = vmatprep.subr.mxu0 0.0
        %2095 = vmatpush1.msra.mxu0 0.0
        %2096 = vmatprep.subr.mxu0 0.0
        %2097 = vmatpush1.msra.mxu0 0.0
        %2098 = vmatprep.subr.mxu0 0.0
        %2099 = vmatpush1.msra.mxu0 0.0
        %2100 = vmatprep.mubr.f32.mxu0 0.0
        %2101 = vmatmul.mubr.f32.gmra.mrb[0].mxu0 %v2031
        %v2102 = vpop.f32.mrb[0].mxu0
        %v2103 = vadd.f32 %v2035, %v2102
        %v2104 = vpop.f32.mrb[0].mxu0
        %2105 = vdwg.mxu0
        %v2106 = vtanh.pop %v2103
        %v2107 = vsub.f32 %v2106, %v2031
        %v2108 = vmul.f32 %v330, %v2107
        %v2109 = vadd.f32 %v2031, %v2108
        %s2110 = scalar_lea.vmem %s309, 136 [#allocation7]
        %2111 = vst [vmem:[%s2110] sm:$0xff] %v2109
        %s2112 = scalar_lea.vmem [#allocation2], 144
        %v2113 = vld [vmem:[%s2112] sm:$0xff]
        %2114 = vmatprep.subr.mxu0 0.0
        %2115 = vmatpush1.msra.mxu0 %v693
        %2116 = vmatprep.subr.mxu0 0.0
        %2117 = vmatpush1.msra.mxu0 %v694
        %2118 = vmatprep.subr.mxu0 0.0
        %2119 = vmatpush1.msra.mxu0 %v695
        %2120 = vmatprep.subr.mxu0 0.0
        %2121 = vmatpush1.msra.mxu0 %v696
        %2122 = vmatprep.subr.mxu0 0.0
        %2123 = vmatpush1.msra.mxu0 %v697
        %2124 = vmatprep.subr.mxu0 0.0
        %2125 = vmatpush1.msra.mxu0 %v698
        %2126 = vmatprep.subr.mxu0 0.0
        %2127 = vmatpush1.msra.mxu0 %v699
        %2128 = vmatprep.subr.mxu0 0.0
        %2129 = vmatpush1.msra.mxu0 %v700
        %2130 = vmatprep.subr.mxu0 0.0
        %2131 = vmatpush1.msra.mxu0 %v701
        %2132 = vmatprep.subr.mxu0 0.0
        %2133 = vmatpush1.msra.mxu0 %v702
        %2134 = vmatprep.subr.mxu0 0.0
        %2135 = vmatpush1.msra.mxu0 %v703
        %2136 = vmatprep.subr.mxu0 0.0
        %2137 = vmatpush1.msra.mxu0 %v704
        %2138 = vmatprep.subr.mxu0 0.0
        %2139 = vmatpush1.msra.mxu0 %v705
        %2140 = vmatprep.subr.mxu0 0.0
        %2141 = vmatpush1.msra.mxu0 %v706
        %2142 = vmatprep.subr.mxu0 0.0
        %2143 = vmatpush1.msra.mxu0 %v707
        %2144 = vmatprep.subr.mxu0 0.0
        %2145 = vmatpush1.msra.mxu0 %v708
        %2146 = vmatprep.subr.mxu0 0.0
        %2147 = vmatpush1.msra.mxu0 0.0
        %2148 = vmatprep.subr.mxu0 0.0
        %2149 = vmatpush1.msra.mxu0 0.0
        %2150 = vmatprep.subr.mxu0 0.0
        %2151 = vmatpush1.msra.mxu0 0.0
        %2152 = vmatprep.subr.mxu0 0.0
        %2153 = vmatpush1.msra.mxu0 0.0
        %2154 = vmatprep.subr.mxu0 0.0
        %2155 = vmatpush1.msra.mxu0 0.0
        %2156 = vmatprep.subr.mxu0 0.0
        %2157 = vmatpush1.msra.mxu0 0.0
        %2158 = vmatprep.subr.mxu0 0.0
        %2159 = vmatpush1.msra.mxu0 0.0
        %2160 = vmatprep.subr.mxu0 0.0
        %2161 = vmatpush1.msra.mxu0 0.0
        %2162 = vmatprep.subr.mxu0 0.0
        %2163 = vmatpush1.msra.mxu0 0.0
        %2164 = vmatprep.subr.mxu0 0.0
        %2165 = vmatpush1.msra.mxu0 0.0
        %2166 = vmatprep.subr.mxu0 0.0
        %2167 = vmatpush1.msra.mxu0 0.0
        %2168 = vmatprep.subr.mxu0 0.0
        %2169 = vmatpush1.msra.mxu0 0.0
        %2170 = vmatprep.subr.mxu0 0.0
        %2171 = vmatpush1.msra.mxu0 0.0
        %2172 = vmatprep.subr.mxu0 0.0
        %2173 = vmatpush1.msra.mxu0 0.0
        %2174 = vmatprep.subr.mxu0 0.0
        %2175 = vmatpush1.msra.mxu0 0.0
        %2176 = vmatprep.subr.mxu0 0.0
        %2177 = vmatpush1.msra.mxu0 0.0
        %2178 = vmatprep.mubr.f32.mxu0 0.0
        %2179 = vmatmul.mubr.f32.gmra.mrb[0].mxu0 %v2109
        %v2180 = vpop.f32.mrb[0].mxu0
        %v2181 = vadd.f32 %v2113, %v2180
        %v2182 = vpop.f32.mrb[0].mxu0
        %2183 = vdwg.mxu0
        %v2184 = vtanh.pop %v2181
        %v2185 = vsub.f32 %v2184, %v2109
        %v2186 = vmul.f32 %v330, %v2185
        %v2187 = vadd.f32 %v2109, %v2186
        %s2188 = scalar_lea.vmem %s309, 144 [#allocation7]
        %2189 = vst [vmem:[%s2188] sm:$0xff] %v2187
        %s2190 = scalar_lea.vmem [#allocation2], 152
        %v2191 = vld [vmem:[%s2190] sm:$0xff]
        %2192 = vmatprep.subr.mxu0 0.0
        %2193 = vmatpush1.msra.mxu0 %v693
        %2194 = vmatprep.subr.mxu0 0.0
        %2195 = vmatpush1.msra.mxu0 %v694
        %2196 = vmatprep.subr.mxu0 0.0
        %2197 = vmatpush1.msra.mxu0 %v695
        %2198 = vmatprep.subr.mxu0 0.0
        %2199 = vmatpush1.msra.mxu0 %v696
        %2200 = vmatprep.subr.mxu0 0.0
        %2201 = vmatpush1.msra.mxu0 %v697
        %2202 = vmatprep.subr.mxu0 0.0
        %2203 = vmatpush1.msra.mxu0 %v698
        %2204 = vmatprep.subr.mxu0 0.0
        %2205 = vmatpush1.msra.mxu0 %v699
        %2206 = vmatprep.subr.mxu0 0.0
        %2207 = vmatpush1.msra.mxu0 %v700
        %2208 = vmatprep.subr.mxu0 0.0
        %2209 = vmatpush1.msra.mxu0 %v701
        %2210 = vmatprep.subr.mxu0 0.0
        %2211 = vmatpush1.msra.mxu0 %v702
        %2212 = vmatprep.subr.mxu0 0.0
        %2213 = vmatpush1.msra.mxu0 %v703
        %2214 = vmatprep.subr.mxu0 0.0
        %2215 = vmatpush1.msra.mxu0 %v704
        %2216 = vmatprep.subr.mxu0 0.0
        %2217 = vmatpush1.msra.mxu0 %v705
        %2218 = vmatprep.subr.mxu0 0.0
        %2219 = vmatpush1.msra.mxu0 %v706
        %2220 = vmatprep.subr.mxu0 0.0
        %2221 = vmatpush1.msra.mxu0 %v707
        %2222 = vmatprep.subr.mxu0 0.0
        %2223 = vmatpush1.msra.mxu0 %v708
        %2224 = vmatprep.subr.mxu0 0.0
        %2225 = vmatpush1.msra.mxu0 0.0
        %2226 = vmatprep.subr.mxu0 0.0
        %2227 = vmatpush1.msra.mxu0 0.0
        %2228 = vmatprep.subr.mxu0 0.0
        %2229 = vmatpush1.msra.mxu0 0.0
        %2230 = vmatprep.subr.mxu0 0.0
        %2231 = vmatpush1.msra.mxu0 0.0
        %2232 = vmatprep.subr.mxu0 0.0
        %2233 = vmatpush1.msra.mxu0 0.0
        %2234 = vmatprep.subr.mxu0 0.0
        %2235 = vmatpush1.msra.mxu0 0.0
        %2236 = vmatprep.subr.mxu0 0.0
        %2237 = vmatpush1.msra.mxu0 0.0
        %2238 = vmatprep.subr.mxu0 0.0
        %2239 = vmatpush1.msra.mxu0 0.0
        %2240 = vmatprep.subr.mxu0 0.0
        %2241 = vmatpush1.msra.mxu0 0.0
        %2242 = vmatprep.subr.mxu0 0.0
        %2243 = vmatpush1.msra.mxu0 0.0
        %2244 = vmatprep.subr.mxu0 0.0
        %2245 = vmatpush1.msra.mxu0 0.0
        %2246 = vmatprep.subr.mxu0 0.0
        %2247 = vmatpush1.msra.mxu0 0.0
        %2248 = vmatprep.subr.mxu0 0.0
        %2249 = vmatpush1.msra.mxu0 0.0
        %2250 = vmatprep.subr.mxu0 0.0
        %2251 = vmatpush1.msra.mxu0 0.0
        %2252 = vmatprep.subr.mxu0 0.0
        %2253 = vmatpush1.msra.mxu0 0.0
        %2254 = vmatprep.subr.mxu0 0.0
        %2255 = vmatpush1.msra.mxu0 0.0
        %2256 = vmatprep.mubr.f32.mxu0 0.0
        %2257 = vmatmul.mubr.f32.gmra.mrb[0].mxu0 %v2187
        %v2258 = vpop.f32.mrb[0].mxu0
        %v2259 = vadd.f32 %v2191, %v2258
        %v2260 = vpop.f32.mrb[0].mxu0
        %2261 = vdwg.mxu0
        %v2262 = vtanh.pop %v2259
        %v2263 = vsub.f32 %v2262, %v2187
        %v2264 = vmul.f32 %v330, %v2263
        %v2265 = vadd.f32 %v2187, %v2264
        %s2266 = scalar_lea.vmem %s309, 152 [#allocation7]
        %2267 = vst [vmem:[%s2266] sm:$0xff] %v2265
        %s2268 = scalar_lea.vmem [#allocation2], 160
        %v2269 = vld [vmem:[%s2268] sm:$0xff]
        %2270 = vmatprep.subr.mxu0 0.0
        %2271 = vmatpush1.msra.mxu0 %v693
        %2272 = vmatprep.subr.mxu0 0.0
        %2273 = vmatpush1.msra.mxu0 %v694
        %2274 = vmatprep.subr.mxu0 0.0
        %2275 = vmatpush1.msra.mxu0 %v695
        %2276 = vmatprep.subr.mxu0 0.0
        %2277 = vmatpush1.msra.mxu0 %v696
        %2278 = vmatprep.subr.mxu0 0.0
        %2279 = vmatpush1.msra.mxu0 %v697
        %2280 = vmatprep.subr.mxu0 0.0
        %2281 = vmatpush1.msra.mxu0 %v698
        %2282 = vmatprep.subr.mxu0 0.0
        %2283 = vmatpush1.msra.mxu0 %v699
        %2284 = vmatprep.subr.mxu0 0.0
        %2285 = vmatpush1.msra.mxu0 %v700
        %2286 = vmatprep.subr.mxu0 0.0
        %2287 = vmatpush1.msra.mxu0 %v701
        %2288 = vmatprep.subr.mxu0 0.0
        %2289 = vmatpush1.msra.mxu0 %v702
        %2290 = vmatprep.subr.mxu0 0.0
        %2291 = vmatpush1.msra.mxu0 %v703
        %2292 = vmatprep.subr.mxu0 0.0
        %2293 = vmatpush1.msra.mxu0 %v704
        %2294 = vmatprep.subr.mxu0 0.0
        %2295 = vmatpush1.msra.mxu0 %v705
        %2296 = vmatprep.subr.mxu0 0.0
        %2297 = vmatpush1.msra.mxu0 %v706
        %2298 = vmatprep.subr.mxu0 0.0
        %2299 = vmatpush1.msra.mxu0 %v707
        %2300 = vmatprep.subr.mxu0 0.0
        %2301 = vmatpush1.msra.mxu0 %v708
        %2302 = vmatprep.subr.mxu0 0.0
        %2303 = vmatpush1.msra.mxu0 0.0
        %2304 = vmatprep.subr.mxu0 0.0
        %2305 = vmatpush1.msra.mxu0 0.0
        %2306 = vmatprep.subr.mxu0 0.0
        %2307 = vmatpush1.msra.mxu0 0.0
        %2308 = vmatprep.subr.mxu0 0.0
        %2309 = vmatpush1.msra.mxu0 0.0
        %2310 = vmatprep.subr.mxu0 0.0
        %2311 = vmatpush1.msra.mxu0 0.0
        %2312 = vmatprep.subr.mxu0 0.0
        %2313 = vmatpush1.msra.mxu0 0.0
        %2314 = vmatprep.subr.mxu0 0.0
        %2315 = vmatpush1.msra.mxu0 0.0
        %2316 = vmatprep.subr.mxu0 0.0
        %2317 = vmatpush1.msra.mxu0 0.0
        %2318 = vmatprep.subr.mxu0 0.0
        %2319 = vmatpush1.msra.mxu0 0.0
        %2320 = vmatprep.subr.mxu0 0.0
        %2321 = vmatpush1.msra.mxu0 0.0
        %2322 = vmatprep.subr.mxu0 0.0
        %2323 = vmatpush1.msra.mxu0 0.0
        %2324 = vmatprep.subr.mxu0 0.0
        %2325 = vmatpush1.msra.mxu0 0.0
        %2326 = vmatprep.subr.mxu0 0.0
        %2327 = vmatpush1.msra.mxu0 0.0
        %2328 = vmatprep.subr.mxu0 0.0
        %2329 = vmatpush1.msra.mxu0 0.0
        %2330 = vmatprep.subr.mxu0 0.0
        %2331 = vmatpush1.msra.mxu0 0.0
        %2332 = vmatprep.subr.mxu0 0.0
        %2333 = vmatpush1.msra.mxu0 0.0
        %2334 = vmatprep.mubr.f32.mxu0 0.0
        %2335 = vmatmul.mubr.f32.gmra.mrb[0].mxu0 %v2265
        %v2336 = vpop.f32.mrb[0].mxu0
        %v2337 = vadd.f32 %v2269, %v2336
        %v2338 = vpop.f32.mrb[0].mxu0
        %2339 = vdwg.mxu0
        %v2340 = vtanh.pop %v2337
        %v2341 = vsub.f32 %v2340, %v2265
        %v2342 = vmul.f32 %v330, %v2341
        %v2343 = vadd.f32 %v2265, %v2342
        %s2344 = scalar_lea.vmem %s309, 160 [#allocation7]
        %2345 = vst [vmem:[%s2344] sm:$0xff] %v2343
        %s2346 = scalar_lea.vmem [#allocation2], 168
        %v2347 = vld [vmem:[%s2346] sm:$0xff]
        %2348 = vmatprep.subr.mxu0 0.0
        %2349 = vmatpush1.msra.mxu0 %v693
        %2350 = vmatprep.subr.mxu0 0.0
        %2351 = vmatpush1.msra.mxu0 %v694
        %2352 = vmatprep.subr.mxu0 0.0
        %2353 = vmatpush1.msra.mxu0 %v695
        %2354 = vmatprep.subr.mxu0 0.0
        %2355 = vmatpush1.msra.mxu0 %v696
        %2356 = vmatprep.subr.mxu0 0.0
        %2357 = vmatpush1.msra.mxu0 %v697
        %2358 = vmatprep.subr.mxu0 0.0
        %2359 = vmatpush1.msra.mxu0 %v698
        %2360 = vmatprep.subr.mxu0 0.0
        %2361 = vmatpush1.msra.mxu0 %v699
        %2362 = vmatprep.subr.mxu0 0.0
        %2363 = vmatpush1.msra.mxu0 %v700
        %2364 = vmatprep.subr.mxu0 0.0
        %2365 = vmatpush1.msra.mxu0 %v701
        %2366 = vmatprep.subr.mxu0 0.0
        %2367 = vmatpush1.msra.mxu0 %v702
        %2368 = vmatprep.subr.mxu0 0.0
        %2369 = vmatpush1.msra.mxu0 %v703
        %2370 = vmatprep.subr.mxu0 0.0
        %2371 = vmatpush1.msra.mxu0 %v704
        %2372 = vmatprep.subr.mxu0 0.0
        %2373 = vmatpush1.msra.mxu0 %v705
        %2374 = vmatprep.subr.mxu0 0.0
        %2375 = vmatpush1.msra.mxu0 %v706
        %2376 = vmatprep.subr.mxu0 0.0
        %2377 = vmatpush1.msra.mxu0 %v707
        %2378 = vmatprep.subr.mxu0 0.0
        %2379 = vmatpush1.msra.mxu0 %v708
        %2380 = vmatprep.subr.mxu0 0.0
        %2381 = vmatpush1.msra.mxu0 0.0
        %2382 = vmatprep.subr.mxu0 0.0
        %2383 = vmatpush1.msra.mxu0 0.0
        %2384 = vmatprep.subr.mxu0 0.0
        %2385 = vmatpush1.msra.mxu0 0.0
        %2386 = vmatprep.subr.mxu0 0.0
        %2387 = vmatpush1.msra.mxu0 0.0
        %2388 = vmatprep.subr.mxu0 0.0
        %2389 = vmatpush1.msra.mxu0 0.0
        %2390 = vmatprep.subr.mxu0 0.0
        %2391 = vmatpush1.msra.mxu0 0.0
        %2392 = vmatprep.subr.mxu0 0.0
        %2393 = vmatpush1.msra.mxu0 0.0
        %2394 = vmatprep.subr.mxu0 0.0
        %2395 = vmatpush1.msra.mxu0 0.0
        %2396 = vmatprep.subr.mxu0 0.0
        %2397 = vmatpush1.msra.mxu0 0.0
        %2398 = vmatprep.subr.mxu0 0.0
        %2399 = vmatpush1.msra.mxu0 0.0
        %2400 = vmatprep.subr.mxu0 0.0
        %2401 = vmatpush1.msra.mxu0 0.0
        %2402 = vmatprep.subr.mxu0 0.0
        %2403 = vmatpush1.msra.mxu0 0.0
        %2404 = vmatprep.subr.mxu0 0.0
        %2405 = vmatpush1.msra.mxu0 0.0
        %2406 = vmatprep.subr.mxu0 0.0
        %2407 = vmatpush1.msra.mxu0 0.0
        %2408 = vmatprep.subr.mxu0 0.0
        %2409 = vmatpush1.msra.mxu0 0.0
        %2410 = vmatprep.subr.mxu0 0.0
        %2411 = vmatpush1.msra.mxu0 0.0
        %2412 = vmatprep.mubr.f32.mxu0 0.0
        %2413 = vmatmul.mubr.f32.gmra.mrb[0].mxu0 %v2343
        %v2414 = vpop.f32.mrb[0].mxu0
        %v2415 = vadd.f32 %v2347, %v2414
        %v2416 = vpop.f32.mrb[0].mxu0
        %2417 = vdwg.mxu0
        %v2418 = vtanh.pop %v2415
        %v2419 = vsub.f32 %v2418, %v2343
        %v2420 = vmul.f32 %v330, %v2419
        %v2421 = vadd.f32 %v2343, %v2420
        %s2422 = scalar_lea.vmem %s309, 168 [#allocation7]
        %2423 = vst [vmem:[%s2422] sm:$0xff] %v2421
        %s2424 = scalar_lea.vmem [#allocation2], 176
        %v2425 = vld [vmem:[%s2424] sm:$0xff]
        %2426 = vmatprep.subr.mxu0 0.0
        %2427 = vmatpush1.msra.mxu0 %v693
        %2428 = vmatprep.subr.mxu0 0.0
        %2429 = vmatpush1.msra.mxu0 %v694
        %2430 = vmatprep.subr.mxu0 0.0
        %2431 = vmatpush1.msra.mxu0 %v695
        %2432 = vmatprep.subr.mxu0 0.0
        %2433 = vmatpush1.msra.mxu0 %v696
        %2434 = vmatprep.subr.mxu0 0.0
        %2435 = vmatpush1.msra.mxu0 %v697
        %2436 = vmatprep.subr.mxu0 0.0
        %2437 = vmatpush1.msra.mxu0 %v698
        %2438 = vmatprep.subr.mxu0 0.0
        %2439 = vmatpush1.msra.mxu0 %v699
        %2440 = vmatprep.subr.mxu0 0.0
        %2441 = vmatpush1.msra.mxu0 %v700
        %2442 = vmatprep.subr.mxu0 0.0
        %2443 = vmatpush1.msra.mxu0 %v701
        %2444 = vmatprep.subr.mxu0 0.0
        %2445 = vmatpush1.msra.mxu0 %v702
        %2446 = vmatprep.subr.mxu0 0.0
        %2447 = vmatpush1.msra.mxu0 %v703
        %2448 = vmatprep.subr.mxu0 0.0
        %2449 = vmatpush1.msra.mxu0 %v704
        %2450 = vmatprep.subr.mxu0 0.0
        %2451 = vmatpush1.msra.mxu0 %v705
        %2452 = vmatprep.subr.mxu0 0.0
        %2453 = vmatpush1.msra.mxu0 %v706
        %2454 = vmatprep.subr.mxu0 0.0
        %2455 = vmatpush1.msra.mxu0 %v707
        %2456 = vmatprep.subr.mxu0 0.0
        %2457 = vmatpush1.msra.mxu0 %v708
        %2458 = vmatprep.subr.mxu0 0.0
        %2459 = vmatpush1.msra.mxu0 0.0
        %2460 = vmatprep.subr.mxu0 0.0
        %2461 = vmatpush1.msra.mxu0 0.0
        %2462 = vmatprep.subr.mxu0 0.0
        %2463 = vmatpush1.msra.mxu0 0.0
        %2464 = vmatprep.subr.mxu0 0.0
        %2465 = vmatpush1.msra.mxu0 0.0
        %2466 = vmatprep.subr.mxu0 0.0
        %2467 = vmatpush1.msra.mxu0 0.0
        %2468 = vmatprep.subr.mxu0 0.0
        %2469 = vmatpush1.msra.mxu0 0.0
        %2470 = vmatprep.subr.mxu0 0.0
        %2471 = vmatpush1.msra.mxu0 0.0
        %2472 = vmatprep.subr.mxu0 0.0
        %2473 = vmatpush1.msra.mxu0 0.0
        %2474 = vmatprep.subr.mxu0 0.0
        %2475 = vmatpush1.msra.mxu0 0.0
        %2476 = vmatprep.subr.mxu0 0.0
        %2477 = vmatpush1.msra.mxu0 0.0
        %2478 = vmatprep.subr.mxu0 0.0
        %2479 = vmatpush1.msra.mxu0 0.0
        %2480 = vmatprep.subr.mxu0 0.0
        %2481 = vmatpush1.msra.mxu0 0.0
        %2482 = vmatprep.subr.mxu0 0.0
        %2483 = vmatpush1.msra.mxu0 0.0
        %2484 = vmatprep.subr.mxu0 0.0
        %2485 = vmatpush1.msra.mxu0 0.0
        %2486 = vmatprep.subr.mxu0 0.0
        %2487 = vmatpush1.msra.mxu0 0.0
        %2488 = vmatprep.subr.mxu0 0.0
        %2489 = vmatpush1.msra.mxu0 0.0
        %2490 = vmatprep.mubr.f32.mxu0 0.0
        %2491 = vmatmul.mubr.f32.gmra.mrb[0].mxu0 %v2421
        %v2492 = vpop.f32.mrb[0].mxu0
        %v2493 = vadd.f32 %v2425, %v2492
        %v2494 = vpop.f32.mrb[0].mxu0
        %2495 = vdwg.mxu0
        %v2496 = vtanh.pop %v2493
        %v2497 = vsub.f32 %v2496, %v2421
        %v2498 = vmul.f32 %v330, %v2497
        %v2499 = vadd.f32 %v2421, %v2498
        %s2500 = scalar_lea.vmem %s309, 176 [#allocation7]
        %2501 = vst [vmem:[%s2500] sm:$0xff] %v2499
        %s2502 = scalar_lea.vmem [#allocation2], 184
        %v2503 = vld [vmem:[%s2502] sm:$0xff]
        %2504 = vmatprep.subr.mxu0 0.0
        %2505 = vmatpush1.msra.mxu0 %v693
        %2506 = vmatprep.subr.mxu0 0.0
        %2507 = vmatpush1.msra.mxu0 %v694
        %2508 = vmatprep.subr.mxu0 0.0
        %2509 = vmatpush1.msra.mxu0 %v695
        %2510 = vmatprep.subr.mxu0 0.0
        %2511 = vmatpush1.msra.mxu0 %v696
        %2512 = vmatprep.subr.mxu0 0.0
        %2513 = vmatpush1.msra.mxu0 %v697
        %2514 = vmatprep.subr.mxu0 0.0
        %2515 = vmatpush1.msra.mxu0 %v698
        %2516 = vmatprep.subr.mxu0 0.0
        %2517 = vmatpush1.msra.mxu0 %v699
        %2518 = vmatprep.subr.mxu0 0.0
        %2519 = vmatpush1.msra.mxu0 %v700
        %2520 = vmatprep.subr.mxu0 0.0
        %2521 = vmatpush1.msra.mxu0 %v701
        %2522 = vmatprep.subr.mxu0 0.0
        %2523 = vmatpush1.msra.mxu0 %v702
        %2524 = vmatprep.subr.mxu0 0.0
        %2525 = vmatpush1.msra.mxu0 %v703
        %2526 = vmatprep.subr.mxu0 0.0
        %2527 = vmatpush1.msra.mxu0 %v704
        %2528 = vmatprep.subr.mxu0 0.0
        %2529 = vmatpush1.msra.mxu0 %v705
        %2530 = vmatprep.subr.mxu0 0.0
        %2531 = vmatpush1.msra.mxu0 %v706
        %2532 = vmatprep.subr.mxu0 0.0
        %2533 = vmatpush1.msra.mxu0 %v707
        %2534 = vmatprep.subr.mxu0 0.0
        %2535 = vmatpush1.msra.mxu0 %v708
        %2536 = vmatprep.subr.mxu0 0.0
        %2537 = vmatpush1.msra.mxu0 0.0
        %2538 = vmatprep.subr.mxu0 0.0
        %2539 = vmatpush1.msra.mxu0 0.0
        %2540 = vmatprep.subr.mxu0 0.0
        %2541 = vmatpush1.msra.mxu0 0.0
        %2542 = vmatprep.subr.mxu0 0.0
        %2543 = vmatpush1.msra.mxu0 0.0
        %2544 = vmatprep.subr.mxu0 0.0
        %2545 = vmatpush1.msra.mxu0 0.0
        %2546 = vmatprep.subr.mxu0 0.0
        %2547 = vmatpush1.msra.mxu0 0.0
        %2548 = vmatprep.subr.mxu0 0.0
        %2549 = vmatpush1.msra.mxu0 0.0
        %2550 = vmatprep.subr.mxu0 0.0
        %2551 = vmatpush1.msra.mxu0 0.0
        %2552 = vmatprep.subr.mxu0 0.0
        %2553 = vmatpush1.msra.mxu0 0.0
        %2554 = vmatprep.subr.mxu0 0.0
        %2555 = vmatpush1.msra.mxu0 0.0
        %2556 = vmatprep.subr.mxu0 0.0
        %2557 = vmatpush1.msra.mxu0 0.0
        %2558 = vmatprep.subr.mxu0 0.0
        %2559 = vmatpush1.msra.mxu0 0.0
        %2560 = vmatprep.subr.mxu0 0.0
        %2561 = vmatpush1.msra.mxu0 0.0
        %2562 = vmatprep.subr.mxu0 0.0
        %2563 = vmatpush1.msra.mxu0 0.0
        %2564 = vmatprep.subr.mxu0 0.0
        %2565 = vmatpush1.msra.mxu0 0.0
        %2566 = vmatprep.subr.mxu0 0.0
        %2567 = vmatpush1.msra.mxu0 0.0
        %2568 = vmatprep.mubr.f32.mxu0 0.0
        %2569 = vmatmul.mubr.f32.gmra.mrb[0].mxu0 %v2499
        %v2570 = vpop.f32.mrb[0].mxu0
        %v2571 = vadd.f32 %v2503, %v2570
        %v2572 = vpop.f32.mrb[0].mxu0
        %2573 = vdwg.mxu0
        %v2574 = vtanh.pop %v2571
        %v2575 = vsub.f32 %v2574, %v2499
        %v2576 = vmul.f32 %v330, %v2575
        %v2577 = vadd.f32 %v2499, %v2576
        %s2578 = scalar_lea.vmem %s309, 184 [#allocation7]
        %2579 = vst [vmem:[%s2578] sm:$0xff] %v2577
        %s2580 = scalar_lea.vmem [#allocation2], 192
        %v2581 = vld [vmem:[%s2580] sm:$0xff]
        %2582 = vmatprep.subr.mxu0 0.0
        %2583 = vmatpush1.msra.mxu0 %v693
        %2584 = vmatprep.subr.mxu0 0.0
        %2585 = vmatpush1.msra.mxu0 %v694
        %2586 = vmatprep.subr.mxu0 0.0
        %2587 = vmatpush1.msra.mxu0 %v695
        %2588 = vmatprep.subr.mxu0 0.0
        %2589 = vmatpush1.msra.mxu0 %v696
        %2590 = vmatprep.subr.mxu0 0.0
        %2591 = vmatpush1.msra.mxu0 %v697
        %2592 = vmatprep.subr.mxu0 0.0
        %2593 = vmatpush1.msra.mxu0 %v698
        %2594 = vmatprep.subr.mxu0 0.0
        %2595 = vmatpush1.msra.mxu0 %v699
        %2596 = vmatprep.subr.mxu0 0.0
        %2597 = vmatpush1.msra.mxu0 %v700
        %2598 = vmatprep.subr.mxu0 0.0
        %2599 = vmatpush1.msra.mxu0 %v701
        %2600 = vmatprep.subr.mxu0 0.0
        %2601 = vmatpush1.msra.mxu0 %v702
        %2602 = vmatprep.subr.mxu0 0.0
        %2603 = vmatpush1.msra.mxu0 %v703
        %2604 = vmatprep.subr.mxu0 0.0
        %2605 = vmatpush1.msra.mxu0 %v704
        %2606 = vmatprep.subr.mxu0 0.0
        %2607 = vmatpush1.msra.mxu0 %v705
        %2608 = vmatprep.subr.mxu0 0.0
        %2609 = vmatpush1.msra.mxu0 %v706
        %2610 = vmatprep.subr.mxu0 0.0
        %2611 = vmatpush1.msra.mxu0 %v707
        %2612 = vmatprep.subr.mxu0 0.0
        %2613 = vmatpush1.msra.mxu0 %v708
        %2614 = vmatprep.subr.mxu0 0.0
        %2615 = vmatpush1.msra.mxu0 0.0
        %2616 = vmatprep.subr.mxu0 0.0
        %2617 = vmatpush1.msra.mxu0 0.0
        %2618 = vmatprep.subr.mxu0 0.0
        %2619 = vmatpush1.msra.mxu0 0.0
        %2620 = vmatprep.subr.mxu0 0.0
        %2621 = vmatpush1.msra.mxu0 0.0
        %2622 = vmatprep.subr.mxu0 0.0
        %2623 = vmatpush1.msra.mxu0 0.0
        %2624 = vmatprep.subr.mxu0 0.0
        %2625 = vmatpush1.msra.mxu0 0.0
        %2626 = vmatprep.subr.mxu0 0.0
        %2627 = vmatpush1.msra.mxu0 0.0
        %2628 = vmatprep.subr.mxu0 0.0
        %2629 = vmatpush1.msra.mxu0 0.0
        %2630 = vmatprep.subr.mxu0 0.0
        %2631 = vmatpush1.msra.mxu0 0.0
        %2632 = vmatprep.subr.mxu0 0.0
        %2633 = vmatpush1.msra.mxu0 0.0
        %2634 = vmatprep.subr.mxu0 0.0
        %2635 = vmatpush1.msra.mxu0 0.0
        %2636 = vmatprep.subr.mxu0 0.0
        %2637 = vmatpush1.msra.mxu0 0.0
        %2638 = vmatprep.subr.mxu0 0.0
        %2639 = vmatpush1.msra.mxu0 0.0
        %2640 = vmatprep.subr.mxu0 0.0
        %2641 = vmatpush1.msra.mxu0 0.0
        %2642 = vmatprep.subr.mxu0 0.0
        %2643 = vmatpush1.msra.mxu0 0.0
        %2644 = vmatprep.subr.mxu0 0.0
        %2645 = vmatpush1.msra.mxu0 0.0
        %2646 = vmatprep.mubr.f32.mxu0 0.0
        %2647 = vmatmul.mubr.f32.gmra.mrb[0].mxu0 %v2577
        %v2648 = vpop.f32.mrb[0].mxu0
        %v2649 = vadd.f32 %v2581, %v2648
        %v2650 = vpop.f32.mrb[0].mxu0
        %2651 = vdwg.mxu0
        %v2652 = vtanh.pop %v2649
        %v2653 = vsub.f32 %v2652, %v2577
        %v2654 = vmul.f32 %v330, %v2653
        %v2655 = vadd.f32 %v2577, %v2654
        %s2656 = scalar_lea.vmem %s309, 192 [#allocation7]
        %2657 = vst [vmem:[%s2656] sm:$0xff] %v2655
        %s2658 = scalar_lea.vmem [#allocation2], 200
        %v2659 = vld [vmem:[%s2658] sm:$0xff]
        %2660 = vmatprep.subr.mxu0 0.0
        %2661 = vmatpush1.msra.mxu0 %v693
        %2662 = vmatprep.subr.mxu0 0.0
        %2663 = vmatpush1.msra.mxu0 %v694
        %2664 = vmatprep.subr.mxu0 0.0
        %2665 = vmatpush1.msra.mxu0 %v695
        %2666 = vmatprep.subr.mxu0 0.0
        %2667 = vmatpush1.msra.mxu0 %v696
        %2668 = vmatprep.subr.mxu0 0.0
        %2669 = vmatpush1.msra.mxu0 %v697
        %2670 = vmatprep.subr.mxu0 0.0
        %2671 = vmatpush1.msra.mxu0 %v698
        %2672 = vmatprep.subr.mxu0 0.0
        %2673 = vmatpush1.msra.mxu0 %v699
        %2674 = vmatprep.subr.mxu0 0.0
        %2675 = vmatpush1.msra.mxu0 %v700
        %2676 = vmatprep.subr.mxu0 0.0
        %2677 = vmatpush1.msra.mxu0 %v701
        %2678 = vmatprep.subr.mxu0 0.0
        %2679 = vmatpush1.msra.mxu0 %v702
        %2680 = vmatprep.subr.mxu0 0.0
        %2681 = vmatpush1.msra.mxu0 %v703
        %2682 = vmatprep.subr.mxu0 0.0
        %2683 = vmatpush1.msra.mxu0 %v704
        %2684 = vmatprep.subr.mxu0 0.0
        %2685 = vmatpush1.msra.mxu0 %v705
        %2686 = vmatprep.subr.mxu0 0.0
        %2687 = vmatpush1.msra.mxu0 %v706
        %2688 = vmatprep.subr.mxu0 0.0
        %2689 = vmatpush1.msra.mxu0 %v707
        %2690 = vmatprep.subr.mxu0 0.0
        %2691 = vmatpush1.msra.mxu0 %v708
        %2692 = vmatprep.subr.mxu0 0.0
        %2693 = vmatpush1.msra.mxu0 0.0
        %2694 = vmatprep.subr.mxu0 0.0
        %2695 = vmatpush1.msra.mxu0 0.0
        %2696 = vmatprep.subr.mxu0 0.0
        %2697 = vmatpush1.msra.mxu0 0.0
        %2698 = vmatprep.subr.mxu0 0.0
        %2699 = vmatpush1.msra.mxu0 0.0
        %2700 = vmatprep.subr.mxu0 0.0
        %2701 = vmatpush1.msra.mxu0 0.0
        %2702 = vmatprep.subr.mxu0 0.0
        %2703 = vmatpush1.msra.mxu0 0.0
        %2704 = vmatprep.subr.mxu0 0.0
        %2705 = vmatpush1.msra.mxu0 0.0
        %2706 = vmatprep.subr.mxu0 0.0
        %2707 = vmatpush1.msra.mxu0 0.0
        %2708 = vmatprep.subr.mxu0 0.0
        %2709 = vmatpush1.msra.mxu0 0.0
        %2710 = vmatprep.subr.mxu0 0.0
        %2711 = vmatpush1.msra.mxu0 0.0
        %2712 = vmatprep.subr.mxu0 0.0
        %2713 = vmatpush1.msra.mxu0 0.0
        %2714 = vmatprep.subr.mxu0 0.0
        %2715 = vmatpush1.msra.mxu0 0.0
        %2716 = vmatprep.subr.mxu0 0.0
        %2717 = vmatpush1.msra.mxu0 0.0
        %2718 = vmatprep.subr.mxu0 0.0
        %2719 = vmatpush1.msra.mxu0 0.0
        %2720 = vmatprep.subr.mxu0 0.0
        %2721 = vmatpush1.msra.mxu0 0.0
        %2722 = vmatprep.subr.mxu0 0.0
        %2723 = vmatpush1.msra.mxu0 0.0
        %2724 = vmatprep.mubr.f32.mxu0 0.0
        %2725 = vmatmul.mubr.f32.gmra.mrb[0].mxu0 %v2655
        %v2726 = vpop.f32.mrb[0].mxu0
        %v2727 = vadd.f32 %v2659, %v2726
        %v2728 = vpop.f32.mrb[0].mxu0
        %2729 = vdwg.mxu0
        %v2730 = vtanh.pop %v2727
        %v2731 = vsub.f32 %v2730, %v2655
        %v2732 = vmul.f32 %v330, %v2731
        %v2733 = vadd.f32 %v2655, %v2732
        %s2734 = scalar_lea.vmem %s309, 200 [#allocation7]
        %2735 = vst [vmem:[%s2734] sm:$0xff] %v2733
        %s2736 = scalar_lea.vmem [#allocation2], 208
        %v2737 = vld [vmem:[%s2736] sm:$0xff]
        %2738 = vmatprep.subr.mxu0 0.0
        %2739 = vmatpush1.msra.mxu0 %v693
        %2740 = vmatprep.subr.mxu0 0.0
        %2741 = vmatpush1.msra.mxu0 %v694
        %2742 = vmatprep.subr.mxu0 0.0
        %2743 = vmatpush1.msra.mxu0 %v695
        %2744 = vmatprep.subr.mxu0 0.0
        %2745 = vmatpush1.msra.mxu0 %v696
        %2746 = vmatprep.subr.mxu0 0.0
        %2747 = vmatpush1.msra.mxu0 %v697
        %2748 = vmatprep.subr.mxu0 0.0
        %2749 = vmatpush1.msra.mxu0 %v698
        %2750 = vmatprep.subr.mxu0 0.0
        %2751 = vmatpush1.msra.mxu0 %v699
        %2752 = vmatprep.subr.mxu0 0.0
        %2753 = vmatpush1.msra.mxu0 %v700
        %2754 = vmatprep.subr.mxu0 0.0
        %2755 = vmatpush1.msra.mxu0 %v701
        %2756 = vmatprep.subr.mxu0 0.0
        %2757 = vmatpush1.msra.mxu0 %v702
        %2758 = vmatprep.subr.mxu0 0.0
        %2759 = vmatpush1.msra.mxu0 %v703
        %2760 = vmatprep.subr.mxu0 0.0
        %2761 = vmatpush1.msra.mxu0 %v704
        %2762 = vmatprep.subr.mxu0 0.0
        %2763 = vmatpush1.msra.mxu0 %v705
        %2764 = vmatprep.subr.mxu0 0.0
        %2765 = vmatpush1.msra.mxu0 %v706
        %2766 = vmatprep.subr.mxu0 0.0
        %2767 = vmatpush1.msra.mxu0 %v707
        %2768 = vmatprep.subr.mxu0 0.0
        %2769 = vmatpush1.msra.mxu0 %v708
        %2770 = vmatprep.subr.mxu0 0.0
        %2771 = vmatpush1.msra.mxu0 0.0
        %2772 = vmatprep.subr.mxu0 0.0
        %2773 = vmatpush1.msra.mxu0 0.0
        %2774 = vmatprep.subr.mxu0 0.0
        %2775 = vmatpush1.msra.mxu0 0.0
        %2776 = vmatprep.subr.mxu0 0.0
        %2777 = vmatpush1.msra.mxu0 0.0
        %2778 = vmatprep.subr.mxu0 0.0
        %2779 = vmatpush1.msra.mxu0 0.0
        %2780 = vmatprep.subr.mxu0 0.0
        %2781 = vmatpush1.msra.mxu0 0.0
        %2782 = vmatprep.subr.mxu0 0.0
        %2783 = vmatpush1.msra.mxu0 0.0
        %2784 = vmatprep.subr.mxu0 0.0
        %2785 = vmatpush1.msra.mxu0 0.0
        %2786 = vmatprep.subr.mxu0 0.0
        %2787 = vmatpush1.msra.mxu0 0.0
        %2788 = vmatprep.subr.mxu0 0.0
        %2789 = vmatpush1.msra.mxu0 0.0
        %2790 = vmatprep.subr.mxu0 0.0
        %2791 = vmatpush1.msra.mxu0 0.0
        %2792 = vmatprep.subr.mxu0 0.0
        %2793 = vmatpush1.msra.mxu0 0.0
        %2794 = vmatprep.subr.mxu0 0.0
        %2795 = vmatpush1.msra.mxu0 0.0
        %2796 = vmatprep.subr.mxu0 0.0
        %2797 = vmatpush1.msra.mxu0 0.0
        %2798 = vmatprep.subr.mxu0 0.0
        %2799 = vmatpush1.msra.mxu0 0.0
        %2800 = vmatprep.subr.mxu0 0.0
        %2801 = vmatpush1.msra.mxu0 0.0
        %2802 = vmatprep.mubr.f32.mxu0 0.0
        %2803 = vmatmul.mubr.f32.gmra.mrb[0].mxu0 %v2733
        %v2804 = vpop.f32.mrb[0].mxu0
        %v2805 = vadd.f32 %v2737, %v2804
        %v2806 = vpop.f32.mrb[0].mxu0
        %2807 = vdwg.mxu0
        %v2808 = vtanh.pop %v2805
        %v2809 = vsub.f32 %v2808, %v2733
        %v2810 = vmul.f32 %v330, %v2809
        %v2811 = vadd.f32 %v2733, %v2810
        %s2812 = scalar_lea.vmem %s309, 208 [#allocation7]
        %2813 = vst [vmem:[%s2812] sm:$0xff] %v2811
        %s2814 = scalar_lea.vmem [#allocation2], 216
        %v2815 = vld [vmem:[%s2814] sm:$0xff]
        %2816 = vmatprep.subr.mxu0 0.0
        %2817 = vmatpush1.msra.mxu0 %v693
        %2818 = vmatprep.subr.mxu0 0.0
        %2819 = vmatpush1.msra.mxu0 %v694
        %2820 = vmatprep.subr.mxu0 0.0
        %2821 = vmatpush1.msra.mxu0 %v695
        %2822 = vmatprep.subr.mxu0 0.0
        %2823 = vmatpush1.msra.mxu0 %v696
        %2824 = vmatprep.subr.mxu0 0.0
        %2825 = vmatpush1.msra.mxu0 %v697
        %2826 = vmatprep.subr.mxu0 0.0
        %2827 = vmatpush1.msra.mxu0 %v698
        %2828 = vmatprep.subr.mxu0 0.0
        %2829 = vmatpush1.msra.mxu0 %v699
        %2830 = vmatprep.subr.mxu0 0.0
        %2831 = vmatpush1.msra.mxu0 %v700
        %2832 = vmatprep.subr.mxu0 0.0
        %2833 = vmatpush1.msra.mxu0 %v701
        %2834 = vmatprep.subr.mxu0 0.0
        %2835 = vmatpush1.msra.mxu0 %v702
        %2836 = vmatprep.subr.mxu0 0.0
        %2837 = vmatpush1.msra.mxu0 %v703
        %2838 = vmatprep.subr.mxu0 0.0
        %2839 = vmatpush1.msra.mxu0 %v704
        %2840 = vmatprep.subr.mxu0 0.0
        %2841 = vmatpush1.msra.mxu0 %v705
        %2842 = vmatprep.subr.mxu0 0.0
        %2843 = vmatpush1.msra.mxu0 %v706
        %2844 = vmatprep.subr.mxu0 0.0
        %2845 = vmatpush1.msra.mxu0 %v707
        %2846 = vmatprep.subr.mxu0 0.0
        %2847 = vmatpush1.msra.mxu0 %v708
        %2848 = vmatprep.subr.mxu0 0.0
        %2849 = vmatpush1.msra.mxu0 0.0
        %2850 = vmatprep.subr.mxu0 0.0
        %2851 = vmatpush1.msra.mxu0 0.0
        %2852 = vmatprep.subr.mxu0 0.0
        %2853 = vmatpush1.msra.mxu0 0.0
        %2854 = vmatprep.subr.mxu0 0.0
        %2855 = vmatpush1.msra.mxu0 0.0
        %2856 = vmatprep.subr.mxu0 0.0
        %2857 = vmatpush1.msra.mxu0 0.0
        %2858 = vmatprep.subr.mxu0 0.0
        %2859 = vmatpush1.msra.mxu0 0.0
        %2860 = vmatprep.subr.mxu0 0.0
        %2861 = vmatpush1.msra.mxu0 0.0
        %2862 = vmatprep.subr.mxu0 0.0
        %2863 = vmatpush1.msra.mxu0 0.0
        %2864 = vmatprep.subr.mxu0 0.0
        %2865 = vmatpush1.msra.mxu0 0.0
        %2866 = vmatprep.subr.mxu0 0.0
        %2867 = vmatpush1.msra.mxu0 0.0
        %2868 = vmatprep.subr.mxu0 0.0
        %2869 = vmatpush1.msra.mxu0 0.0
        %2870 = vmatprep.subr.mxu0 0.0
        %2871 = vmatpush1.msra.mxu0 0.0
        %2872 = vmatprep.subr.mxu0 0.0
        %2873 = vmatpush1.msra.mxu0 0.0
        %2874 = vmatprep.subr.mxu0 0.0
        %2875 = vmatpush1.msra.mxu0 0.0
        %2876 = vmatprep.subr.mxu0 0.0
        %2877 = vmatpush1.msra.mxu0 0.0
        %2878 = vmatprep.subr.mxu0 0.0
        %2879 = vmatpush1.msra.mxu0 0.0
        %2880 = vmatprep.mubr.f32.mxu0 0.0
        %2881 = vmatmul.mubr.f32.gmra.mrb[0].mxu0 %v2811
        %v2882 = vpop.f32.mrb[0].mxu0
        %v2883 = vadd.f32 %v2815, %v2882
        %v2884 = vpop.f32.mrb[0].mxu0
        %2885 = vdwg.mxu0
        %v2886 = vtanh.pop %v2883
        %v2887 = vsub.f32 %v2886, %v2811
        %v2888 = vmul.f32 %v330, %v2887
        %v2889 = vadd.f32 %v2811, %v2888
        %s2890 = scalar_lea.vmem %s309, 216 [#allocation7]
        %2891 = vst [vmem:[%s2890] sm:$0xff] %v2889
        %s2892 = sand.u32 %s190, 1
        %s2893 = scalar_lea.sflag [#allocation6], %s2892
        %s2894 = sand.u32 %s190, 1
        %s2895 = smul.addr %s2894, 224
        %s2896 = scalar_lea.vmem [#allocation7], %s2895
        // Predicated region
        $region53: #{custom_gru_forward_seq.1} parent=47 // pred_check
          %p2897 = pneg %p200
        $region54: #{custom_gru_forward_seq.1} parent=47 // pred_check_branch
          %2899 = sbr.rel (%p2897) target = $region56
        $region55: #{custom_gru_forward_seq.1} parent=47 // pred_region
          %s2901 = ssub.s32 3584, 3584
          %2902 = vsyncadd %s2893, %s2901
          %s2903 = smul.addr %s25, 128
          %s2904 = scalar_lea.hbm %s7, %s2903
          %s2905 = sshll.u32 %s2896, 4
          %s2906 = int_to_ptr.vmem [resolvable:$true] %s2905
          %2911 = dma.vmem_to_hbm [thread:$0]  %s2906, 3584, %s2904, %s2893, 128, 256, 8
        $region56: #{custom_gru_forward_seq.1} parent=47 // pred_fallthru
          _
      $region48: #{custom_gru_forward_seq.1} parent=5 // pred_fallthru
        _
      %p2912 = scmp.le.s32.totalorder 2, %s20
      // Predicated region
      $region57: #{custom_gru_forward_seq.1} parent=5 // pred_check
        %p2913 = pneg %p2912
      $region58: #{custom_gru_forward_seq.1} parent=5 // pred_check_branch
        %2915 = sbr.rel (%p2913) target = $region60
      $region59: #{custom_gru_forward_seq.1} parent=5 // pred_region
        %s2916 = ssub.s32 %s20, 2
        // Predicated region
        $region61: #{custom_gru_forward_seq.1} parent=59 // pred_check
          %p2917 = pneg %p206
        $region62: #{custom_gru_forward_seq.1} parent=59 // pred_check_branch
          %2919 = sbr.rel (%p2917) target = $region64
        $region63: #{custom_gru_forward_seq.1} parent=59 // pred_region
          %s2920 = sand.u32 %s191, 1
          %s2921 = scalar_lea.sflag [#allocation6], %s2920
          %s2922 = sand.u32 %s191, 1
          %s2923 = smul.addr %s2922, 224
          %s2924 = scalar_lea.vmem [#allocation7], %s2923
          %2925 = dma.done %s2921, 3584
        $region64: #{custom_gru_forward_seq.1} parent=59 // pred_fallthru
          _
      $region60: #{custom_gru_forward_seq.1} parent=5 // pred_fallthru
        _
    $region6: #{custom_gru_forward_seq.1} parent=1 // loop_footer
      %s24 = sadd.s32 1, %s20
    $region7: #{custom_gru_forward_seq.1} parent=1 // loop_footer_branch
      %19 = sbr.rel target = $region3
    $region8: #{custom_gru_forward_seq.1} parent=1 // loop_exit
      _
    %2926 = vsyncpa [#allocation5], 1
    %s2927 = scalar_lea.sflag [#allocation5], 1
    %2928 = vsyncpa %s2927, 1
    %2929 = vsyncpa [#allocation6], 1
    %s2930 = scalar_lea.sflag [#allocation6], 1
    %2931 = vsyncpa %s2930, 1

</llo_original>
